<compile_context>
chip_gen: v7x
topology: tpu7x:2x2x1
jax: 0.10.0
libtpu: 0.0.40
codegen_flags: <defaults>
</compile_context>

<pallas_src>
import jax
import jax.numpy as jnp
from jax.experimental import pallas as pl
from jax.experimental.pallas import tpu as pltpu

EPS = 1e-5


def _fused_add_conv_bn_kernel(x1_ref, x2_ref, w_ref, gamma_ref, beta_ref, o_ref):
    # elementwise add (VPU), channels-first flattened: (Cin, M)
    a = x1_ref[...] + x2_ref[...]

    # 1x1 conv == matmul on the MXU: (Cout, Cin) @ (Cin, M) -> (Cout, M), f32 acc
    y = jnp.dot(w_ref[...], a, preferred_element_type=jnp.float32)

    # BatchNorm2d (training mode): per-output-channel mean / biased variance
    # over N*H*W, i.e. over the lane (last) axis here.  Single pass.
    m = y.shape[-1]
    inv_m = 1.0 / m
    mean = jnp.sum(y, axis=-1, keepdims=True) * inv_m                # (Cout, 1)
    var = jnp.maximum(
        jnp.sum(y * y, axis=-1, keepdims=True) * inv_m - mean * mean, 0.0
    )                                                                # (Cout, 1)
    inv = jax.lax.rsqrt(var + EPS)                                   # EUP slot

    # fold affine: (y - mean)*inv*gamma + beta == y*scale + shift
    scale = inv * gamma_ref[...]                                     # (Cout, 1)
    shift = beta_ref[...] - mean * scale                             # (Cout, 1)

    o_ref[...] = (y * scale + shift).astype(o_ref.dtype)


def fused_add_conv1x1_bn(x216, x202, w, gamma, beta):
    """x216, x202: (N, Cin, H, W);  w: (Cout, Cin);  gamma/beta: (Cout,)."""
    N, Cin, H, W = x216.shape
    Cout = w.shape[0]
    M = N * H * W

    if N == 1:
        # NCHW with N=1: (1, Cin, H, W) -> (Cin, H*W) is a zero-cost view.
        x1 = x216.reshape(Cin, M)
        x2 = x202.reshape(Cin, M)
    else:
        # General N: bring channels to the front (one transpose each).
        x1 = jnp.transpose(x216, (1, 0, 2, 3)).reshape(Cin, M)
        x2 = jnp.transpose(x202, (1, 0, 2, 3)).reshape(Cin, M)

    g2 = gamma.reshape(Cout, 1)
    b2 = beta.reshape(Cout, 1)

    vmem = pltpu.MemorySpace.VMEM
    out = pl.pallas_call(
        _fused_add_conv_bn_kernel,
        out_shape=jax.ShapeDtypeStruct((Cout, M), x216.dtype),
        in_specs=[
            pl.BlockSpec(memory_space=vmem),   # x1    (Cin, M)
            pl.BlockSpec(memory_space=vmem),   # x2    (Cin, M)
            pl.BlockSpec(memory_space=vmem),   # w     (Cout, Cin)
            pl.BlockSpec(memory_space=vmem),   # gamma (Cout, 1)
            pl.BlockSpec(memory_space=vmem),   # beta  (Cout, 1)
        ],
        out_specs=pl.BlockSpec(memory_space=vmem),
        cost_estimate=pl.CostEstimate(
            flops=2 * Cout * Cin * M + 6 * Cout * M,
            transcendentals=Cout,
            bytes_accessed=(2 * Cin * M + Cout * Cin + 2 * Cout + Cout * M) * 4,
        ),
    )(x1, x2, w, g2, b2)

    if N == 1:
        return out.reshape(1, Cout, H, W)
    return jnp.transpose(out.reshape(Cout, N, H, W), (1, 0, 2, 3))


def _reference(x216, x202, w, gamma, beta):
    a = x216 + x202                                            # (N, Cin, H, W)
    y = jnp.einsum("nchw,oc->nohw", a, w)                      # 1x1 conv, no bias
    mean = jnp.mean(y, axis=(0, 2, 3), keepdims=True)
    var = jnp.mean((y - mean) ** 2, axis=(0, 2, 3), keepdims=True)
    yhat = (y - mean) * jax.lax.rsqrt(var + EPS)
    return yhat * gamma[None, :, None, None] + beta[None, :, None, None]


if __name__ == "__main__":
    key = jax.random.PRNGKey(0)
    k1, k2, k3, k4, k5 = jax.random.split(key, 5)

    # Shapes taken from the module spec: x216/x202 are (1, 80, 28, 28),
    # Conv2d(80, 480, 1, bias=False), BatchNorm2d(480).
    N, Cin, H, W = 1, 80, 28, 28
    Cout = 480

    x216 = jax.random.normal(k1, (N, Cin, H, W), dtype=jnp.float32)
    x202 = jax.random.normal(k2, (N, Cin, H, W), dtype=jnp.float32)

    # Deterministic synthetic parameters:
    # Conv2d weight (Cout, Cin, 1, 1) -> (Cout, Cin) after squeezing 1x1 taps.
    conv_w = jax.random.normal(k3, (Cout, Cin), dtype=jnp.float32) * 0.05
    gamma = 1.0 + 0.1 * jax.random.normal(k4, (Cout,), dtype=jnp.float32)
    beta = 0.1 * jax.random.normal(k5, (Cout,), dtype=jnp.float32)

    out = fused_add_conv1x1_bn(x216, x202, conv_w, gamma, beta)
    out = jax.block_until_ready(out)

    ref = _reference(x216, x202, conv_w, gamma, beta)
    assert out.shape == (N, Cout, H, W), out.shape
    err = float(jnp.max(jnp.abs(out - ref)))
    assert jnp.allclose(out, ref, atol=2e-3, rtol=2e-3), err

    print("KERNEL_OK")
</pallas_src>

<mosaic_0001>
module attributes {stable_mosaic.version = 11 : i64} {
  func.func @_fused_add_conv_bn_kernel(%arg0: memref<80x784xf32, #tpu.memory_space<vmem>>, %arg1: memref<80x784xf32, #tpu.memory_space<vmem>>, %arg2: memref<480x80xf32, #tpu.memory_space<vmem>>, %arg3: memref<480x1xf32, #tpu.memory_space<vmem>>, %arg4: memref<480x1xf32, #tpu.memory_space<vmem>>, %arg5: memref<480x784xf32, #tpu.memory_space<vmem>>) attributes {dimension_semantics = [], scalar_prefetch = 0 : i64, scratch_operands = 0 : i64, tpu.core_type = #tpu.core_type<tc>} {
    %c0 = arith.constant 0 : index
    %c0_0 = arith.constant 0 : index
    %0 = vector.load %arg0[%c0, %c0_0] : memref<80x784xf32, #tpu.memory_space<vmem>>, vector<80x784xf32>
    %c0_1 = arith.constant 0 : index
    %c0_2 = arith.constant 0 : index
    %1 = vector.load %arg1[%c0_1, %c0_2] : memref<80x784xf32, #tpu.memory_space<vmem>>, vector<80x784xf32>
    %2 = arith.addf %0, %1 : vector<80x784xf32>
    %c0_3 = arith.constant 0 : index
    %c0_4 = arith.constant 0 : index
    %3 = vector.load %arg2[%c0_3, %c0_4] : memref<480x80xf32, #tpu.memory_space<vmem>>, vector<480x80xf32>
    %cst = arith.constant dense<0.000000e+00> : vector<480x784xf32>
    %4 = tpu.matmul %3, %2, %cst {dimension_numbers = #tpu.dot_dimension_numbers<[1], [0], [0], [1], [0, 0, 1, 1], [], []>} : vector<480x80xf32>, vector<80x784xf32>, vector<480x784xf32> -> vector<480x784xf32>
    %cst_5 = arith.constant dense<0.000000e+00> : vector<480xf32>
    %5 = vector.multi_reduction <add>, %4, %cst_5 [1] : vector<480x784xf32> to vector<480xf32>
    %6 = vector.shape_cast %5 : vector<480xf32> to vector<480x1xf32>
    %cst_6 = arith.constant 0.00127551018 : f32
    %7 = vector.broadcast %cst_6 : f32 to vector<480x1xf32>
    %8 = arith.mulf %6, %7 : vector<480x1xf32>
    %9 = arith.mulf %4, %4 : vector<480x784xf32>
    %cst_7 = arith.constant dense<0.000000e+00> : vector<480xf32>
    %10 = vector.multi_reduction <add>, %9, %cst_7 [1] : vector<480x784xf32> to vector<480xf32>
    %11 = vector.shape_cast %10 : vector<480xf32> to vector<480x1xf32>
    %cst_8 = arith.constant 0.00127551018 : f32
    %12 = vector.broadcast %cst_8 : f32 to vector<480x1xf32>
    %13 = arith.mulf %11, %12 : vector<480x1xf32>
    %14 = arith.mulf %8, %8 : vector<480x1xf32>
    %15 = arith.subf %13, %14 : vector<480x1xf32>
    %cst_9 = arith.constant 0.000000e+00 : f32
    %16 = vector.broadcast %cst_9 : f32 to vector<480x1xf32>
    %17 = arith.maximumf %15, %16 : vector<480x1xf32>
    %cst_10 = arith.constant 9.99999974E-6 : f32
    %18 = vector.broadcast %cst_10 : f32 to vector<480x1xf32>
    %19 = arith.addf %17, %18 : vector<480x1xf32>
    %20 = math.rsqrt %19 : vector<480x1xf32>
    %c0_11 = arith.constant 0 : index
    %c0_12 = arith.constant 0 : index
    %21 = vector.load %arg3[%c0_11, %c0_12] : memref<480x1xf32, #tpu.memory_space<vmem>>, vector<480x1xf32>
    %22 = arith.mulf %20, %21 : vector<480x1xf32>
    %c0_13 = arith.constant 0 : index
    %c0_14 = arith.constant 0 : index
    %23 = vector.load %arg4[%c0_13, %c0_14] : memref<480x1xf32, #tpu.memory_space<vmem>>, vector<480x1xf32>
    %24 = arith.mulf %8, %22 : vector<480x1xf32>
    %25 = arith.subf %23, %24 : vector<480x1xf32>
    %26 = vector.broadcast %22 : vector<480x1xf32> to vector<480x784xf32>
    %27 = arith.mulf %4, %26 : vector<480x784xf32>
    %28 = vector.broadcast %25 : vector<480x1xf32> to vector<480x784xf32>
    %29 = arith.addf %27, %28 : vector<480x784xf32>
    %c0_15 = arith.constant 0 : index
    %c0_16 = arith.constant 0 : index
    %30 = vector.load %arg5[%c0_15, %c0_16] : memref<480x784xf32, #tpu.memory_space<vmem>>, vector<480x784xf32>
    tpu.vector_store %arg5[%c0_15, %c0_16], %29 {strides = array<i32>} : memref<480x784xf32, #tpu.memory_space<vmem>>, vector<480x784xf32>,
    return
  }
}

</mosaic_0001>

<llo_original>
// kernel: tpu_custom_call.1
$region0: #{tpu_custom_call.1}
  #allocation0 [shape = 'u32[]', space=smem, size = 0x4, offset = 0x4, fixed_abs, tag = 'smem constant byte address 0x4 - core index']
  #allocation1 [shape = 'u32[144,128]{1,0:T(1,128)}', space=vmem, size = 0x12000, scoped, tag = 'internal scratch']
  %s0 = inlined_call_operand.hbm [shape: f32[80,784], index: 0, kind: input, shape index: {}]
  %s1 = inlined_call_operand.hbm [shape: f32[80,784], index: 1, kind: input, shape index: {}]
  %s2 = inlined_call_operand.vmem [shape: f32[480,80], index: 2, kind: input, shape index: {}]
  %s3 = inlined_call_operand.vmem [shape: f32[480,1], index: 3, kind: input, shape index: {}]
  %s4 = inlined_call_operand.vmem [shape: f32[480,1], index: 4, kind: input, shape index: {}]
  %s5 = inlined_call_operand.vmem [shape: f32[480,784], index: 5, kind: output, shape index: {}]
  %s6 = sld [smem:[#allocation0]]
  $region38: #{tpu_custom_call.1} parent=0
    _
  %s8 = ssub.s32 1, %s6
  %s9 = scalar_select 0, %s8, %s6
  $region1: #{tpu_custom_call.1} parent=0
    #allocation2 [shape = 'u8[286720]{0}', space=vmem, size = 0x46000, scoped, tag = 'input window, operand 0, single buffered']
    #allocation3 [shape = 's32[1]{0}', space=sflag, size = 0x4, scoped, tag = 'scoped memory for tpu_custom_call.1']
    #allocation4 [shape = 'u8[286720]{0}', space=vmem, size = 0x46000, scoped, tag = 'input window, operand 1, single buffered']
    #allocation5 [shape = 's32[1]{0}', space=sflag, size = 0x4, scoped, tag = 'scoped memory for tpu_custom_call.1']
    %10 = vsyncpa [#allocation3], 0
    %11 = vsyncpa [#allocation5], 0
    // Predicated region
    $region2: #{tpu_custom_call.1} parent=1 // pred_check
      _
    $region3: #{tpu_custom_call.1} parent=1 // pred_check_branch
      %13 = sbr.rel (0) target = $region5
    $region4: #{tpu_custom_call.1} parent=1 // pred_region
      %s15 = ssub.s32 8960, 8960
      %16 = vsyncadd [#allocation3], %s15
      %s17 = sshll.u32 [#allocation2], 4
      %s18 = int_to_ptr.vmem [resolvable:$true] %s17
      %23 = dma.hbm_to_vmem [thread:$0]  %s0, 8960, %s18, [#allocation3], 896, 896, 56
    $region5: #{tpu_custom_call.1} parent=1 // pred_fallthru
      _
    // Predicated region
    $region6: #{tpu_custom_call.1} parent=1 // pred_check
      _
    $region7: #{tpu_custom_call.1} parent=1 // pred_check_branch
      %25 = sbr.rel (0) target = $region9
    $region8: #{tpu_custom_call.1} parent=1 // pred_region
      %s27 = ssub.s32 8960, 8960
      %28 = vsyncadd [#allocation5], %s27
      %s29 = sshll.u32 [#allocation4], 4
      %s30 = int_to_ptr.vmem [resolvable:$true] %s29
      %35 = dma.hbm_to_vmem [thread:$0]  %s1, 8960, %s30, [#allocation5], 896, 896, 56
    $region9: #{tpu_custom_call.1} parent=1 // pred_fallthru
      _
    // Predicated region
    $region10: #{tpu_custom_call.1} parent=1 // pred_check
      _
    $region11: #{tpu_custom_call.1} parent=1 // pred_check_branch
      %37 = sbr.rel (0) target = $region13
    $region12: #{tpu_custom_call.1} parent=1 // pred_region
      _
    $region13: #{tpu_custom_call.1} parent=1 // pred_fallthru
      _
    // Predicated region
    $region14: #{tpu_custom_call.1} parent=1 // pred_check
      _
    $region15: #{tpu_custom_call.1} parent=1 // pred_check_branch
      %39 = sbr.rel (0) target = $region17
    $region16: #{tpu_custom_call.1} parent=1 // pred_region
      _
    $region17: #{tpu_custom_call.1} parent=1 // pred_fallthru
      _
    // Predicated region
    $region18: #{tpu_custom_call.1} parent=1 // pred_check
      _
    $region19: #{tpu_custom_call.1} parent=1 // pred_check_branch
      %41 = sbr.rel (0) target = $region21
    $region20: #{tpu_custom_call.1} parent=1 // pred_region
      _
    $region21: #{tpu_custom_call.1} parent=1 // pred_fallthru
      _
    // Predicated region
    $region22: #{tpu_custom_call.1} parent=1 // pred_check
      _
    $region23: #{tpu_custom_call.1} parent=1 // pred_check_branch
      %43 = sbr.rel (0) target = $region25
    $region24: #{tpu_custom_call.1} parent=1 // pred_region
      %44 = dma.done [#allocation3], 8960
    $region25: #{tpu_custom_call.1} parent=1 // pred_fallthru
      _
    // Predicated region
    $region26: #{tpu_custom_call.1} parent=1 // pred_check
      _
    $region27: #{tpu_custom_call.1} parent=1 // pred_check_branch
      %46 = sbr.rel (0) target = $region29
    $region28: #{tpu_custom_call.1} parent=1 // pred_region
      %47 = dma.done [#allocation5], 8960
    $region29: #{tpu_custom_call.1} parent=1 // pred_fallthru
      _
    %v48 = vld [vmem:[#allocation2] sm:$0xff]
    %v49 = vld [vmem:[#allocation2 + $0x8] sm:$0xff]
    %v50 = vld [vmem:[#allocation2 + $0x10] sm:$0xff]
    %v51 = vld [vmem:[#allocation2 + $0x18] sm:$0xff]
    %v52 = vld [vmem:[#allocation2 + $0x20] sm:$0xff]
    %v53 = vld [vmem:[#allocation2 + $0x28] sm:$0xff]
    %v54 = vld [vmem:[#allocation2 + $0x30] sm:$0xff]
    %v55 = vld [vmem:[#allocation2 + $0x38] sm:$0xff]
    %v56 = vld [vmem:[#allocation2 + $0x40] sm:$0xff]
    %v57 = vld [vmem:[#allocation2 + $0x48] sm:$0xff]
    %v58 = vld [vmem:[#allocation2 + $0x50] sm:$0xff]
    %v59 = vld [vmem:[#allocation2 + $0x58] sm:$0xff]
    %v60 = vld [vmem:[#allocation2 + $0x60] sm:$0xff]
    %v61 = vld [vmem:[#allocation2 + $0x68] sm:$0xff]
    %v62 = vld [vmem:[#allocation2 + $0x70] sm:$0xff]
    %v63 = vld [vmem:[#allocation2 + $0x78] sm:$0xff]
    %v64 = vld [vmem:[#allocation2 + $0x80] sm:$0xff]
    %v65 = vld [vmem:[#allocation2 + $0x88] sm:$0xff]
    %v66 = vld [vmem:[#allocation2 + $0x90] sm:$0xff]
    %v67 = vld [vmem:[#allocation2 + $0x98] sm:$0xff]
    %v68 = vld [vmem:[#allocation2 + $0xa0] sm:$0xff]
    %v69 = vld [vmem:[#allocation2 + $0xa8] sm:$0xff]
    %v70 = vld [vmem:[#allocation2 + $0xb0] sm:$0xff]
    %v71 = vld [vmem:[#allocation2 + $0xb8] sm:$0xff]
    %v72 = vld [vmem:[#allocation2 + $0xc0] sm:$0xff]
    %v73 = vld [vmem:[#allocation2 + $0xc8] sm:$0xff]
    %v74 = vld [vmem:[#allocation2 + $0xd0] sm:$0xff]
    %v75 = vld [vmem:[#allocation2 + $0xd8] sm:$0xff]
    %v76 = vld [vmem:[#allocation2 + $0xe0] sm:$0xff]
    %v77 = vld [vmem:[#allocation2 + $0xe8] sm:$0xff]
    %v78 = vld [vmem:[#allocation2 + $0xf0] sm:$0xff]
    %v79 = vld [vmem:[#allocation2 + $0xf8] sm:$0xff]
    %v80 = vld [vmem:[#allocation2 + $0x100] sm:$0xff]
    %v81 = vld [vmem:[#allocation2 + $0x108] sm:$0xff]
    %v82 = vld [vmem:[#allocation2 + $0x110] sm:$0xff]
    %v83 = vld [vmem:[#allocation2 + $0x118] sm:$0xff]
    %v84 = vld [vmem:[#allocation2 + $0x120] sm:$0xff]
    %v85 = vld [vmem:[#allocation2 + $0x128] sm:$0xff]
    %v86 = vld [vmem:[#allocation2 + $0x130] sm:$0xff]
    %v87 = vld [vmem:[#allocation2 + $0x138] sm:$0xff]
    %v88 = vld [vmem:[#allocation2 + $0x140] sm:$0xff]
    %v89 = vld [vmem:[#allocation2 + $0x148] sm:$0xff]
    %v90 = vld [vmem:[#allocation2 + $0x150] sm:$0xff]
    %v91 = vld [vmem:[#allocation2 + $0x158] sm:$0xff]
    %v92 = vld [vmem:[#allocation2 + $0x160] sm:$0xff]
    %v93 = vld [vmem:[#allocation2 + $0x168] sm:$0xff]
    %v94 = vld [vmem:[#allocation2 + $0x170] sm:$0xff]
    %v95 = vld [vmem:[#allocation2 + $0x178] sm:$0xff]
    %v96 = vld [vmem:[#allocation2 + $0x180] sm:$0xff]
    %v97 = vld [vmem:[#allocation2 + $0x188] sm:$0xff]
    %v98 = vld [vmem:[#allocation2 + $0x190] sm:$0xff]
    %v99 = vld [vmem:[#allocation2 + $0x198] sm:$0xff]
    %v100 = vld [vmem:[#allocation2 + $0x1a0] sm:$0xff]
    %v101 = vld [vmem:[#allocation2 + $0x1a8] sm:$0xff]
    %v102 = vld [vmem:[#allocation2 + $0x1b0] sm:$0xff]
    %v103 = vld [vmem:[#allocation2 + $0x1b8] sm:$0xff]
    %v104 = vld [vmem:[#allocation2 + $0x1c0] sm:$0xff]
    %v105 = vld [vmem:[#allocation2 + $0x1c8] sm:$0xff]
    %v106 = vld [vmem:[#allocation2 + $0x1d0] sm:$0xff]
    %v107 = vld [vmem:[#allocation2 + $0x1d8] sm:$0xff]
    %v108 = vld [vmem:[#allocation2 + $0x1e0] sm:$0xff]
    %v109 = vld [vmem:[#allocation2 + $0x1e8] sm:$0xff]
    %v110 = vld [vmem:[#allocation2 + $0x1f0] sm:$0xff]
    %v111 = vld [vmem:[#allocation2 + $0x1f8] sm:$0xff]
    %v112 = vld [vmem:[#allocation2 + $0x200] sm:$0xff]
    %v113 = vld [vmem:[#allocation2 + $0x208] sm:$0xff]
    %v114 = vld [vmem:[#allocation2 + $0x210] sm:$0xff]
    %v115 = vld [vmem:[#allocation2 + $0x218] sm:$0xff]
    %v116 = vld [vmem:[#allocation2 + $0x220] sm:$0xff]
    %v117 = vld [vmem:[#allocation2 + $0x228] sm:$0xff]
    %v118 = vld [vmem:[#allocation4] sm:$0xff]
    %v119 = vld [vmem:[#allocation4 + $0x8] sm:$0xff]
    %v120 = vld [vmem:[#allocation4 + $0x10] sm:$0xff]
    %v121 = vld [vmem:[#allocation4 + $0x18] sm:$0xff]
    %v122 = vld [vmem:[#allocation4 + $0x20] sm:$0xff]
    %v123 = vld [vmem:[#allocation4 + $0x28] sm:$0xff]
    %v124 = vld [vmem:[#allocation4 + $0x30] sm:$0xff]
    %v125 = vld [vmem:[#allocation4 + $0x38] sm:$0xff]
    %v126 = vld [vmem:[#allocation4 + $0x40] sm:$0xff]
    %v127 = vld [vmem:[#allocation4 + $0x48] sm:$0xff]
    %v128 = vld [vmem:[#allocation4 + $0x50] sm:$0xff]
    %v129 = vld [vmem:[#allocation4 + $0x58] sm:$0xff]
    %v130 = vld [vmem:[#allocation4 + $0x60] sm:$0xff]
    %v131 = vld [vmem:[#allocation4 + $0x68] sm:$0xff]
    %v132 = vld [vmem:[#allocation4 + $0x70] sm:$0xff]
    %v133 = vld [vmem:[#allocation4 + $0x78] sm:$0xff]
    %v134 = vld [vmem:[#allocation4 + $0x80] sm:$0xff]
    %v135 = vld [vmem:[#allocation4 + $0x88] sm:$0xff]
    %v136 = vld [vmem:[#allocation4 + $0x90] sm:$0xff]
    %v137 = vld [vmem:[#allocation4 + $0x98] sm:$0xff]
    %v138 = vld [vmem:[#allocation4 + $0xa0] sm:$0xff]
    %v139 = vld [vmem:[#allocation4 + $0xa8] sm:$0xff]
    %v140 = vld [vmem:[#allocation4 + $0xb0] sm:$0xff]
    %v141 = vld [vmem:[#allocation4 + $0xb8] sm:$0xff]
    %v142 = vld [vmem:[#allocation4 + $0xc0] sm:$0xff]
    %v143 = vld [vmem:[#allocation4 + $0xc8] sm:$0xff]
    %v144 = vld [vmem:[#allocation4 + $0xd0] sm:$0xff]
    %v145 = vld [vmem:[#allocation4 + $0xd8] sm:$0xff]
    %v146 = vld [vmem:[#allocation4 + $0xe0] sm:$0xff]
    %v147 = vld [vmem:[#allocation4 + $0xe8] sm:$0xff]
    %v148 = vld [vmem:[#allocation4 + $0xf0] sm:$0xff]
    %v149 = vld [vmem:[#allocation4 + $0xf8] sm:$0xff]
    %v150 = vld [vmem:[#allocation4 + $0x100] sm:$0xff]
    %v151 = vld [vmem:[#allocation4 + $0x108] sm:$0xff]
    %v152 = vld [vmem:[#allocation4 + $0x110] sm:$0xff]
    %v153 = vld [vmem:[#allocation4 + $0x118] sm:$0xff]
    %v154 = vld [vmem:[#allocation4 + $0x120] sm:$0xff]
    %v155 = vld [vmem:[#allocation4 + $0x128] sm:$0xff]
    %v156 = vld [vmem:[#allocation4 + $0x130] sm:$0xff]
    %v157 = vld [vmem:[#allocation4 + $0x138] sm:$0xff]
    %v158 = vld [vmem:[#allocation4 + $0x140] sm:$0xff]
    %v159 = vld [vmem:[#allocation4 + $0x148] sm:$0xff]
    %v160 = vld [vmem:[#allocation4 + $0x150] sm:$0xff]
    %v161 = vld [vmem:[#allocation4 + $0x158] sm:$0xff]
    %v162 = vld [vmem:[#allocation4 + $0x160] sm:$0xff]
    %v163 = vld [vmem:[#allocation4 + $0x168] sm:$0xff]
    %v164 = vld [vmem:[#allocation4 + $0x170] sm:$0xff]
    %v165 = vld [vmem:[#allocation4 + $0x178] sm:$0xff]
    %v166 = vld [vmem:[#allocation4 + $0x180] sm:$0xff]
    %v167 = vld [vmem:[#allocation4 + $0x188] sm:$0xff]
    %v168 = vld [vmem:[#allocation4 + $0x190] sm:$0xff]
    %v169 = vld [vmem:[#allocation4 + $0x198] sm:$0xff]
    %v170 = vld [vmem:[#allocation4 + $0x1a0] sm:$0xff]
    %v171 = vld [vmem:[#allocation4 + $0x1a8] sm:$0xff]
    %v172 = vld [vmem:[#allocation4 + $0x1b0] sm:$0xff]
    %v173 = vld [vmem:[#allocation4 + $0x1b8] sm:$0xff]
    %v174 = vld [vmem:[#allocation4 + $0x1c0] sm:$0xff]
    %v175 = vld [vmem:[#allocation4 + $0x1c8] sm:$0xff]
    %v176 = vld [vmem:[#allocation4 + $0x1d0] sm:$0xff]
    %v177 = vld [vmem:[#allocation4 + $0x1d8] sm:$0xff]
    %v178 = vld [vmem:[#allocation4 + $0x1e0] sm:$0xff]
    %v179 = vld [vmem:[#allocation4 + $0x1e8] sm:$0xff]
    %v180 = vld [vmem:[#allocation4 + $0x1f0] sm:$0xff]
    %v181 = vld [vmem:[#allocation4 + $0x1f8] sm:$0xff]
    %v182 = vld [vmem:[#allocation4 + $0x200] sm:$0xff]
    %v183 = vld [vmem:[#allocation4 + $0x208] sm:$0xff]
    %v184 = vld [vmem:[#allocation4 + $0x210] sm:$0xff]
    %v185 = vld [vmem:[#allocation4 + $0x218] sm:$0xff]
    %v186 = vld [vmem:[#allocation4 + $0x220] sm:$0xff]
    %v187 = vld [vmem:[#allocation4 + $0x228] sm:$0xff]
    %v188 = vadd.f32 %v48, %v118
    %v189 = vadd.f32 %v49, %v119
    %v190 = vadd.f32 %v50, %v120
    %v191 = vadd.f32 %v51, %v121
    %v192 = vadd.f32 %v52, %v122
    %v193 = vadd.f32 %v53, %v123
    %v194 = vadd.f32 %v54, %v124
    %v195 = vadd.f32 %v55, %v125
    %v196 = vadd.f32 %v56, %v126
    %v197 = vadd.f32 %v57, %v127
    %v198 = vadd.f32 %v58, %v128
    %v199 = vadd.f32 %v59, %v129
    %v200 = vadd.f32 %v60, %v130
    %v201 = vadd.f32 %v61, %v131
    %v202 = vadd.f32 %v62, %v132
    %v203 = vadd.f32 %v63, %v133
    %v204 = vadd.f32 %v64, %v134
    %v205 = vadd.f32 %v65, %v135
    %v206 = vadd.f32 %v66, %v136
    %v207 = vadd.f32 %v67, %v137
    %v208 = vadd.f32 %v68, %v138
    %v209 = vadd.f32 %v69, %v139
    %v210 = vadd.f32 %v70, %v140
    %v211 = vadd.f32 %v71, %v141
    %v212 = vadd.f32 %v72, %v142
    %v213 = vadd.f32 %v73, %v143
    %v214 = vadd.f32 %v74, %v144
    %v215 = vadd.f32 %v75, %v145
    %v216 = vadd.f32 %v76, %v146
    %v217 = vadd.f32 %v77, %v147
    %v218 = vadd.f32 %v78, %v148
    %v219 = vadd.f32 %v79, %v149
    %v220 = vadd.f32 %v80, %v150
    %v221 = vadd.f32 %v81, %v151
    %v222 = vadd.f32 %v82, %v152
    %v223 = vadd.f32 %v83, %v153
    %v224 = vadd.f32 %v84, %v154
    %v225 = vadd.f32 %v85, %v155
    %v226 = vadd.f32 %v86, %v156
    %v227 = vadd.f32 %v87, %v157
    %v228 = vadd.f32 %v88, %v158
    %v229 = vadd.f32 %v89, %v159
    %v230 = vadd.f32 %v90, %v160
    %v231 = vadd.f32 %v91, %v161
    %v232 = vadd.f32 %v92, %v162
    %v233 = vadd.f32 %v93, %v163
    %v234 = vadd.f32 %v94, %v164
    %v235 = vadd.f32 %v95, %v165
    %v236 = vadd.f32 %v96, %v166
    %v237 = vadd.f32 %v97, %v167
    %v238 = vadd.f32 %v98, %v168
    %v239 = vadd.f32 %v99, %v169
    %v240 = vadd.f32 %v100, %v170
    %v241 = vadd.f32 %v101, %v171
    %v242 = vadd.f32 %v102, %v172
    %v243 = vadd.f32 %v103, %v173
    %v244 = vadd.f32 %v104, %v174
    %v245 = vadd.f32 %v105, %v175
    %v246 = vadd.f32 %v106, %v176
    %v247 = vadd.f32 %v107, %v177
    %v248 = vadd.f32 %v108, %v178
    %v249 = vadd.f32 %v109, %v179
    %v250 = vadd.f32 %v110, %v180
    %v251 = vadd.f32 %v111, %v181
    %v252 = vadd.f32 %v112, %v182
    %v253 = vadd.f32 %v113, %v183
    %v254 = vadd.f32 %v114, %v184
    %v255 = vadd.f32 %v115, %v185
    %v256 = vadd.f32 %v116, %v186
    %v257 = vadd.f32 %v117, %v187
    %v258 = vld [vmem:[%s2] sm:$0xff]
    %v259 = vld [vmem:[%s2 + $0x8] sm:$0xff]
    %v260 = vld [vmem:[%s2 + $0x10] sm:$0xff]
    %v261 = vld [vmem:[%s2 + $0x18] sm:$0xff]
    %v262 = vld [vmem:[%s2 + $0x20] sm:$0xff]
    %v263 = vld [vmem:[%s2 + $0x28] sm:$0xff]
    %v264 = vld [vmem:[%s2 + $0x30] sm:$0xff]
    %v265 = vld [vmem:[%s2 + $0x38] sm:$0xff]
    %v266 = vld [vmem:[%s2 + $0x40] sm:$0xff]
    %v267 = vld [vmem:[%s2 + $0x48] sm:$0xff]
    %v268 = vld [vmem:[%s2 + $0x50] sm:$0xff]
    %v269 = vld [vmem:[%s2 + $0x58] sm:$0xff]
    %v270 = vld [vmem:[%s2 + $0x60] sm:$0xff]
    %v271 = vld [vmem:[%s2 + $0x68] sm:$0xff]
    %v272 = vld [vmem:[%s2 + $0x70] sm:$0xff]
    %v273 = vld [vmem:[%s2 + $0x78] sm:$0xff]
    %v274 = vld [vmem:[%s2 + $0x80] sm:$0xff]
    %v275 = vld [vmem:[%s2 + $0x88] sm:$0xff]
    %v276 = vld [vmem:[%s2 + $0x90] sm:$0xff]
    %v277 = vld [vmem:[%s2 + $0x98] sm:$0xff]
    %v278 = vld [vmem:[%s2 + $0xa0] sm:$0xff]
    %v279 = vld [vmem:[%s2 + $0xa8] sm:$0xff]
    %v280 = vld [vmem:[%s2 + $0xb0] sm:$0xff]
    %v281 = vld [vmem:[%s2 + $0xb8] sm:$0xff]
    %v282 = vld [vmem:[%s2 + $0xc0] sm:$0xff]
    %v283 = vld [vmem:[%s2 + $0xc8] sm:$0xff]
    %v284 = vld [vmem:[%s2 + $0xd0] sm:$0xff]
    %v285 = vld [vmem:[%s2 + $0xd8] sm:$0xff]
    %v286 = vld [vmem:[%s2 + $0xe0] sm:$0xff]
    %v287 = vld [vmem:[%s2 + $0xe8] sm:$0xff]
    %v288 = vld [vmem:[%s2 + $0xf0] sm:$0xff]
    %v289 = vld [vmem:[%s2 + $0xf8] sm:$0xff]
    %v290 = vld [vmem:[%s2 + $0x100] sm:$0xff]
    %v291 = vld [vmem:[%s2 + $0x108] sm:$0xff]
    %v292 = vld [vmem:[%s2 + $0x110] sm:$0xff]
    %v293 = vld [vmem:[%s2 + $0x118] sm:$0xff]
    %v294 = vld [vmem:[%s2 + $0x120] sm:$0xff]
    %v295 = vld [vmem:[%s2 + $0x128] sm:$0xff]
    %v296 = vld [vmem:[%s2 + $0x130] sm:$0xff]
    %v297 = vld [vmem:[%s2 + $0x138] sm:$0xff]
    %v298 = vld [vmem:[%s2 + $0x140] sm:$0xff]
    %v299 = vld [vmem:[%s2 + $0x148] sm:$0xff]
    %v300 = vld [vmem:[%s2 + $0x150] sm:$0xff]
    %v301 = vld [vmem:[%s2 + $0x158] sm:$0xff]
    %v302 = vld [vmem:[%s2 + $0x160] sm:$0xff]
    %v303 = vld [vmem:[%s2 + $0x168] sm:$0xff]
    %v304 = vld [vmem:[%s2 + $0x170] sm:$0xff]
    %v305 = vld [vmem:[%s2 + $0x178] sm:$0xff]
    %v306 = vld [vmem:[%s2 + $0x180] sm:$0xff]
    %v307 = vld [vmem:[%s2 + $0x188] sm:$0xff]
    %v308 = vld [vmem:[%s2 + $0x190] sm:$0xff]
    %v309 = vld [vmem:[%s2 + $0x198] sm:$0xff]
    %v310 = vld [vmem:[%s2 + $0x1a0] sm:$0xff]
    %v311 = vld [vmem:[%s2 + $0x1a8] sm:$0xff]
    %v312 = vld [vmem:[%s2 + $0x1b0] sm:$0xff]
    %v313 = vld [vmem:[%s2 + $0x1b8] sm:$0xff]
    %v314 = vld [vmem:[%s2 + $0x1c0] sm:$0xff]
    %v315 = vld [vmem:[%s2 + $0x1c8] sm:$0xff]
    %v316 = vld [vmem:[%s2 + $0x1d0] sm:$0xff]
    %v317 = vld [vmem:[%s2 + $0x1d8] sm:$0xff]
    %vm318 = vcmask 654336
    %v320 = vsel %vm318, %v258, 0
    %v323 = vsel %vm318, %v259, 0
    %v326 = vsel %vm318, %v260, 0
    %v329 = vsel %vm318, %v261, 0
    %v332 = vsel %vm318, %v262, 0
    %v335 = vsel %vm318, %v263, 0
    %v338 = vsel %vm318, %v264, 0
    %v341 = vsel %vm318, %v265, 0
    %v344 = vsel %vm318, %v266, 0
    %v347 = vsel %vm318, %v267, 0
    %v350 = vsel %vm318, %v268, 0
    %v353 = vsel %vm318, %v269, 0
    %v356 = vsel %vm318, %v270, 0
    %v359 = vsel %vm318, %v271, 0
    %v362 = vsel %vm318, %v272, 0
    %v365 = vsel %vm318, %v273, 0
    %v368 = vsel %vm318, %v274, 0
    %v371 = vsel %vm318, %v275, 0
    %v374 = vsel %vm318, %v276, 0
    %v377 = vsel %vm318, %v277, 0
    %v380 = vsel %vm318, %v278, 0
    %v383 = vsel %vm318, %v279, 0
    %v386 = vsel %vm318, %v280, 0
    %v389 = vsel %vm318, %v281, 0
    %v392 = vsel %vm318, %v282, 0
    %v395 = vsel %vm318, %v283, 0
    %v398 = vsel %vm318, %v284, 0
    %v401 = vsel %vm318, %v285, 0
    %v404 = vsel %vm318, %v286, 0
    %v407 = vsel %vm318, %v287, 0
    %v410 = vsel %vm318, %v288, 0
    %v413 = vsel %vm318, %v289, 0
    %v416 = vsel %vm318, %v290, 0
    %v419 = vsel %vm318, %v291, 0
    %v422 = vsel %vm318, %v292, 0
    %v425 = vsel %vm318, %v293, 0
    %v428 = vsel %vm318, %v294, 0
    %v431 = vsel %vm318, %v295, 0
    %v434 = vsel %vm318, %v296, 0
    %v437 = vsel %vm318, %v297, 0
    %v440 = vsel %vm318, %v298, 0
    %v443 = vsel %vm318, %v299, 0
    %v446 = vsel %vm318, %v300, 0
    %v449 = vsel %vm318, %v301, 0
    %v452 = vsel %vm318, %v302, 0
    %v455 = vsel %vm318, %v303, 0
    %v458 = vsel %vm318, %v304, 0
    %v461 = vsel %vm318, %v305, 0
    %v464 = vsel %vm318, %v306, 0
    %v467 = vsel %vm318, %v307, 0
    %v470 = vsel %vm318, %v308, 0
    %v473 = vsel %vm318, %v309, 0
    %v476 = vsel %vm318, %v310, 0
    %v479 = vsel %vm318, %v311, 0
    %v482 = vsel %vm318, %v312, 0
    %v485 = vsel %vm318, %v313, 0
    %v488 = vsel %vm318, %v314, 0
    %v491 = vsel %vm318, %v315, 0
    %v494 = vsel %vm318, %v316, 0
    %v497 = vsel %vm318, %v317, 0
    %499 = vmatprep.subr.mxu0 %v189
    %500 = vmatpush1.msra.mxu0 %v188
    %501 = vmatprep.subr.mxu0 %v196
    %502 = vmatpush1.msra.mxu0 %v195
    %503 = vmatprep.subr.mxu0 %v203
    %504 = vmatpush1.msra.mxu0 %v202
    %505 = vmatprep.subr.mxu0 %v210
    %506 = vmatpush1.msra.mxu0 %v209
    %507 = vmatprep.subr.mxu0 %v217
    %508 = vmatpush1.msra.mxu0 %v216
    %509 = vmatprep.subr.mxu0 %v224
    %510 = vmatpush1.msra.mxu0 %v223
    %511 = vmatprep.subr.mxu0 %v231
    %512 = vmatpush1.msra.mxu0 %v230
    %513 = vmatprep.subr.mxu0 %v238
    %514 = vmatpush1.msra.mxu0 %v237
    %515 = vmatprep.subr.mxu0 %v245
    %516 = vmatpush1.msra.mxu0 %v244
    %517 = vmatprep.subr.mxu0 %v252
    %518 = vmatpush1.msra.mxu0 %v251
    %519 = vmatprep.subr.mxu0 0.0
    %520 = vmatpush1.msra.mxu0 0.0
    %521 = vmatprep.subr.mxu0 0.0
    %522 = vmatpush1.msra.mxu0 0.0
    %523 = vmatprep.subr.mxu0 0.0
    %524 = vmatpush1.msra.mxu0 0.0
    %525 = vmatprep.subr.mxu0 0.0
    %526 = vmatpush1.msra.mxu0 0.0
    %527 = vmatprep.subr.mxu0 0.0
    %528 = vmatpush1.msra.mxu0 0.0
    %529 = vmatprep.subr.mxu0 0.0
    %530 = vmatpush1.msra.mxu0 0.0
    %531 = vmatprep.subr.mxu0 0.0
    %532 = vmatpush1.msra.mxu0 0.0
    %533 = vmatprep.subr.mxu0 0.0
    %534 = vmatpush1.msra.mxu0 0.0
    %535 = vmatprep.subr.mxu0 0.0
    %536 = vmatpush1.msra.mxu0 0.0
    %537 = vmatprep.subr.mxu0 0.0
    %538 = vmatpush1.msra.mxu0 0.0
    %539 = vmatprep.subr.mxu0 0.0
    %540 = vmatpush1.msra.mxu0 0.0
    %541 = vmatprep.subr.mxu0 0.0
    %542 = vmatpush1.msra.mxu0 0.0
    %543 = vmatprep.subr.mxu0 0.0
    %544 = vmatpush1.msra.mxu0 0.0
    %545 = vmatprep.subr.mxu0 0.0
    %546 = vmatpush1.msra.mxu0 0.0
    %547 = vmatprep.subr.mxu0 0.0
    %548 = vmatpush1.msra.mxu0 0.0
    %549 = vmatprep.subr.mxu0 0.0
    %550 = vmatpush1.msra.mxu0 0.0
    %551 = vmatprep.subr.mxu0 0.0
    %552 = vmatpush1.msra.mxu0 0.0
    %553 = vmatprep.subr.mxu0 0.0
    %554 = vmatpush1.msra.mxu0 0.0
    %555 = vmatprep.subr.mxu0 0.0
    %556 = vmatpush1.msra.mxu0 0.0
    %557 = vmatprep.subr.mxu0 0.0
    %558 = vmatpush1.msra.mxu0 0.0
    %559 = vmatprep.subr.mxu0 0.0
    %560 = vmatpush1.msra.mxu0 0.0
    %561 = vmatprep.subr.mxu0 0.0
    %562 = vmatpush1.msra.mxu0 0.0
    %563 = vmatprep.mubr.f32.mxu0 0.0
    %564 = vmatmul.mubr.f32.gmra.mrb[0].mxu0 %v320
    %v565 = vpop.f32.mrb[0].mxu0
    %v566 = vadd.f32 0.0, %v565
    %v567 = vpop.f32.mrb[0].mxu0
    %v568 = vadd.f32 0.0, %v567
    %569 = vmatprep.mubr.f32.mxu0 0.0
    %570 = vmatmul.mubr.f32.gmra.mrb[0].mxu0 %v323
    %v571 = vpop.f32.mrb[0].mxu0
    %v572 = vadd.f32 0.0, %v571
    %v573 = vpop.f32.mrb[0].mxu0
    %v574 = vadd.f32 0.0, %v573
    %575 = vmatprep.mubr.f32.mxu0 0.0
    %576 = vmatmul.mubr.f32.gmra.mrb[0].mxu0 %v326
    %v577 = vpop.f32.mrb[0].mxu0
    %v578 = vadd.f32 0.0, %v577
    %v579 = vpop.f32.mrb[0].mxu0
    %v580 = vadd.f32 0.0, %v579
    %581 = vmatprep.mubr.f32.mxu0 0.0
    %582 = vmatmul.mubr.f32.gmra.mrb[0].mxu0 %v329
    %v583 = vpop.f32.mrb[0].mxu0
    %v584 = vadd.f32 0.0, %v583
    %v585 = vpop.f32.mrb[0].mxu0
    %v586 = vadd.f32 0.0, %v585
    %587 = vmatprep.mubr.f32.mxu0 0.0
    %588 = vmatmul.mubr.f32.gmra.mrb[0].mxu0 %v332
    %v589 = vpop.f32.mrb[0].mxu0
    %v590 = vadd.f32 0.0, %v589
    %v591 = vpop.f32.mrb[0].mxu0
    %v592 = vadd.f32 0.0, %v591
    %593 = vmatprep.mubr.f32.mxu0 0.0
    %594 = vmatmul.mubr.f32.gmra.mrb[0].mxu0 %v335
    %v595 = vpop.f32.mrb[0].mxu0
    %v596 = vadd.f32 0.0, %v595
    %v597 = vpop.f32.mrb[0].mxu0
    %v598 = vadd.f32 0.0, %v597
    %599 = vmatprep.mubr.f32.mxu0 0.0
    %600 = vmatmul.mubr.f32.gmra.mrb[0].mxu0 %v338
    %v601 = vpop.f32.mrb[0].mxu0
    %v602 = vadd.f32 0.0, %v601
    %v603 = vpop.f32.mrb[0].mxu0
    %v604 = vadd.f32 0.0, %v603
    %605 = vmatprep.mubr.f32.mxu0 0.0
    %606 = vmatmul.mubr.f32.gmra.mrb[0].mxu0 %v341
    %v607 = vpop.f32.mrb[0].mxu0
    %v608 = vadd.f32 0.0, %v607
    %v609 = vpop.f32.mrb[0].mxu0
    %v610 = vadd.f32 0.0, %v609
    %611 = vmatprep.mubr.f32.mxu0 0.0
    %612 = vmatmul.mubr.f32.gmra.mrb[0].mxu0 %v344
    %v613 = vpop.f32.mrb[0].mxu0
    %v614 = vadd.f32 0.0, %v613
    %v615 = vpop.f32.mrb[0].mxu0
    %v616 = vadd.f32 0.0, %v615
    %617 = vmatprep.mubr.f32.mxu0 0.0
    %618 = vmatmul.mubr.f32.gmra.mrb[0].mxu0 %v347
    %v619 = vpop.f32.mrb[0].mxu0
    %v620 = vadd.f32 0.0, %v619
    %v621 = vpop.f32.mrb[0].mxu0
    %v622 = vadd.f32 0.0, %v621
    %623 = vmatprep.mubr.f32.mxu0 0.0
    %624 = vmatmul.mubr.f32.gmra.mrb[0].mxu0 %v350
    %v625 = vpop.f32.mrb[0].mxu0
    %v626 = vadd.f32 0.0, %v625
    %v627 = vpop.f32.mrb[0].mxu0
    %v628 = vadd.f32 0.0, %v627
    %629 = vmatprep.mubr.f32.mxu0 0.0
    %630 = vmatmul.mubr.f32.gmra.mrb[0].mxu0 %v353
    %v631 = vpop.f32.mrb[0].mxu0
    %v632 = vadd.f32 0.0, %v631
    %v633 = vpop.f32.mrb[0].mxu0
    %v634 = vadd.f32 0.0, %v633
    %635 = vmatprep.mubr.f32.mxu0 0.0
    %636 = vmatmul.mubr.f32.gmra.mrb[0].mxu0 %v356
    %v637 = vpop.f32.mrb[0].mxu0
    %v638 = vadd.f32 0.0, %v637
    %v639 = vpop.f32.mrb[0].mxu0
    %v640 = vadd.f32 0.0, %v639
    %641 = vmatprep.mubr.f32.mxu0 0.0
    %642 = vmatmul.mubr.f32.gmra.mrb[0].mxu0 %v359
    %v643 = vpop.f32.mrb[0].mxu0
    %v644 = vadd.f32 0.0, %v643
    %v645 = vpop.f32.mrb[0].mxu0
    %v646 = vadd.f32 0.0, %v645
    %647 = vmatprep.mubr.f32.mxu0 0.0
    %648 = vmatmul.mubr.f32.gmra.mrb[0].mxu0 %v362
    %v649 = vpop.f32.mrb[0].mxu0
    %v650 = vadd.f32 0.0, %v649
    %v651 = vpop.f32.mrb[0].mxu0
    %v652 = vadd.f32 0.0, %v651
    %653 = vmatprep.mubr.f32.mxu0 0.0
    %654 = vmatmul.mubr.f32.gmra.mrb[0].mxu0 %v365
    %v655 = vpop.f32.mrb[0].mxu0
    %v656 = vadd.f32 0.0, %v655
    %v657 = vpop.f32.mrb[0].mxu0
    %v658 = vadd.f32 0.0, %v657
    %659 = vmatprep.mubr.f32.mxu0 0.0
    %660 = vmatmul.mubr.f32.gmra.mrb[0].mxu0 %v368
    %v661 = vpop.f32.mrb[0].mxu0
    %v662 = vadd.f32 0.0, %v661
    %v663 = vpop.f32.mrb[0].mxu0
    %v664 = vadd.f32 0.0, %v663
    %665 = vmatprep.mubr.f32.mxu0 0.0
    %666 = vmatmul.mubr.f32.gmra.mrb[0].mxu0 %v371
    %v667 = vpop.f32.mrb[0].mxu0
    %v668 = vadd.f32 0.0, %v667
    %v669 = vpop.f32.mrb[0].mxu0
    %v670 = vadd.f32 0.0, %v669
    %671 = vmatprep.mubr.f32.mxu0 0.0
    %672 = vmatmul.mubr.f32.gmra.mrb[0].mxu0 %v374
    %v673 = vpop.f32.mrb[0].mxu0
    %v674 = vadd.f32 0.0, %v673
    %v675 = vpop.f32.mrb[0].mxu0
    %v676 = vadd.f32 0.0, %v675
    %677 = vmatprep.mubr.f32.mxu0 0.0
    %678 = vmatmul.mubr.f32.gmra.mrb[0].mxu0 %v377
    %v679 = vpop.f32.mrb[0].mxu0
    %v680 = vadd.f32 0.0, %v679
    %v681 = vpop.f32.mrb[0].mxu0
    %v682 = vadd.f32 0.0, %v681
    %683 = vmatprep.mubr.f32.mxu0 0.0
    %684 = vmatmul.mubr.f32.gmra.mrb[0].mxu0 %v380
    %v685 = vpop.f32.mrb[0].mxu0
    %v686 = vadd.f32 0.0, %v685
    %v687 = vpop.f32.mrb[0].mxu0
    %v688 = vadd.f32 0.0, %v687
    %689 = vmatprep.mubr.f32.mxu0 0.0
    %690 = vmatmul.mubr.f32.gmra.mrb[0].mxu0 %v383
    %v691 = vpop.f32.mrb[0].mxu0
    %v692 = vadd.f32 0.0, %v691
    %v693 = vpop.f32.mrb[0].mxu0
    %v694 = vadd.f32 0.0, %v693
    %695 = vmatprep.mubr.f32.mxu0 0.0
    %696 = vmatmul.mubr.f32.gmra.mrb[0].mxu0 %v386
    %v697 = vpop.f32.mrb[0].mxu0
    %v698 = vadd.f32 0.0, %v697
    %v699 = vpop.f32.mrb[0].mxu0
    %v700 = vadd.f32 0.0, %v699
    %701 = vmatprep.mubr.f32.mxu0 0.0
    %702 = vmatmul.mubr.f32.gmra.mrb[0].mxu0 %v389
    %v703 = vpop.f32.mrb[0].mxu0
    %v704 = vadd.f32 0.0, %v703
    %v705 = vpop.f32.mrb[0].mxu0
    %v706 = vadd.f32 0.0, %v705
    %707 = vmatprep.mubr.f32.mxu0 0.0
    %708 = vmatmul.mubr.f32.gmra.mrb[0].mxu0 %v392
    %v709 = vpop.f32.mrb[0].mxu0
    %v710 = vadd.f32 0.0, %v709
    %v711 = vpop.f32.mrb[0].mxu0
    %v712 = vadd.f32 0.0, %v711
    %713 = vmatprep.mubr.f32.mxu0 0.0
    %714 = vmatmul.mubr.f32.gmra.mrb[0].mxu0 %v395
    %v715 = vpop.f32.mrb[0].mxu0
    %v716 = vadd.f32 0.0, %v715
    %v717 = vpop.f32.mrb[0].mxu0
    %v718 = vadd.f32 0.0, %v717
    %719 = vmatprep.mubr.f32.mxu0 0.0
    %720 = vmatmul.mubr.f32.gmra.mrb[0].mxu0 %v398
    %v721 = vpop.f32.mrb[0].mxu0
    %v722 = vadd.f32 0.0, %v721
    %v723 = vpop.f32.mrb[0].mxu0
    %v724 = vadd.f32 0.0, %v723
    %725 = vmatprep.mubr.f32.mxu0 0.0
    %726 = vmatmul.mubr.f32.gmra.mrb[0].mxu0 %v401
    %v727 = vpop.f32.mrb[0].mxu0
    %v728 = vadd.f32 0.0, %v727
    %v729 = vpop.f32.mrb[0].mxu0
    %v730 = vadd.f32 0.0, %v729
    %731 = vmatprep.mubr.f32.mxu0 0.0
    %732 = vmatmul.mubr.f32.gmra.mrb[0].mxu0 %v404
    %v733 = vpop.f32.mrb[0].mxu0
    %v734 = vadd.f32 0.0, %v733
    %v735 = vpop.f32.mrb[0].mxu0
    %v736 = vadd.f32 0.0, %v735
    %737 = vmatprep.mubr.f32.mxu0 0.0
    %738 = vmatmul.mubr.f32.gmra.mrb[0].mxu0 %v407
    %v739 = vpop.f32.mrb[0].mxu0
    %v740 = vadd.f32 0.0, %v739
    %v741 = vpop.f32.mrb[0].mxu0
    %v742 = vadd.f32 0.0, %v741
    %743 = vmatprep.mubr.f32.mxu0 0.0
    %744 = vmatmul.mubr.f32.gmra.mrb[0].mxu0 %v410
    %v745 = vpop.f32.mrb[0].mxu0
    %v746 = vadd.f32 0.0, %v745
    %v747 = vpop.f32.mrb[0].mxu0
    %v748 = vadd.f32 0.0, %v747
    %749 = vmatprep.mubr.f32.mxu0 0.0
    %750 = vmatmul.mubr.f32.gmra.mrb[0].mxu0 %v413
    %v751 = vpop.f32.mrb[0].mxu0
    %v752 = vadd.f32 0.0, %v751
    %v753 = vpop.f32.mrb[0].mxu0
    %v754 = vadd.f32 0.0, %v753
    %755 = vmatprep.mubr.f32.mxu0 0.0
    %756 = vmatmul.mubr.f32.gmra.mrb[0].mxu0 %v416
    %v757 = vpop.f32.mrb[0].mxu0
    %v758 = vadd.f32 0.0, %v757
    %v759 = vpop.f32.mrb[0].mxu0
    %v760 = vadd.f32 0.0, %v759
    %761 = vmatprep.mubr.f32.mxu0 0.0
    %762 = vmatmul.mubr.f32.gmra.mrb[0].mxu0 %v419
    %v763 = vpop.f32.mrb[0].mxu0
    %v764 = vadd.f32 0.0, %v763
    %v765 = vpop.f32.mrb[0].mxu0
    %v766 = vadd.f32 0.0, %v765
    %767 = vmatprep.mubr.f32.mxu0 0.0
    %768 = vmatmul.mubr.f32.gmra.mrb[0].mxu0 %v422
    %v769 = vpop.f32.mrb[0].mxu0
    %v770 = vadd.f32 0.0, %v769
    %v771 = vpop.f32.mrb[0].mxu0
    %v772 = vadd.f32 0.0, %v771
    %773 = vmatprep.mubr.f32.mxu0 0.0
    %774 = vmatmul.mubr.f32.gmra.mrb[0].mxu0 %v425
    %v775 = vpop.f32.mrb[0].mxu0
    %v776 = vadd.f32 0.0, %v775
    %v777 = vpop.f32.mrb[0].mxu0
    %v778 = vadd.f32 0.0, %v777
    %779 = vmatprep.mubr.f32.mxu0 0.0
    %780 = vmatmul.mubr.f32.gmra.mrb[0].mxu0 %v428
    %v781 = vpop.f32.mrb[0].mxu0
    %v782 = vadd.f32 0.0, %v781
    %v783 = vpop.f32.mrb[0].mxu0
    %v784 = vadd.f32 0.0, %v783
    %785 = vmatprep.mubr.f32.mxu0 0.0
    %786 = vmatmul.mubr.f32.gmra.mrb[0].mxu0 %v431
    %v787 = vpop.f32.mrb[0].mxu0
    %v788 = vadd.f32 0.0, %v787
    %v789 = vpop.f32.mrb[0].mxu0
    %v790 = vadd.f32 0.0, %v789
    %791 = vmatprep.mubr.f32.mxu0 0.0
    %792 = vmatmul.mubr.f32.gmra.mrb[0].mxu0 %v434
    %v793 = vpop.f32.mrb[0].mxu0
    %v794 = vadd.f32 0.0, %v793
    %v795 = vpop.f32.mrb[0].mxu0
    %v796 = vadd.f32 0.0, %v795
    %797 = vmatprep.mubr.f32.mxu0 0.0
    %798 = vmatmul.mubr.f32.gmra.mrb[0].mxu0 %v437
    %v799 = vpop.f32.mrb[0].mxu0
    %v800 = vadd.f32 0.0, %v799
    %v801 = vpop.f32.mrb[0].mxu0
    %v802 = vadd.f32 0.0, %v801
    %803 = vmatprep.mubr.f32.mxu0 0.0
    %804 = vmatmul.mubr.f32.gmra.mrb[0].mxu0 %v440
    %v805 = vpop.f32.mrb[0].mxu0
    %v806 = vadd.f32 0.0, %v805
    %v807 = vpop.f32.mrb[0].mxu0
    %v808 = vadd.f32 0.0, %v807
    %809 = vmatprep.mubr.f32.mxu0 0.0
    %810 = vmatmul.mubr.f32.gmra.mrb[0].mxu0 %v443
    %v811 = vpop.f32.mrb[0].mxu0
    %v812 = vadd.f32 0.0, %v811
    %v813 = vpop.f32.mrb[0].mxu0
    %v814 = vadd.f32 0.0, %v813
    %815 = vmatprep.mubr.f32.mxu0 0.0
    %816 = vmatmul.mubr.f32.gmra.mrb[0].mxu0 %v446
    %v817 = vpop.f32.mrb[0].mxu0
    %v818 = vadd.f32 0.0, %v817
    %v819 = vpop.f32.mrb[0].mxu0
    %v820 = vadd.f32 0.0, %v819
    %821 = vmatprep.mubr.f32.mxu0 0.0
    %822 = vmatmul.mubr.f32.gmra.mrb[0].mxu0 %v449
    %v823 = vpop.f32.mrb[0].mxu0
    %v824 = vadd.f32 0.0, %v823
    %v825 = vpop.f32.mrb[0].mxu0
    %v826 = vadd.f32 0.0, %v825
    %827 = vmatprep.mubr.f32.mxu0 0.0
    %828 = vmatmul.mubr.f32.gmra.mrb[0].mxu0 %v452
    %v829 = vpop.f32.mrb[0].mxu0
    %v830 = vadd.f32 0.0, %v829
    %v831 = vpop.f32.mrb[0].mxu0
    %v832 = vadd.f32 0.0, %v831
    %833 = vmatprep.mubr.f32.mxu0 0.0
    %834 = vmatmul.mubr.f32.gmra.mrb[0].mxu0 %v455
    %v835 = vpop.f32.mrb[0].mxu0
    %v836 = vadd.f32 0.0, %v835
    %v837 = vpop.f32.mrb[0].mxu0
    %v838 = vadd.f32 0.0, %v837
    %839 = vmatprep.mubr.f32.mxu0 0.0
    %840 = vmatmul.mubr.f32.gmra.mrb[0].mxu0 %v458
    %v841 = vpop.f32.mrb[0].mxu0
    %v842 = vadd.f32 0.0, %v841
    %v843 = vpop.f32.mrb[0].mxu0
    %v844 = vadd.f32 0.0, %v843
    %845 = vmatprep.mubr.f32.mxu0 0.0
    %846 = vmatmul.mubr.f32.gmra.mrb[0].mxu0 %v461
    %v847 = vpop.f32.mrb[0].mxu0
    %v848 = vadd.f32 0.0, %v847
    %v849 = vpop.f32.mrb[0].mxu0
    %v850 = vadd.f32 0.0, %v849
    %851 = vmatprep.mubr.f32.mxu0 0.0
    %852 = vmatmul.mubr.f32.gmra.mrb[0].mxu0 %v464
    %v853 = vpop.f32.mrb[0].mxu0
    %v854 = vadd.f32 0.0, %v853
    %v855 = vpop.f32.mrb[0].mxu0
    %v856 = vadd.f32 0.0, %v855
    %857 = vmatprep.mubr.f32.mxu0 0.0
    %858 = vmatmul.mubr.f32.gmra.mrb[0].mxu0 %v467
    %v859 = vpop.f32.mrb[0].mxu0
    %v860 = vadd.f32 0.0, %v859
    %v861 = vpop.f32.mrb[0].mxu0
    %v862 = vadd.f32 0.0, %v861
    %863 = vmatprep.mubr.f32.mxu0 0.0
    %864 = vmatmul.mubr.f32.gmra.mrb[0].mxu0 %v470
    %v865 = vpop.f32.mrb[0].mxu0
    %v866 = vadd.f32 0.0, %v865
    %v867 = vpop.f32.mrb[0].mxu0
    %v868 = vadd.f32 0.0, %v867
    %869 = vmatprep.mubr.f32.mxu0 0.0
    %870 = vmatmul.mubr.f32.gmra.mrb[0].mxu0 %v473
    %v871 = vpop.f32.mrb[0].mxu0
    %v872 = vadd.f32 0.0, %v871
    %v873 = vpop.f32.mrb[0].mxu0
    %v874 = vadd.f32 0.0, %v873
    %875 = vmatprep.mubr.f32.mxu0 0.0
    %876 = vmatmul.mubr.f32.gmra.mrb[0].mxu0 %v476
    %v877 = vpop.f32.mrb[0].mxu0
    %v878 = vadd.f32 0.0, %v877
    %v879 = vpop.f32.mrb[0].mxu0
    %v880 = vadd.f32 0.0, %v879
    %881 = vmatprep.mubr.f32.mxu0 0.0
    %882 = vmatmul.mubr.f32.gmra.mrb[0].mxu0 %v479
    %v883 = vpop.f32.mrb[0].mxu0
    %v884 = vadd.f32 0.0, %v883
    %v885 = vpop.f32.mrb[0].mxu0
    %v886 = vadd.f32 0.0, %v885
    %887 = vmatprep.mubr.f32.mxu0 0.0
    %888 = vmatmul.mubr.f32.gmra.mrb[0].mxu0 %v482
    %v889 = vpop.f32.mrb[0].mxu0
    %v890 = vadd.f32 0.0, %v889
    %v891 = vpop.f32.mrb[0].mxu0
    %v892 = vadd.f32 0.0, %v891
    %893 = vmatprep.mubr.f32.mxu0 0.0
    %894 = vmatmul.mubr.f32.gmra.mrb[0].mxu0 %v485
    %v895 = vpop.f32.mrb[0].mxu0
    %v896 = vadd.f32 0.0, %v895
    %v897 = vpop.f32.mrb[0].mxu0
    %v898 = vadd.f32 0.0, %v897
    %899 = vmatprep.mubr.f32.mxu0 0.0
    %900 = vmatmul.mubr.f32.gmra.mrb[0].mxu0 %v488
    %v901 = vpop.f32.mrb[0].mxu0
    %v902 = vadd.f32 0.0, %v901
    %v903 = vpop.f32.mrb[0].mxu0
    %v904 = vadd.f32 0.0, %v903
    %905 = vmatprep.mubr.f32.mxu0 0.0
    %906 = vmatmul.mubr.f32.gmra.mrb[0].mxu0 %v491
    %v907 = vpop.f32.mrb[0].mxu0
    %v908 = vadd.f32 0.0, %v907
    %v909 = vpop.f32.mrb[0].mxu0
    %v910 = vadd.f32 0.0, %v909
    %911 = vmatprep.mubr.f32.mxu0 0.0
    %912 = vmatmul.mubr.f32.gmra.mrb[0].mxu0 %v494
    %v913 = vpop.f32.mrb[0].mxu0
    %v914 = vadd.f32 0.0, %v913
    %v915 = vpop.f32.mrb[0].mxu0
    %v916 = vadd.f32 0.0, %v915
    %917 = vmatprep.mubr.f32.mxu0 0.0
    %918 = vmatmul.mubr.f32.gmra.mrb[0].mxu0 %v497
    %v919 = vpop.f32.mrb[0].mxu0
    %v920 = vadd.f32 0.0, %v919
    %v921 = vpop.f32.mrb[0].mxu0
    %v922 = vadd.f32 0.0, %v921
    %923 = vdwg.mxu0
    %924 = vmatprep.subr.mxu0 %v191
    %925 = vmatpush1.msra.mxu0 %v190
    %926 = vmatprep.subr.mxu0 %v198
    %927 = vmatpush1.msra.mxu0 %v197
    %928 = vmatprep.subr.mxu0 %v205
    %929 = vmatpush1.msra.mxu0 %v204
    %930 = vmatprep.subr.mxu0 %v212
    %931 = vmatpush1.msra.mxu0 %v211
    %932 = vmatprep.subr.mxu0 %v219
    %933 = vmatpush1.msra.mxu0 %v218
    %934 = vmatprep.subr.mxu0 %v226
    %935 = vmatpush1.msra.mxu0 %v225
    %936 = vmatprep.subr.mxu0 %v233
    %937 = vmatpush1.msra.mxu0 %v232
    %938 = vmatprep.subr.mxu0 %v240
    %939 = vmatpush1.msra.mxu0 %v239
    %940 = vmatprep.subr.mxu0 %v247
    %941 = vmatpush1.msra.mxu0 %v246
    %942 = vmatprep.subr.mxu0 %v254
    %943 = vmatpush1.msra.mxu0 %v253
    %944 = vmatprep.subr.mxu0 0.0
    %945 = vmatpush1.msra.mxu0 0.0
    %946 = vmatprep.subr.mxu0 0.0
    %947 = vmatpush1.msra.mxu0 0.0
    %948 = vmatprep.subr.mxu0 0.0
    %949 = vmatpush1.msra.mxu0 0.0
    %950 = vmatprep.subr.mxu0 0.0
    %951 = vmatpush1.msra.mxu0 0.0
    %952 = vmatprep.subr.mxu0 0.0
    %953 = vmatpush1.msra.mxu0 0.0
    %954 = vmatprep.subr.mxu0 0.0
    %955 = vmatpush1.msra.mxu0 0.0
    %956 = vmatprep.subr.mxu0 0.0
    %957 = vmatpush1.msra.mxu0 0.0
    %958 = vmatprep.subr.mxu0 0.0
    %959 = vmatpush1.msra.mxu0 0.0
    %960 = vmatprep.subr.mxu0 0.0
    %961 = vmatpush1.msra.mxu0 0.0
    %962 = vmatprep.subr.mxu0 0.0
    %963 = vmatpush1.msra.mxu0 0.0
    %964 = vmatprep.subr.mxu0 0.0
    %965 = vmatpush1.msra.mxu0 0.0
    %966 = vmatprep.subr.mxu0 0.0
    %967 = vmatpush1.msra.mxu0 0.0
    %968 = vmatprep.subr.mxu0 0.0
    %969 = vmatpush1.msra.mxu0 0.0
    %970 = vmatprep.subr.mxu0 0.0
    %971 = vmatpush1.msra.mxu0 0.0
    %972 = vmatprep.subr.mxu0 0.0
    %973 = vmatpush1.msra.mxu0 0.0
    %974 = vmatprep.subr.mxu0 0.0
    %975 = vmatpush1.msra.mxu0 0.0
    %976 = vmatprep.subr.mxu0 0.0
    %977 = vmatpush1.msra.mxu0 0.0
    %978 = vmatprep.subr.mxu0 0.0
    %979 = vmatpush1.msra.mxu0 0.0
    %980 = vmatprep.subr.mxu0 0.0
    %981 = vmatpush1.msra.mxu0 0.0
    %982 = vmatprep.subr.mxu0 0.0
    %983 = vmatpush1.msra.mxu0 0.0
    %984 = vmatprep.subr.mxu0 0.0
    %985 = vmatpush1.msra.mxu0 0.0
    %986 = vmatprep.subr.mxu0 0.0
    %987 = vmatpush1.msra.mxu0 0.0
    %988 = vmatprep.mubr.f32.mxu0 0.0
    %989 = vmatmul.mubr.f32.gmra.mrb[0].mxu0 %v320
    %v990 = vpop.f32.mrb[0].mxu0
    %v991 = vadd.f32 0.0, %v990
    %v992 = vpop.f32.mrb[0].mxu0
    %v993 = vadd.f32 0.0, %v992
    %994 = vmatprep.mubr.f32.mxu0 0.0
    %995 = vmatmul.mubr.f32.gmra.mrb[0].mxu0 %v323
    %v996 = vpop.f32.mrb[0].mxu0
    %v997 = vadd.f32 0.0, %v996
    %v998 = vpop.f32.mrb[0].mxu0
    %v999 = vadd.f32 0.0, %v998
    %1000 = vmatprep.mubr.f32.mxu0 0.0
    %1001 = vmatmul.mubr.f32.gmra.mrb[0].mxu0 %v326
    %v1002 = vpop.f32.mrb[0].mxu0
    %v1003 = vadd.f32 0.0, %v1002
    %v1004 = vpop.f32.mrb[0].mxu0
    %v1005 = vadd.f32 0.0, %v1004
    %1006 = vmatprep.mubr.f32.mxu0 0.0
    %1007 = vmatmul.mubr.f32.gmra.mrb[0].mxu0 %v329
    %v1008 = vpop.f32.mrb[0].mxu0
    %v1009 = vadd.f32 0.0, %v1008
    %v1010 = vpop.f32.mrb[0].mxu0
    %v1011 = vadd.f32 0.0, %v1010
    %1012 = vmatprep.mubr.f32.mxu0 0.0
    %1013 = vmatmul.mubr.f32.gmra.mrb[0].mxu0 %v332
    %v1014 = vpop.f32.mrb[0].mxu0
    %v1015 = vadd.f32 0.0, %v1014
    %v1016 = vpop.f32.mrb[0].mxu0
    %v1017 = vadd.f32 0.0, %v1016
    %1018 = vmatprep.mubr.f32.mxu0 0.0
    %1019 = vmatmul.mubr.f32.gmra.mrb[0].mxu0 %v335
    %v1020 = vpop.f32.mrb[0].mxu0
    %v1021 = vadd.f32 0.0, %v1020
    %v1022 = vpop.f32.mrb[0].mxu0
    %v1023 = vadd.f32 0.0, %v1022
    %1024 = vmatprep.mubr.f32.mxu0 0.0
    %1025 = vmatmul.mubr.f32.gmra.mrb[0].mxu0 %v338
    %v1026 = vpop.f32.mrb[0].mxu0
    %v1027 = vadd.f32 0.0, %v1026
    %v1028 = vpop.f32.mrb[0].mxu0
    %v1029 = vadd.f32 0.0, %v1028
    %1030 = vmatprep.mubr.f32.mxu0 0.0
    %1031 = vmatmul.mubr.f32.gmra.mrb[0].mxu0 %v341
    %v1032 = vpop.f32.mrb[0].mxu0
    %v1033 = vadd.f32 0.0, %v1032
    %v1034 = vpop.f32.mrb[0].mxu0
    %v1035 = vadd.f32 0.0, %v1034
    %1036 = vmatprep.mubr.f32.mxu0 0.0
    %1037 = vmatmul.mubr.f32.gmra.mrb[0].mxu0 %v344
    %v1038 = vpop.f32.mrb[0].mxu0
    %v1039 = vadd.f32 0.0, %v1038
    %v1040 = vpop.f32.mrb[0].mxu0
    %v1041 = vadd.f32 0.0, %v1040
    %1042 = vmatprep.mubr.f32.mxu0 0.0
    %1043 = vmatmul.mubr.f32.gmra.mrb[0].mxu0 %v347
    %v1044 = vpop.f32.mrb[0].mxu0
    %v1045 = vadd.f32 0.0, %v1044
    %v1046 = vpop.f32.mrb[0].mxu0
    %v1047 = vadd.f32 0.0, %v1046
    %1048 = vmatprep.mubr.f32.mxu0 0.0
    %1049 = vmatmul.mubr.f32.gmra.mrb[0].mxu0 %v350
    %v1050 = vpop.f32.mrb[0].mxu0
    %v1051 = vadd.f32 0.0, %v1050
    %v1052 = vpop.f32.mrb[0].mxu0
    %v1053 = vadd.f32 0.0, %v1052
    %1054 = vmatprep.mubr.f32.mxu0 0.0
    %1055 = vmatmul.mubr.f32.gmra.mrb[0].mxu0 %v353
    %v1056 = vpop.f32.mrb[0].mxu0
    %v1057 = vadd.f32 0.0, %v1056
    %v1058 = vpop.f32.mrb[0].mxu0
    %v1059 = vadd.f32 0.0, %v1058
    %1060 = vmatprep.mubr.f32.mxu0 0.0
    %1061 = vmatmul.mubr.f32.gmra.mrb[0].mxu0 %v356
    %v1062 = vpop.f32.mrb[0].mxu0
    %v1063 = vadd.f32 0.0, %v1062
    %v1064 = vpop.f32.mrb[0].mxu0
    %v1065 = vadd.f32 0.0, %v1064
    %1066 = vmatprep.mubr.f32.mxu0 0.0
    %1067 = vmatmul.mubr.f32.gmra.mrb[0].mxu0 %v359
    %v1068 = vpop.f32.mrb[0].mxu0
    %v1069 = vadd.f32 0.0, %v1068
    %v1070 = vpop.f32.mrb[0].mxu0
    %v1071 = vadd.f32 0.0, %v1070
    %1072 = vmatprep.mubr.f32.mxu0 0.0
    %1073 = vmatmul.mubr.f32.gmra.mrb[0].mxu0 %v362
    %v1074 = vpop.f32.mrb[0].mxu0
    %v1075 = vadd.f32 0.0, %v1074
    %v1076 = vpop.f32.mrb[0].mxu0
    %v1077 = vadd.f32 0.0, %v1076
    %1078 = vmatprep.mubr.f32.mxu0 0.0
    %1079 = vmatmul.mubr.f32.gmra.mrb[0].mxu0 %v365
    %v1080 = vpop.f32.mrb[0].mxu0
    %v1081 = vadd.f32 0.0, %v1080
    %v1082 = vpop.f32.mrb[0].mxu0
    %v1083 = vadd.f32 0.0, %v1082
    %1084 = vmatprep.mubr.f32.mxu0 0.0
    %1085 = vmatmul.mubr.f32.gmra.mrb[0].mxu0 %v368
    %v1086 = vpop.f32.mrb[0].mxu0
    %v1087 = vadd.f32 0.0, %v1086
    %v1088 = vpop.f32.mrb[0].mxu0
    %v1089 = vadd.f32 0.0, %v1088
    %1090 = vmatprep.mubr.f32.mxu0 0.0
    %1091 = vmatmul.mubr.f32.gmra.mrb[0].mxu0 %v371
    %v1092 = vpop.f32.mrb[0].mxu0
    %v1093 = vadd.f32 0.0, %v1092
    %v1094 = vpop.f32.mrb[0].mxu0
    %v1095 = vadd.f32 0.0, %v1094
    %1096 = vmatprep.mubr.f32.mxu0 0.0
    %1097 = vmatmul.mubr.f32.gmra.mrb[0].mxu0 %v374
    %v1098 = vpop.f32.mrb[0].mxu0
    %v1099 = vadd.f32 0.0, %v1098
    %v1100 = vpop.f32.mrb[0].mxu0
    %v1101 = vadd.f32 0.0, %v1100
    %1102 = vmatprep.mubr.f32.mxu0 0.0
    %1103 = vmatmul.mubr.f32.gmra.mrb[0].mxu0 %v377
    %v1104 = vpop.f32.mrb[0].mxu0
    %v1105 = vadd.f32 0.0, %v1104
    %v1106 = vpop.f32.mrb[0].mxu0
    %v1107 = vadd.f32 0.0, %v1106
    %1108 = vmatprep.mubr.f32.mxu0 0.0
    %1109 = vmatmul.mubr.f32.gmra.mrb[0].mxu0 %v380
    %v1110 = vpop.f32.mrb[0].mxu0
    %v1111 = vadd.f32 0.0, %v1110
    %v1112 = vpop.f32.mrb[0].mxu0
    %v1113 = vadd.f32 0.0, %v1112
    %1114 = vmatprep.mubr.f32.mxu0 0.0
    %1115 = vmatmul.mubr.f32.gmra.mrb[0].mxu0 %v383
    %v1116 = vpop.f32.mrb[0].mxu0
    %v1117 = vadd.f32 0.0, %v1116
    %v1118 = vpop.f32.mrb[0].mxu0
    %v1119 = vadd.f32 0.0, %v1118
    %1120 = vmatprep.mubr.f32.mxu0 0.0
    %1121 = vmatmul.mubr.f32.gmra.mrb[0].mxu0 %v386
    %v1122 = vpop.f32.mrb[0].mxu0
    %v1123 = vadd.f32 0.0, %v1122
    %v1124 = vpop.f32.mrb[0].mxu0
    %v1125 = vadd.f32 0.0, %v1124
    %1126 = vmatprep.mubr.f32.mxu0 0.0
    %1127 = vmatmul.mubr.f32.gmra.mrb[0].mxu0 %v389
    %v1128 = vpop.f32.mrb[0].mxu0
    %v1129 = vadd.f32 0.0, %v1128
    %v1130 = vpop.f32.mrb[0].mxu0
    %v1131 = vadd.f32 0.0, %v1130
    %1132 = vmatprep.mubr.f32.mxu0 0.0
    %1133 = vmatmul.mubr.f32.gmra.mrb[0].mxu0 %v392
    %v1134 = vpop.f32.mrb[0].mxu0
    %v1135 = vadd.f32 0.0, %v1134
    %v1136 = vpop.f32.mrb[0].mxu0
    %v1137 = vadd.f32 0.0, %v1136
    %1138 = vmatprep.mubr.f32.mxu0 0.0
    %1139 = vmatmul.mubr.f32.gmra.mrb[0].mxu0 %v395
    %v1140 = vpop.f32.mrb[0].mxu0
    %v1141 = vadd.f32 0.0, %v1140
    %v1142 = vpop.f32.mrb[0].mxu0
    %v1143 = vadd.f32 0.0, %v1142
    %1144 = vmatprep.mubr.f32.mxu0 0.0
    %1145 = vmatmul.mubr.f32.gmra.mrb[0].mxu0 %v398
    %v1146 = vpop.f32.mrb[0].mxu0
    %v1147 = vadd.f32 0.0, %v1146
    %v1148 = vpop.f32.mrb[0].mxu0
    %v1149 = vadd.f32 0.0, %v1148
    %1150 = vmatprep.mubr.f32.mxu0 0.0
    %1151 = vmatmul.mubr.f32.gmra.mrb[0].mxu0 %v401
    %v1152 = vpop.f32.mrb[0].mxu0
    %v1153 = vadd.f32 0.0, %v1152
    %v1154 = vpop.f32.mrb[0].mxu0
    %v1155 = vadd.f32 0.0, %v1154
    %1156 = vmatprep.mubr.f32.mxu0 0.0
    %1157 = vmatmul.mubr.f32.gmra.mrb[0].mxu0 %v404
    %v1158 = vpop.f32.mrb[0].mxu0
    %v1159 = vadd.f32 0.0, %v1158
    %v1160 = vpop.f32.mrb[0].mxu0
    %v1161 = vadd.f32 0.0, %v1160
    %1162 = vmatprep.mubr.f32.mxu0 0.0
    %1163 = vmatmul.mubr.f32.gmra.mrb[0].mxu0 %v407
    %v1164 = vpop.f32.mrb[0].mxu0
    %v1165 = vadd.f32 0.0, %v1164
    %v1166 = vpop.f32.mrb[0].mxu0
    %v1167 = vadd.f32 0.0, %v1166
    %1168 = vmatprep.mubr.f32.mxu0 0.0
    %1169 = vmatmul.mubr.f32.gmra.mrb[0].mxu0 %v410
    %v1170 = vpop.f32.mrb[0].mxu0
    %v1171 = vadd.f32 0.0, %v1170
    %v1172 = vpop.f32.mrb[0].mxu0
    %v1173 = vadd.f32 0.0, %v1172
    %1174 = vmatprep.mubr.f32.mxu0 0.0
    %1175 = vmatmul.mubr.f32.gmra.mrb[0].mxu0 %v413
    %v1176 = vpop.f32.mrb[0].mxu0
    %v1177 = vadd.f32 0.0, %v1176
    %v1178 = vpop.f32.mrb[0].mxu0
    %v1179 = vadd.f32 0.0, %v1178
    %1180 = vmatprep.mubr.f32.mxu0 0.0
    %1181 = vmatmul.mubr.f32.gmra.mrb[0].mxu0 %v416
    %v1182 = vpop.f32.mrb[0].mxu0
    %v1183 = vadd.f32 0.0, %v1182
    %v1184 = vpop.f32.mrb[0].mxu0
    %v1185 = vadd.f32 0.0, %v1184
    %1186 = vmatprep.mubr.f32.mxu0 0.0
    %1187 = vmatmul.mubr.f32.gmra.mrb[0].mxu0 %v419
    %v1188 = vpop.f32.mrb[0].mxu0
    %v1189 = vadd.f32 0.0, %v1188
    %v1190 = vpop.f32.mrb[0].mxu0
    %v1191 = vadd.f32 0.0, %v1190
    %1192 = vmatprep.mubr.f32.mxu0 0.0
    %1193 = vmatmul.mubr.f32.gmra.mrb[0].mxu0 %v422
    %v1194 = vpop.f32.mrb[0].mxu0
    %v1195 = vadd.f32 0.0, %v1194
    %v1196 = vpop.f32.mrb[0].mxu0
    %v1197 = vadd.f32 0.0, %v1196
    %1198 = vmatprep.mubr.f32.mxu0 0.0
    %1199 = vmatmul.mubr.f32.gmra.mrb[0].mxu0 %v425
    %v1200 = vpop.f32.mrb[0].mxu0
    %v1201 = vadd.f32 0.0, %v1200
    %v1202 = vpop.f32.mrb[0].mxu0
    %v1203 = vadd.f32 0.0, %v1202
    %1204 = vmatprep.mubr.f32.mxu0 0.0
    %1205 = vmatmul.mubr.f32.gmra.mrb[0].mxu0 %v428
    %v1206 = vpop.f32.mrb[0].mxu0
    %v1207 = vadd.f32 0.0, %v1206
    %v1208 = vpop.f32.mrb[0].mxu0
    %v1209 = vadd.f32 0.0, %v1208
    %1210 = vmatprep.mubr.f32.mxu0 0.0
    %1211 = vmatmul.mubr.f32.gmra.mrb[0].mxu0 %v431
    %v1212 = vpop.f32.mrb[0].mxu0
    %v1213 = vadd.f32 0.0, %v1212
    %v1214 = vpop.f32.mrb[0].mxu0
    %v1215 = vadd.f32 0.0, %v1214
    %1216 = vmatprep.mubr.f32.mxu0 0.0
    %1217 = vmatmul.mubr.f32.gmra.mrb[0].mxu0 %v434
    %v1218 = vpop.f32.mrb[0].mxu0
    %v1219 = vadd.f32 0.0, %v1218
    %v1220 = vpop.f32.mrb[0].mxu0
    %v1221 = vadd.f32 0.0, %v1220
    %1222 = vmatprep.mubr.f32.mxu0 0.0
    %1223 = vmatmul.mubr.f32.gmra.mrb[0].mxu0 %v437
    %v1224 = vpop.f32.mrb[0].mxu0
    %v1225 = vadd.f32 0.0, %v1224
    %v1226 = vpop.f32.mrb[0].mxu0
    %v1227 = vadd.f32 0.0, %v1226
    %1228 = vmatprep.mubr.f32.mxu0 0.0
    %1229 = vmatmul.mubr.f32.gmra.mrb[0].mxu0 %v440
    %v1230 = vpop.f32.mrb[0].mxu0
    %v1231 = vadd.f32 0.0, %v1230
    %v1232 = vpop.f32.mrb[0].mxu0
    %v1233 = vadd.f32 0.0, %v1232
    %1234 = vmatprep.mubr.f32.mxu0 0.0
    %1235 = vmatmul.mubr.f32.gmra.mrb[0].mxu0 %v443
    %v1236 = vpop.f32.mrb[0].mxu0
    %v1237 = vadd.f32 0.0, %v1236
    %v1238 = vpop.f32.mrb[0].mxu0
    %v1239 = vadd.f32 0.0, %v1238
    %1240 = vmatprep.mubr.f32.mxu0 0.0
    %1241 = vmatmul.mubr.f32.gmra.mrb[0].mxu0 %v446
    %v1242 = vpop.f32.mrb[0].mxu0
    %v1243 = vadd.f32 0.0, %v1242
    %v1244 = vpop.f32.mrb[0].mxu0
    %v1245 = vadd.f32 0.0, %v1244
    %1246 = vmatprep.mubr.f32.mxu0 0.0
    %1247 = vmatmul.mubr.f32.gmra.mrb[0].mxu0 %v449
    %v1248 = vpop.f32.mrb[0].mxu0
    %v1249 = vadd.f32 0.0, %v1248
    %v1250 = vpop.f32.mrb[0].mxu0
    %v1251 = vadd.f32 0.0, %v1250
    %1252 = vmatprep.mubr.f32.mxu0 0.0
    %1253 = vmatmul.mubr.f32.gmra.mrb[0].mxu0 %v452
    %v1254 = vpop.f32.mrb[0].mxu0
    %v1255 = vadd.f32 0.0, %v1254
    %v1256 = vpop.f32.mrb[0].mxu0
    %v1257 = vadd.f32 0.0, %v1256
    %1258 = vmatprep.mubr.f32.mxu0 0.0
    %1259 = vmatmul.mubr.f32.gmra.mrb[0].mxu0 %v455
    %v1260 = vpop.f32.mrb[0].mxu0
    %v1261 = vadd.f32 0.0, %v1260
    %v1262 = vpop.f32.mrb[0].mxu0
    %v1263 = vadd.f32 0.0, %v1262
    %1264 = vmatprep.mubr.f32.mxu0 0.0
    %1265 = vmatmul.mubr.f32.gmra.mrb[0].mxu0 %v458
    %v1266 = vpop.f32.mrb[0].mxu0
    %v1267 = vadd.f32 0.0, %v1266
    %v1268 = vpop.f32.mrb[0].mxu0
    %v1269 = vadd.f32 0.0, %v1268
    %1270 = vmatprep.mubr.f32.mxu0 0.0
    %1271 = vmatmul.mubr.f32.gmra.mrb[0].mxu0 %v461
    %v1272 = vpop.f32.mrb[0].mxu0
    %v1273 = vadd.f32 0.0, %v1272
    %v1274 = vpop.f32.mrb[0].mxu0
    %v1275 = vadd.f32 0.0, %v1274
    %1276 = vmatprep.mubr.f32.mxu0 0.0
    %1277 = vmatmul.mubr.f32.gmra.mrb[0].mxu0 %v464
    %v1278 = vpop.f32.mrb[0].mxu0
    %v1279 = vadd.f32 0.0, %v1278
    %v1280 = vpop.f32.mrb[0].mxu0
    %v1281 = vadd.f32 0.0, %v1280
    %1282 = vmatprep.mubr.f32.mxu0 0.0
    %1283 = vmatmul.mubr.f32.gmra.mrb[0].mxu0 %v467
    %v1284 = vpop.f32.mrb[0].mxu0
    %v1285 = vadd.f32 0.0, %v1284
    %v1286 = vpop.f32.mrb[0].mxu0
    %v1287 = vadd.f32 0.0, %v1286
    %1288 = vmatprep.mubr.f32.mxu0 0.0
    %1289 = vmatmul.mubr.f32.gmra.mrb[0].mxu0 %v470
    %v1290 = vpop.f32.mrb[0].mxu0
    %v1291 = vadd.f32 0.0, %v1290
    %v1292 = vpop.f32.mrb[0].mxu0
    %v1293 = vadd.f32 0.0, %v1292
    %1294 = vmatprep.mubr.f32.mxu0 0.0
    %1295 = vmatmul.mubr.f32.gmra.mrb[0].mxu0 %v473
    %v1296 = vpop.f32.mrb[0].mxu0
    %v1297 = vadd.f32 0.0, %v1296
    %v1298 = vpop.f32.mrb[0].mxu0
    %v1299 = vadd.f32 0.0, %v1298
    %1300 = vmatprep.mubr.f32.mxu0 0.0
    %1301 = vmatmul.mubr.f32.gmra.mrb[0].mxu0 %v476
    %v1302 = vpop.f32.mrb[0].mxu0
    %v1303 = vadd.f32 0.0, %v1302
    %v1304 = vpop.f32.mrb[0].mxu0
    %v1305 = vadd.f32 0.0, %v1304
    %1306 = vmatprep.mubr.f32.mxu0 0.0
    %1307 = vmatmul.mubr.f32.gmra.mrb[0].mxu0 %v479
    %v1308 = vpop.f32.mrb[0].mxu0
    %v1309 = vadd.f32 0.0, %v1308
    %v1310 = vpop.f32.mrb[0].mxu0
    %v1311 = vadd.f32 0.0, %v1310
    %1312 = vmatprep.mubr.f32.mxu0 0.0
    %1313 = vmatmul.mubr.f32.gmra.mrb[0].mxu0 %v482
    %v1314 = vpop.f32.mrb[0].mxu0
    %v1315 = vadd.f32 0.0, %v1314
    %v1316 = vpop.f32.mrb[0].mxu0
    %v1317 = vadd.f32 0.0, %v1316
    %1318 = vmatprep.mubr.f32.mxu0 0.0
    %1319 = vmatmul.mubr.f32.gmra.mrb[0].mxu0 %v485
    %v1320 = vpop.f32.mrb[0].mxu0
    %v1321 = vadd.f32 0.0, %v1320
    %v1322 = vpop.f32.mrb[0].mxu0
    %v1323 = vadd.f32 0.0, %v1322
    %1324 = vmatprep.mubr.f32.mxu0 0.0
    %1325 = vmatmul.mubr.f32.gmra.mrb[0].mxu0 %v488
    %v1326 = vpop.f32.mrb[0].mxu0
    %v1327 = vadd.f32 0.0, %v1326
    %v1328 = vpop.f32.mrb[0].mxu0
    %v1329 = vadd.f32 0.0, %v1328
    %1330 = vmatprep.mubr.f32.mxu0 0.0
    %1331 = vmatmul.mubr.f32.gmra.mrb[0].mxu0 %v491
    %v1332 = vpop.f32.mrb[0].mxu0
    %v1333 = vadd.f32 0.0, %v1332
    %v1334 = vpop.f32.mrb[0].mxu0
    %v1335 = vadd.f32 0.0, %v1334
    %1336 = vmatprep.mubr.f32.mxu0 0.0
    %1337 = vmatmul.mubr.f32.gmra.mrb[0].mxu0 %v494
    %v1338 = vpop.f32.mrb[0].mxu0
    %v1339 = vadd.f32 0.0, %v1338
    %v1340 = vpop.f32.mrb[0].mxu0
    %v1341 = vadd.f32 0.0, %v1340
    %1342 = vmatprep.mubr.f32.mxu0 0.0
    %1343 = vmatmul.mubr.f32.gmra.mrb[0].mxu0 %v497
    %v1344 = vpop.f32.mrb[0].mxu0
    %v1345 = vadd.f32 0.0, %v1344
    %v1346 = vpop.f32.mrb[0].mxu0
    %v1347 = vadd.f32 0.0, %v1346
    %1348 = vdwg.mxu0
    %1349 = vmatprep.subr.mxu0 %v193
    %1350 = vmatpush1.msra.mxu0 %v192
    %1351 = vmatprep.subr.mxu0 %v200
    %1352 = vmatpush1.msra.mxu0 %v199
    %1353 = vmatprep.subr.mxu0 %v207
    %1354 = vmatpush1.msra.mxu0 %v206
    %1355 = vmatprep.subr.mxu0 %v214
    %1356 = vmatpush1.msra.mxu0 %v213
    %1357 = vmatprep.subr.mxu0 %v221
    %1358 = vmatpush1.msra.mxu0 %v220
    %1359 = vmatprep.subr.mxu0 %v228
    %1360 = vmatpush1.msra.mxu0 %v227
    %1361 = vmatprep.subr.mxu0 %v235
    %1362 = vmatpush1.msra.mxu0 %v234
    %1363 = vmatprep.subr.mxu0 %v242
    %1364 = vmatpush1.msra.mxu0 %v241
    %1365 = vmatprep.subr.mxu0 %v249
    %1366 = vmatpush1.msra.mxu0 %v248
    %1367 = vmatprep.subr.mxu0 %v256
    %1368 = vmatpush1.msra.mxu0 %v255
    %1369 = vmatprep.subr.mxu0 0.0
    %1370 = vmatpush1.msra.mxu0 0.0
    %1371 = vmatprep.subr.mxu0 0.0
    %1372 = vmatpush1.msra.mxu0 0.0
    %1373 = vmatprep.subr.mxu0 0.0
    %1374 = vmatpush1.msra.mxu0 0.0
    %1375 = vmatprep.subr.mxu0 0.0
    %1376 = vmatpush1.msra.mxu0 0.0
    %1377 = vmatprep.subr.mxu0 0.0
    %1378 = vmatpush1.msra.mxu0 0.0
    %1379 = vmatprep.subr.mxu0 0.0
    %1380 = vmatpush1.msra.mxu0 0.0
    %1381 = vmatprep.subr.mxu0 0.0
    %1382 = vmatpush1.msra.mxu0 0.0
    %1383 = vmatprep.subr.mxu0 0.0
    %1384 = vmatpush1.msra.mxu0 0.0
    %1385 = vmatprep.subr.mxu0 0.0
    %1386 = vmatpush1.msra.mxu0 0.0
    %1387 = vmatprep.subr.mxu0 0.0
    %1388 = vmatpush1.msra.mxu0 0.0
    %1389 = vmatprep.subr.mxu0 0.0
    %1390 = vmatpush1.msra.mxu0 0.0
    %1391 = vmatprep.subr.mxu0 0.0
    %1392 = vmatpush1.msra.mxu0 0.0
    %1393 = vmatprep.subr.mxu0 0.0
    %1394 = vmatpush1.msra.mxu0 0.0
    %1395 = vmatprep.subr.mxu0 0.0
    %1396 = vmatpush1.msra.mxu0 0.0
    %1397 = vmatprep.subr.mxu0 0.0
    %1398 = vmatpush1.msra.mxu0 0.0
    %1399 = vmatprep.subr.mxu0 0.0
    %1400 = vmatpush1.msra.mxu0 0.0
    %1401 = vmatprep.subr.mxu0 0.0
    %1402 = vmatpush1.msra.mxu0 0.0
    %1403 = vmatprep.subr.mxu0 0.0
    %1404 = vmatpush1.msra.mxu0 0.0
    %1405 = vmatprep.subr.mxu0 0.0
    %1406 = vmatpush1.msra.mxu0 0.0
    %1407 = vmatprep.subr.mxu0 0.0
    %1408 = vmatpush1.msra.mxu0 0.0
    %1409 = vmatprep.subr.mxu0 0.0
    %1410 = vmatpush1.msra.mxu0 0.0
    %1411 = vmatprep.subr.mxu0 0.0
    %1412 = vmatpush1.msra.mxu0 0.0
    %1413 = vmatprep.mubr.f32.mxu0 0.0
    %1414 = vmatmul.mubr.f32.gmra.mrb[0].mxu0 %v320
    %v1415 = vpop.f32.mrb[0].mxu0
    %v1416 = vadd.f32 0.0, %v1415
    %v1417 = vpop.f32.mrb[0].mxu0
    %v1418 = vadd.f32 0.0, %v1417
    %1419 = vmatprep.mubr.f32.mxu0 0.0
    %1420 = vmatmul.mubr.f32.gmra.mrb[0].mxu0 %v323
    %v1421 = vpop.f32.mrb[0].mxu0
    %v1422 = vadd.f32 0.0, %v1421
    %v1423 = vpop.f32.mrb[0].mxu0
    %v1424 = vadd.f32 0.0, %v1423
    %1425 = vmatprep.mubr.f32.mxu0 0.0
    %1426 = vmatmul.mubr.f32.gmra.mrb[0].mxu0 %v326
    %v1427 = vpop.f32.mrb[0].mxu0
    %v1428 = vadd.f32 0.0, %v1427
    %v1429 = vpop.f32.mrb[0].mxu0
    %v1430 = vadd.f32 0.0, %v1429
    %1431 = vmatprep.mubr.f32.mxu0 0.0
    %1432 = vmatmul.mubr.f32.gmra.mrb[0].mxu0 %v329
    %v1433 = vpop.f32.mrb[0].mxu0
    %v1434 = vadd.f32 0.0, %v1433
    %v1435 = vpop.f32.mrb[0].mxu0
    %v1436 = vadd.f32 0.0, %v1435
    %1437 = vmatprep.mubr.f32.mxu0 0.0
    %1438 = vmatmul.mubr.f32.gmra.mrb[0].mxu0 %v332
    %v1439 = vpop.f32.mrb[0].mxu0
    %v1440 = vadd.f32 0.0, %v1439
    %v1441 = vpop.f32.mrb[0].mxu0
    %v1442 = vadd.f32 0.0, %v1441
    %1443 = vmatprep.mubr.f32.mxu0 0.0
    %1444 = vmatmul.mubr.f32.gmra.mrb[0].mxu0 %v335
    %v1445 = vpop.f32.mrb[0].mxu0
    %v1446 = vadd.f32 0.0, %v1445
    %v1447 = vpop.f32.mrb[0].mxu0
    %v1448 = vadd.f32 0.0, %v1447
    %1449 = vmatprep.mubr.f32.mxu0 0.0
    %1450 = vmatmul.mubr.f32.gmra.mrb[0].mxu0 %v338
    %v1451 = vpop.f32.mrb[0].mxu0
    %v1452 = vadd.f32 0.0, %v1451
    %v1453 = vpop.f32.mrb[0].mxu0
    %v1454 = vadd.f32 0.0, %v1453
    %1455 = vmatprep.mubr.f32.mxu0 0.0
    %1456 = vmatmul.mubr.f32.gmra.mrb[0].mxu0 %v341
    %v1457 = vpop.f32.mrb[0].mxu0
    %v1458 = vadd.f32 0.0, %v1457
    %v1459 = vpop.f32.mrb[0].mxu0
    %v1460 = vadd.f32 0.0, %v1459
    %1461 = vmatprep.mubr.f32.mxu0 0.0
    %1462 = vmatmul.mubr.f32.gmra.mrb[0].mxu0 %v344
    %v1463 = vpop.f32.mrb[0].mxu0
    %v1464 = vadd.f32 0.0, %v1463
    %v1465 = vpop.f32.mrb[0].mxu0
    %v1466 = vadd.f32 0.0, %v1465
    %1467 = vmatprep.mubr.f32.mxu0 0.0
    %1468 = vmatmul.mubr.f32.gmra.mrb[0].mxu0 %v347
    %v1469 = vpop.f32.mrb[0].mxu0
    %v1470 = vadd.f32 0.0, %v1469
    %v1471 = vpop.f32.mrb[0].mxu0
    %v1472 = vadd.f32 0.0, %v1471
    %1473 = vmatprep.mubr.f32.mxu0 0.0
    %1474 = vmatmul.mubr.f32.gmra.mrb[0].mxu0 %v350
    %v1475 = vpop.f32.mrb[0].mxu0
    %v1476 = vadd.f32 0.0, %v1475
    %v1477 = vpop.f32.mrb[0].mxu0
    %v1478 = vadd.f32 0.0, %v1477
    %1479 = vmatprep.mubr.f32.mxu0 0.0
    %1480 = vmatmul.mubr.f32.gmra.mrb[0].mxu0 %v353
    %v1481 = vpop.f32.mrb[0].mxu0
    %v1482 = vadd.f32 0.0, %v1481
    %v1483 = vpop.f32.mrb[0].mxu0
    %v1484 = vadd.f32 0.0, %v1483
    %1485 = vmatprep.mubr.f32.mxu0 0.0
    %1486 = vmatmul.mubr.f32.gmra.mrb[0].mxu0 %v356
    %v1487 = vpop.f32.mrb[0].mxu0
    %v1488 = vadd.f32 0.0, %v1487
    %v1489 = vpop.f32.mrb[0].mxu0
    %v1490 = vadd.f32 0.0, %v1489
    %1491 = vmatprep.mubr.f32.mxu0 0.0
    %1492 = vmatmul.mubr.f32.gmra.mrb[0].mxu0 %v359
    %v1493 = vpop.f32.mrb[0].mxu0
    %v1494 = vadd.f32 0.0, %v1493
    %v1495 = vpop.f32.mrb[0].mxu0
    %v1496 = vadd.f32 0.0, %v1495
    %1497 = vmatprep.mubr.f32.mxu0 0.0
    %1498 = vmatmul.mubr.f32.gmra.mrb[0].mxu0 %v362
    %v1499 = vpop.f32.mrb[0].mxu0
    %v1500 = vadd.f32 0.0, %v1499
    %v1501 = vpop.f32.mrb[0].mxu0
    %v1502 = vadd.f32 0.0, %v1501
    %1503 = vmatprep.mubr.f32.mxu0 0.0
    %1504 = vmatmul.mubr.f32.gmra.mrb[0].mxu0 %v365
    %v1505 = vpop.f32.mrb[0].mxu0
    %v1506 = vadd.f32 0.0, %v1505
    %v1507 = vpop.f32.mrb[0].mxu0
    %v1508 = vadd.f32 0.0, %v1507
    %1509 = vmatprep.mubr.f32.mxu0 0.0
    %1510 = vmatmul.mubr.f32.gmra.mrb[0].mxu0 %v368
    %v1511 = vpop.f32.mrb[0].mxu0
    %v1512 = vadd.f32 0.0, %v1511
    %v1513 = vpop.f32.mrb[0].mxu0
    %v1514 = vadd.f32 0.0, %v1513
    %1515 = vmatprep.mubr.f32.mxu0 0.0
    %1516 = vmatmul.mubr.f32.gmra.mrb[0].mxu0 %v371
    %v1517 = vpop.f32.mrb[0].mxu0
    %v1518 = vadd.f32 0.0, %v1517
    %v1519 = vpop.f32.mrb[0].mxu0
    %v1520 = vadd.f32 0.0, %v1519
    %1521 = vmatprep.mubr.f32.mxu0 0.0
    %1522 = vmatmul.mubr.f32.gmra.mrb[0].mxu0 %v374
    %v1523 = vpop.f32.mrb[0].mxu0
    %v1524 = vadd.f32 0.0, %v1523
    %v1525 = vpop.f32.mrb[0].mxu0
    %v1526 = vadd.f32 0.0, %v1525
    %1527 = vmatprep.mubr.f32.mxu0 0.0
    %1528 = vmatmul.mubr.f32.gmra.mrb[0].mxu0 %v377
    %v1529 = vpop.f32.mrb[0].mxu0
    %v1530 = vadd.f32 0.0, %v1529
    %v1531 = vpop.f32.mrb[0].mxu0
    %v1532 = vadd.f32 0.0, %v1531
    %1533 = vmatprep.mubr.f32.mxu0 0.0
    %1534 = vmatmul.mubr.f32.gmra.mrb[0].mxu0 %v380
    %v1535 = vpop.f32.mrb[0].mxu0
    %v1536 = vadd.f32 0.0, %v1535
    %v1537 = vpop.f32.mrb[0].mxu0
    %v1538 = vadd.f32 0.0, %v1537
    %1539 = vmatprep.mubr.f32.mxu0 0.0
    %1540 = vmatmul.mubr.f32.gmra.mrb[0].mxu0 %v383
    %v1541 = vpop.f32.mrb[0].mxu0
    %v1542 = vadd.f32 0.0, %v1541
    %v1543 = vpop.f32.mrb[0].mxu0
    %v1544 = vadd.f32 0.0, %v1543
    %1545 = vmatprep.mubr.f32.mxu0 0.0
    %1546 = vmatmul.mubr.f32.gmra.mrb[0].mxu0 %v386
    %v1547 = vpop.f32.mrb[0].mxu0
    %v1548 = vadd.f32 0.0, %v1547
    %v1549 = vpop.f32.mrb[0].mxu0
    %v1550 = vadd.f32 0.0, %v1549
    %1551 = vmatprep.mubr.f32.mxu0 0.0
    %1552 = vmatmul.mubr.f32.gmra.mrb[0].mxu0 %v389
    %v1553 = vpop.f32.mrb[0].mxu0
    %v1554 = vadd.f32 0.0, %v1553
    %v1555 = vpop.f32.mrb[0].mxu0
    %v1556 = vadd.f32 0.0, %v1555
    %1557 = vmatprep.mubr.f32.mxu0 0.0
    %1558 = vmatmul.mubr.f32.gmra.mrb[0].mxu0 %v392
    %v1559 = vpop.f32.mrb[0].mxu0
    %v1560 = vadd.f32 0.0, %v1559
    %v1561 = vpop.f32.mrb[0].mxu0
    %v1562 = vadd.f32 0.0, %v1561
    %1563 = vmatprep.mubr.f32.mxu0 0.0
    %1564 = vmatmul.mubr.f32.gmra.mrb[0].mxu0 %v395
    %v1565 = vpop.f32.mrb[0].mxu0
    %v1566 = vadd.f32 0.0, %v1565
    %v1567 = vpop.f32.mrb[0].mxu0
    %v1568 = vadd.f32 0.0, %v1567
    %1569 = vmatprep.mubr.f32.mxu0 0.0
    %1570 = vmatmul.mubr.f32.gmra.mrb[0].mxu0 %v398
    %v1571 = vpop.f32.mrb[0].mxu0
    %v1572 = vadd.f32 0.0, %v1571
    %v1573 = vpop.f32.mrb[0].mxu0
    %v1574 = vadd.f32 0.0, %v1573
    %1575 = vmatprep.mubr.f32.mxu0 0.0
    %1576 = vmatmul.mubr.f32.gmra.mrb[0].mxu0 %v401
    %v1577 = vpop.f32.mrb[0].mxu0
    %v1578 = vadd.f32 0.0, %v1577
    %v1579 = vpop.f32.mrb[0].mxu0
    %v1580 = vadd.f32 0.0, %v1579
    %1581 = vmatprep.mubr.f32.mxu0 0.0
    %1582 = vmatmul.mubr.f32.gmra.mrb[0].mxu0 %v404
    %v1583 = vpop.f32.mrb[0].mxu0
    %v1584 = vadd.f32 0.0, %v1583
    %v1585 = vpop.f32.mrb[0].mxu0
    %v1586 = vadd.f32 0.0, %v1585
    %1587 = vmatprep.mubr.f32.mxu0 0.0
    %1588 = vmatmul.mubr.f32.gmra.mrb[0].mxu0 %v407
    %v1589 = vpop.f32.mrb[0].mxu0
    %v1590 = vadd.f32 0.0, %v1589
    %v1591 = vpop.f32.mrb[0].mxu0
    %v1592 = vadd.f32 0.0, %v1591
    %1593 = vmatprep.mubr.f32.mxu0 0.0
    %1594 = vmatmul.mubr.f32.gmra.mrb[0].mxu0 %v410
    %v1595 = vpop.f32.mrb[0].mxu0
    %v1596 = vadd.f32 0.0, %v1595
    %v1597 = vpop.f32.mrb[0].mxu0
    %v1598 = vadd.f32 0.0, %v1597
    %1599 = vmatprep.mubr.f32.mxu0 0.0
    %1600 = vmatmul.mubr.f32.gmra.mrb[0].mxu0 %v413
    %v1601 = vpop.f32.mrb[0].mxu0
    %v1602 = vadd.f32 0.0, %v1601
    %v1603 = vpop.f32.mrb[0].mxu0
    %v1604 = vadd.f32 0.0, %v1603
    %1605 = vmatprep.mubr.f32.mxu0 0.0
    %1606 = vmatmul.mubr.f32.gmra.mrb[0].mxu0 %v416
    %v1607 = vpop.f32.mrb[0].mxu0
    %v1608 = vadd.f32 0.0, %v1607
    %v1609 = vpop.f32.mrb[0].mxu0
    %v1610 = vadd.f32 0.0, %v1609
    %1611 = vmatprep.mubr.f32.mxu0 0.0
    %1612 = vmatmul.mubr.f32.gmra.mrb[0].mxu0 %v419
    %v1613 = vpop.f32.mrb[0].mxu0
    %v1614 = vadd.f32 0.0, %v1613
    %v1615 = vpop.f32.mrb[0].mxu0
    %v1616 = vadd.f32 0.0, %v1615
    %1617 = vmatprep.mubr.f32.mxu0 0.0
    %1618 = vmatmul.mubr.f32.gmra.mrb[0].mxu0 %v422
    %v1619 = vpop.f32.mrb[0].mxu0
    %v1620 = vadd.f32 0.0, %v1619
    %v1621 = vpop.f32.mrb[0].mxu0
    %v1622 = vadd.f32 0.0, %v1621
    %1623 = vmatprep.mubr.f32.mxu0 0.0
    %1624 = vmatmul.mubr.f32.gmra.mrb[0].mxu0 %v425
    %v1625 = vpop.f32.mrb[0].mxu0
    %v1626 = vadd.f32 0.0, %v1625
    %v1627 = vpop.f32.mrb[0].mxu0
    %v1628 = vadd.f32 0.0, %v1627
    %1629 = vmatprep.mubr.f32.mxu0 0.0
    %1630 = vmatmul.mubr.f32.gmra.mrb[0].mxu0 %v428
    %v1631 = vpop.f32.mrb[0].mxu0
    %v1632 = vadd.f32 0.0, %v1631
    %v1633 = vpop.f32.mrb[0].mxu0
    %v1634 = vadd.f32 0.0, %v1633
    %1635 = vmatprep.mubr.f32.mxu0 0.0
    %1636 = vmatmul.mubr.f32.gmra.mrb[0].mxu0 %v431
    %v1637 = vpop.f32.mrb[0].mxu0
    %v1638 = vadd.f32 0.0, %v1637
    %v1639 = vpop.f32.mrb[0].mxu0
    %v1640 = vadd.f32 0.0, %v1639
    %1641 = vmatprep.mubr.f32.mxu0 0.0
    %1642 = vmatmul.mubr.f32.gmra.mrb[0].mxu0 %v434
    %v1643 = vpop.f32.mrb[0].mxu0
    %v1644 = vadd.f32 0.0, %v1643
    %v1645 = vpop.f32.mrb[0].mxu0
    %v1646 = vadd.f32 0.0, %v1645
    %1647 = vmatprep.mubr.f32.mxu0 0.0
    %1648 = vmatmul.mubr.f32.gmra.mrb[0].mxu0 %v437
    %v1649 = vpop.f32.mrb[0].mxu0
    %v1650 = vadd.f32 0.0, %v1649
    %v1651 = vpop.f32.mrb[0].mxu0
    %v1652 = vadd.f32 0.0, %v1651
    %1653 = vmatprep.mubr.f32.mxu0 0.0
    %1654 = vmatmul.mubr.f32.gmra.mrb[0].mxu0 %v440
    %v1655 = vpop.f32.mrb[0].mxu0
    %v1656 = vadd.f32 0.0, %v1655
    %v1657 = vpop.f32.mrb[0].mxu0
    %v1658 = vadd.f32 0.0, %v1657
    %1659 = vmatprep.mubr.f32.mxu0 0.0
    %1660 = vmatmul.mubr.f32.gmra.mrb[0].mxu0 %v443
    %v1661 = vpop.f32.mrb[0].mxu0
    %v1662 = vadd.f32 0.0, %v1661
    %v1663 = vpop.f32.mrb[0].mxu0
    %v1664 = vadd.f32 0.0, %v1663
    %1665 = vmatprep.mubr.f32.mxu0 0.0
    %1666 = vmatmul.mubr.f32.gmra.mrb[0].mxu0 %v446
    %v1667 = vpop.f32.mrb[0].mxu0
    %v1668 = vadd.f32 0.0, %v1667
    %v1669 = vpop.f32.mrb[0].mxu0
    %v1670 = vadd.f32 0.0, %v1669
    %1671 = vmatprep.mubr.f32.mxu0 0.0
    %1672 = vmatmul.mubr.f32.gmra.mrb[0].mxu0 %v449
    %v1673 = vpop.f32.mrb[0].mxu0
    %v1674 = vadd.f32 0.0, %v1673
    %v1675 = vpop.f32.mrb[0].mxu0
    %v1676 = vadd.f32 0.0, %v1675
    %1677 = vmatprep.mubr.f32.mxu0 0.0
    %1678 = vmatmul.mubr.f32.gmra.mrb[0].mxu0 %v452
    %v1679 = vpop.f32.mrb[0].mxu0
    %v1680 = vadd.f32 0.0, %v1679
    %v1681 = vpop.f32.mrb[0].mxu0
    %v1682 = vadd.f32 0.0, %v1681
    %1683 = vmatprep.mubr.f32.mxu0 0.0
    %1684 = vmatmul.mubr.f32.gmra.mrb[0].mxu0 %v455
    %v1685 = vpop.f32.mrb[0].mxu0
    %v1686 = vadd.f32 0.0, %v1685
    %v1687 = vpop.f32.mrb[0].mxu0
    %v1688 = vadd.f32 0.0, %v1687
    %1689 = vmatprep.mubr.f32.mxu0 0.0
    %1690 = vmatmul.mubr.f32.gmra.mrb[0].mxu0 %v458
    %v1691 = vpop.f32.mrb[0].mxu0
    %v1692 = vadd.f32 0.0, %v1691
    %v1693 = vpop.f32.mrb[0].mxu0
    %v1694 = vadd.f32 0.0, %v1693
    %1695 = vmatprep.mubr.f32.mxu0 0.0
    %1696 = vmatmul.mubr.f32.gmra.mrb[0].mxu0 %v461
    %v1697 = vpop.f32.mrb[0].mxu0
    %v1698 = vadd.f32 0.0, %v1697
    %v1699 = vpop.f32.mrb[0].mxu0
    %v1700 = vadd.f32 0.0, %v1699
    %1701 = vmatprep.mubr.f32.mxu0 0.0
    %1702 = vmatmul.mubr.f32.gmra.mrb[0].mxu0 %v464
    %v1703 = vpop.f32.mrb[0].mxu0
    %v1704 = vadd.f32 0.0, %v1703
    %v1705 = vpop.f32.mrb[0].mxu0
    %v1706 = vadd.f32 0.0, %v1705
    %1707 = vmatprep.mubr.f32.mxu0 0.0
    %1708 = vmatmul.mubr.f32.gmra.mrb[0].mxu0 %v467
    %v1709 = vpop.f32.mrb[0].mxu0
    %v1710 = vadd.f32 0.0, %v1709
    %v1711 = vpop.f32.mrb[0].mxu0
    %v1712 = vadd.f32 0.0, %v1711
    %1713 = vmatprep.mubr.f32.mxu0 0.0
    %1714 = vmatmul.mubr.f32.gmra.mrb[0].mxu0 %v470
    %v1715 = vpop.f32.mrb[0].mxu0
    %v1716 = vadd.f32 0.0, %v1715
    %v1717 = vpop.f32.mrb[0].mxu0
    %v1718 = vadd.f32 0.0, %v1717
    %1719 = vmatprep.mubr.f32.mxu0 0.0
    %1720 = vmatmul.mubr.f32.gmra.mrb[0].mxu0 %v473
    %v1721 = vpop.f32.mrb[0].mxu0
    %v1722 = vadd.f32 0.0, %v1721
    %v1723 = vpop.f32.mrb[0].mxu0
    %v1724 = vadd.f32 0.0, %v1723
    %1725 = vmatprep.mubr.f32.mxu0 0.0
    %1726 = vmatmul.mubr.f32.gmra.mrb[0].mxu0 %v476
    %v1727 = vpop.f32.mrb[0].mxu0
    %v1728 = vadd.f32 0.0, %v1727
    %v1729 = vpop.f32.mrb[0].mxu0
    %v1730 = vadd.f32 0.0, %v1729
    %1731 = vmatprep.mubr.f32.mxu0 0.0
    %1732 = vmatmul.mubr.f32.gmra.mrb[0].mxu0 %v479
    %v1733 = vpop.f32.mrb[0].mxu0
    %v1734 = vadd.f32 0.0, %v1733
    %v1735 = vpop.f32.mrb[0].mxu0
    %v1736 = vadd.f32 0.0, %v1735
    %1737 = vmatprep.mubr.f32.mxu0 0.0
    %1738 = vmatmul.mubr.f32.gmra.mrb[0].mxu0 %v482
    %v1739 = vpop.f32.mrb[0].mxu0
    %v1740 = vadd.f32 0.0, %v1739
    %v1741 = vpop.f32.mrb[0].mxu0
    %v1742 = vadd.f32 0.0, %v1741
    %1743 = vmatprep.mubr.f32.mxu0 0.0
    %1744 = vmatmul.mubr.f32.gmra.mrb[0].mxu0 %v485
    %v1745 = vpop.f32.mrb[0].mxu0
    %v1746 = vadd.f32 0.0, %v1745
    %v1747 = vpop.f32.mrb[0].mxu0
    %v1748 = vadd.f32 0.0, %v1747
    %1749 = vmatprep.mubr.f32.mxu0 0.0
    %1750 = vmatmul.mubr.f32.gmra.mrb[0].mxu0 %v488
    %v1751 = vpop.f32.mrb[0].mxu0
    %v1752 = vadd.f32 0.0, %v1751
    %v1753 = vpop.f32.mrb[0].mxu0
    %v1754 = vadd.f32 0.0, %v1753
    %1755 = vmatprep.mubr.f32.mxu0 0.0
    %1756 = vmatmul.mubr.f32.gmra.mrb[0].mxu0 %v491
    %v1757 = vpop.f32.mrb[0].mxu0
    %v1758 = vadd.f32 0.0, %v1757
    %v1759 = vpop.f32.mrb[0].mxu0
    %v1760 = vadd.f32 0.0, %v1759
    %1761 = vmatprep.mubr.f32.mxu0 0.0
    %1762 = vmatmul.mubr.f32.gmra.mrb[0].mxu0 %v494
    %v1763 = vpop.f32.mrb[0].mxu0
    %v1764 = vadd.f32 0.0, %v1763
    %v1765 = vpop.f32.mrb[0].mxu0
    %v1766 = vadd.f32 0.0, %v1765
    %1767 = vmatprep.mubr.f32.mxu0 0.0
    %1768 = vmatmul.mubr.f32.gmra.mrb[0].mxu0 %v497
    %v1769 = vpop.f32.mrb[0].mxu0
    %v1770 = vadd.f32 0.0, %v1769
    %v1771 = vpop.f32.mrb[0].mxu0
    %v1772 = vadd.f32 0.0, %v1771
    %1773 = vdwg.mxu0
    %1774 = vmatprep.subr.mxu0 0.0
    %1775 = vmatpush1.msra.mxu0 %v194
    %1776 = vmatprep.subr.mxu0 0.0
    %1777 = vmatpush1.msra.mxu0 %v201
    %1778 = vmatprep.subr.mxu0 0.0
    %1779 = vmatpush1.msra.mxu0 %v208
    %1780 = vmatprep.subr.mxu0 0.0
    %1781 = vmatpush1.msra.mxu0 %v215
    %1782 = vmatprep.subr.mxu0 0.0
    %1783 = vmatpush1.msra.mxu0 %v222
    %1784 = vmatprep.subr.mxu0 0.0
    %1785 = vmatpush1.msra.mxu0 %v229
    %1786 = vmatprep.subr.mxu0 0.0
    %1787 = vmatpush1.msra.mxu0 %v236
    %1788 = vmatprep.subr.mxu0 0.0
    %1789 = vmatpush1.msra.mxu0 %v243
    %1790 = vmatprep.subr.mxu0 0.0
    %1791 = vmatpush1.msra.mxu0 %v250
    %1792 = vmatprep.subr.mxu0 0.0
    %1793 = vmatpush1.msra.mxu0 %v257
    %1794 = vmatprep.subr.mxu0 0.0
    %1795 = vmatpush1.msra.mxu0 0.0
    %1796 = vmatprep.subr.mxu0 0.0
    %1797 = vmatpush1.msra.mxu0 0.0
    %1798 = vmatprep.subr.mxu0 0.0
    %1799 = vmatpush1.msra.mxu0 0.0
    %1800 = vmatprep.subr.mxu0 0.0
    %1801 = vmatpush1.msra.mxu0 0.0
    %1802 = vmatprep.subr.mxu0 0.0
    %1803 = vmatpush1.msra.mxu0 0.0
    %1804 = vmatprep.subr.mxu0 0.0
    %1805 = vmatpush1.msra.mxu0 0.0
    %1806 = vmatprep.subr.mxu0 0.0
    %1807 = vmatpush1.msra.mxu0 0.0
    %1808 = vmatprep.subr.mxu0 0.0
    %1809 = vmatpush1.msra.mxu0 0.0
    %1810 = vmatprep.subr.mxu0 0.0
    %1811 = vmatpush1.msra.mxu0 0.0
    %1812 = vmatprep.subr.mxu0 0.0
    %1813 = vmatpush1.msra.mxu0 0.0
    %1814 = vmatprep.subr.mxu0 0.0
    %1815 = vmatpush1.msra.mxu0 0.0
    %1816 = vmatprep.subr.mxu0 0.0
    %1817 = vmatpush1.msra.mxu0 0.0
    %1818 = vmatprep.subr.mxu0 0.0
    %1819 = vmatpush1.msra.mxu0 0.0
    %1820 = vmatprep.subr.mxu0 0.0
    %1821 = vmatpush1.msra.mxu0 0.0
    %1822 = vmatprep.subr.mxu0 0.0
    %1823 = vmatpush1.msra.mxu0 0.0
    %1824 = vmatprep.subr.mxu0 0.0
    %1825 = vmatpush1.msra.mxu0 0.0
    %1826 = vmatprep.subr.mxu0 0.0
    %1827 = vmatpush1.msra.mxu0 0.0
    %1828 = vmatprep.subr.mxu0 0.0
    %1829 = vmatpush1.msra.mxu0 0.0
    %1830 = vmatprep.subr.mxu0 0.0
    %1831 = vmatpush1.msra.mxu0 0.0
    %1832 = vmatprep.subr.mxu0 0.0
    %1833 = vmatpush1.msra.mxu0 0.0
    %1834 = vmatprep.subr.mxu0 0.0
    %1835 = vmatpush1.msra.mxu0 0.0
    %1836 = vmatprep.subr.mxu0 0.0
    %1837 = vmatpush1.msra.mxu0 0.0
    %1838 = vmatprep.mubr.f32.mxu0 0.0
    %1839 = vmatmul.mubr.f32.gmra.mrb[0].mxu0 %v320
    %v1840 = vpop.f32.mrb[0].mxu0
    %v1841 = vadd.f32 0.0, %v1840
    %v1842 = vpop.f32.mrb[0].mxu0
    %1843 = vmatprep.mubr.f32.mxu0 0.0
    %1844 = vmatmul.mubr.f32.gmra.mrb[0].mxu0 %v323
    %v1845 = vpop.f32.mrb[0].mxu0
    %v1846 = vadd.f32 0.0, %v1845
    %v1847 = vpop.f32.mrb[0].mxu0
    %1848 = vmatprep.mubr.f32.mxu0 0.0
    %1849 = vmatmul.mubr.f32.gmra.mrb[0].mxu0 %v326
    %v1850 = vpop.f32.mrb[0].mxu0
    %v1851 = vadd.f32 0.0, %v1850
    %v1852 = vpop.f32.mrb[0].mxu0
    %1853 = vmatprep.mubr.f32.mxu0 0.0
    %1854 = vmatmul.mubr.f32.gmra.mrb[0].mxu0 %v329
    %v1855 = vpop.f32.mrb[0].mxu0
    %v1856 = vadd.f32 0.0, %v1855
    %v1857 = vpop.f32.mrb[0].mxu0
    %1858 = vmatprep.mubr.f32.mxu0 0.0
    %1859 = vmatmul.mubr.f32.gmra.mrb[0].mxu0 %v332
    %v1860 = vpop.f32.mrb[0].mxu0
    %v1861 = vadd.f32 0.0, %v1860
    %v1862 = vpop.f32.mrb[0].mxu0
    %1863 = vmatprep.mubr.f32.mxu0 0.0
    %1864 = vmatmul.mubr.f32.gmra.mrb[0].mxu0 %v335
    %v1865 = vpop.f32.mrb[0].mxu0
    %v1866 = vadd.f32 0.0, %v1865
    %v1867 = vpop.f32.mrb[0].mxu0
    %1868 = vmatprep.mubr.f32.mxu0 0.0
    %1869 = vmatmul.mubr.f32.gmra.mrb[0].mxu0 %v338
    %v1870 = vpop.f32.mrb[0].mxu0
    %v1871 = vadd.f32 0.0, %v1870
    %v1872 = vpop.f32.mrb[0].mxu0
    %1873 = vmatprep.mubr.f32.mxu0 0.0
    %1874 = vmatmul.mubr.f32.gmra.mrb[0].mxu0 %v341
    %v1875 = vpop.f32.mrb[0].mxu0
    %v1876 = vadd.f32 0.0, %v1875
    %v1877 = vpop.f32.mrb[0].mxu0
    %1878 = vmatprep.mubr.f32.mxu0 0.0
    %1879 = vmatmul.mubr.f32.gmra.mrb[0].mxu0 %v344
    %v1880 = vpop.f32.mrb[0].mxu0
    %v1881 = vadd.f32 0.0, %v1880
    %v1882 = vpop.f32.mrb[0].mxu0
    %1883 = vmatprep.mubr.f32.mxu0 0.0
    %1884 = vmatmul.mubr.f32.gmra.mrb[0].mxu0 %v347
    %v1885 = vpop.f32.mrb[0].mxu0
    %v1886 = vadd.f32 0.0, %v1885
    %v1887 = vpop.f32.mrb[0].mxu0
    %1888 = vmatprep.mubr.f32.mxu0 0.0
    %1889 = vmatmul.mubr.f32.gmra.mrb[0].mxu0 %v350
    %v1890 = vpop.f32.mrb[0].mxu0
    %v1891 = vadd.f32 0.0, %v1890
    %v1892 = vpop.f32.mrb[0].mxu0
    %1893 = vmatprep.mubr.f32.mxu0 0.0
    %1894 = vmatmul.mubr.f32.gmra.mrb[0].mxu0 %v353
    %v1895 = vpop.f32.mrb[0].mxu0
    %v1896 = vadd.f32 0.0, %v1895
    %v1897 = vpop.f32.mrb[0].mxu0
    %1898 = vmatprep.mubr.f32.mxu0 0.0
    %1899 = vmatmul.mubr.f32.gmra.mrb[0].mxu0 %v356
    %v1900 = vpop.f32.mrb[0].mxu0
    %v1901 = vadd.f32 0.0, %v1900
    %v1902 = vpop.f32.mrb[0].mxu0
    %1903 = vmatprep.mubr.f32.mxu0 0.0
    %1904 = vmatmul.mubr.f32.gmra.mrb[0].mxu0 %v359
    %v1905 = vpop.f32.mrb[0].mxu0
    %v1906 = vadd.f32 0.0, %v1905
    %v1907 = vpop.f32.mrb[0].mxu0
    %1908 = vmatprep.mubr.f32.mxu0 0.0
    %1909 = vmatmul.mubr.f32.gmra.mrb[0].mxu0 %v362
    %v1910 = vpop.f32.mrb[0].mxu0
    %v1911 = vadd.f32 0.0, %v1910
    %v1912 = vpop.f32.mrb[0].mxu0
    %1913 = vmatprep.mubr.f32.mxu0 0.0
    %1914 = vmatmul.mubr.f32.gmra.mrb[0].mxu0 %v365
    %v1915 = vpop.f32.mrb[0].mxu0
    %v1916 = vadd.f32 0.0, %v1915
    %v1917 = vpop.f32.mrb[0].mxu0
    %1918 = vmatprep.mubr.f32.mxu0 0.0
    %1919 = vmatmul.mubr.f32.gmra.mrb[0].mxu0 %v368
    %v1920 = vpop.f32.mrb[0].mxu0
    %v1921 = vadd.f32 0.0, %v1920
    %v1922 = vpop.f32.mrb[0].mxu0
    %1923 = vmatprep.mubr.f32.mxu0 0.0
    %1924 = vmatmul.mubr.f32.gmra.mrb[0].mxu0 %v371
    %v1925 = vpop.f32.mrb[0].mxu0
    %v1926 = vadd.f32 0.0, %v1925
    %v1927 = vpop.f32.mrb[0].mxu0
    %1928 = vmatprep.mubr.f32.mxu0 0.0
    %1929 = vmatmul.mubr.f32.gmra.mrb[0].mxu0 %v374
    %v1930 = vpop.f32.mrb[0].mxu0
    %v1931 = vadd.f32 0.0, %v1930
    %v1932 = vpop.f32.mrb[0].mxu0
    %1933 = vmatprep.mubr.f32.mxu0 0.0
    %1934 = vmatmul.mubr.f32.gmra.mrb[0].mxu0 %v377
    %v1935 = vpop.f32.mrb[0].mxu0
    %v1936 = vadd.f32 0.0, %v1935
    %v1937 = vpop.f32.mrb[0].mxu0
    %1938 = vmatprep.mubr.f32.mxu0 0.0
    %1939 = vmatmul.mubr.f32.gmra.mrb[0].mxu0 %v380
    %v1940 = vpop.f32.mrb[0].mxu0
    %v1941 = vadd.f32 0.0, %v1940
    %v1942 = vpop.f32.mrb[0].mxu0
    %1943 = vmatprep.mubr.f32.mxu0 0.0
    %1944 = vmatmul.mubr.f32.gmra.mrb[0].mxu0 %v383
    %v1945 = vpop.f32.mrb[0].mxu0
    %v1946 = vadd.f32 0.0, %v1945
    %v1947 = vpop.f32.mrb[0].mxu0
    %1948 = vmatprep.mubr.f32.mxu0 0.0
    %1949 = vmatmul.mubr.f32.gmra.mrb[0].mxu0 %v386
    %v1950 = vpop.f32.mrb[0].mxu0
    %v1951 = vadd.f32 0.0, %v1950
    %v1952 = vpop.f32.mrb[0].mxu0
    %1953 = vmatprep.mubr.f32.mxu0 0.0
    %1954 = vmatmul.mubr.f32.gmra.mrb[0].mxu0 %v389
    %v1955 = vpop.f32.mrb[0].mxu0
    %v1956 = vadd.f32 0.0, %v1955
    %v1957 = vpop.f32.mrb[0].mxu0
    %1958 = vmatprep.mubr.f32.mxu0 0.0
    %1959 = vmatmul.mubr.f32.gmra.mrb[0].mxu0 %v392
    %v1960 = vpop.f32.mrb[0].mxu0
    %v1961 = vadd.f32 0.0, %v1960
    %v1962 = vpop.f32.mrb[0].mxu0
    %1963 = vmatprep.mubr.f32.mxu0 0.0
    %1964 = vmatmul.mubr.f32.gmra.mrb[0].mxu0 %v395
    %v1965 = vpop.f32.mrb[0].mxu0
    %v1966 = vadd.f32 0.0, %v1965
    %v1967 = vpop.f32.mrb[0].mxu0
    %1968 = vmatprep.mubr.f32.mxu0 0.0
    %1969 = vmatmul.mubr.f32.gmra.mrb[0].mxu0 %v398
    %v1970 = vpop.f32.mrb[0].mxu0
    %v1971 = vadd.f32 0.0, %v1970
    %v1972 = vpop.f32.mrb[0].mxu0
    %1973 = vmatprep.mubr.f32.mxu0 0.0
    %1974 = vmatmul.mubr.f32.gmra.mrb[0].mxu0 %v401
    %v1975 = vpop.f32.mrb[0].mxu0
    %v1976 = vadd.f32 0.0, %v1975
    %v1977 = vpop.f32.mrb[0].mxu0
    %1978 = vmatprep.mubr.f32.mxu0 0.0
    %1979 = vmatmul.mubr.f32.gmra.mrb[0].mxu0 %v404
    %v1980 = vpop.f32.mrb[0].mxu0
    %v1981 = vadd.f32 0.0, %v1980
    %v1982 = vpop.f32.mrb[0].mxu0
    %1983 = vmatprep.mubr.f32.mxu0 0.0
    %1984 = vmatmul.mubr.f32.gmra.mrb[0].mxu0 %v407
    %v1985 = vpop.f32.mrb[0].mxu0
    %v1986 = vadd.f32 0.0, %v1985
    %v1987 = vpop.f32.mrb[0].mxu0
    %1988 = vmatprep.mubr.f32.mxu0 0.0
    %1989 = vmatmul.mubr.f32.gmra.mrb[0].mxu0 %v410
    %v1990 = vpop.f32.mrb[0].mxu0
    %v1991 = vadd.f32 0.0, %v1990
    %v1992 = vpop.f32.mrb[0].mxu0
    %1993 = vmatprep.mubr.f32.mxu0 0.0
    %1994 = vmatmul.mubr.f32.gmra.mrb[0].mxu0 %v413
    %v1995 = vpop.f32.mrb[0].mxu0
    %v1996 = vadd.f32 0.0, %v1995
    %v1997 = vpop.f32.mrb[0].mxu0
    %1998 = vmatprep.mubr.f32.mxu0 0.0
    %1999 = vmatmul.mubr.f32.gmra.mrb[0].mxu0 %v416
    %v2000 = vpop.f32.mrb[0].mxu0
    %v2001 = vadd.f32 0.0, %v2000
    %v2002 = vpop.f32.mrb[0].mxu0
    %2003 = vmatprep.mubr.f32.mxu0 0.0
    %2004 = vmatmul.mubr.f32.gmra.mrb[0].mxu0 %v419
    %v2005 = vpop.f32.mrb[0].mxu0
    %v2006 = vadd.f32 0.0, %v2005
    %v2007 = vpop.f32.mrb[0].mxu0
    %2008 = vmatprep.mubr.f32.mxu0 0.0
    %2009 = vmatmul.mubr.f32.gmra.mrb[0].mxu0 %v422
    %v2010 = vpop.f32.mrb[0].mxu0
    %v2011 = vadd.f32 0.0, %v2010
    %v2012 = vpop.f32.mrb[0].mxu0
    %2013 = vmatprep.mubr.f32.mxu0 0.0
    %2014 = vmatmul.mubr.f32.gmra.mrb[0].mxu0 %v425
    %v2015 = vpop.f32.mrb[0].mxu0
    %v2016 = vadd.f32 0.0, %v2015
    %v2017 = vpop.f32.mrb[0].mxu0
    %2018 = vmatprep.mubr.f32.mxu0 0.0
    %2019 = vmatmul.mubr.f32.gmra.mrb[0].mxu0 %v428
    %v2020 = vpop.f32.mrb[0].mxu0
    %v2021 = vadd.f32 0.0, %v2020
    %v2022 = vpop.f32.mrb[0].mxu0
    %2023 = vmatprep.mubr.f32.mxu0 0.0
    %2024 = vmatmul.mubr.f32.gmra.mrb[0].mxu0 %v431
    %v2025 = vpop.f32.mrb[0].mxu0
    %v2026 = vadd.f32 0.0, %v2025
    %v2027 = vpop.f32.mrb[0].mxu0
    %2028 = vmatprep.mubr.f32.mxu0 0.0
    %2029 = vmatmul.mubr.f32.gmra.mrb[0].mxu0 %v434
    %v2030 = vpop.f32.mrb[0].mxu0
    %v2031 = vadd.f32 0.0, %v2030
    %v2032 = vpop.f32.mrb[0].mxu0
    %2033 = vmatprep.mubr.f32.mxu0 0.0
    %2034 = vmatmul.mubr.f32.gmra.mrb[0].mxu0 %v437
    %v2035 = vpop.f32.mrb[0].mxu0
    %v2036 = vadd.f32 0.0, %v2035
    %v2037 = vpop.f32.mrb[0].mxu0
    %2038 = vmatprep.mubr.f32.mxu0 0.0
    %2039 = vmatmul.mubr.f32.gmra.mrb[0].mxu0 %v440
    %v2040 = vpop.f32.mrb[0].mxu0
    %v2041 = vadd.f32 0.0, %v2040
    %v2042 = vpop.f32.mrb[0].mxu0
    %2043 = vmatprep.mubr.f32.mxu0 0.0
    %2044 = vmatmul.mubr.f32.gmra.mrb[0].mxu0 %v443
    %v2045 = vpop.f32.mrb[0].mxu0
    %v2046 = vadd.f32 0.0, %v2045
    %v2047 = vpop.f32.mrb[0].mxu0
    %2048 = vmatprep.mubr.f32.mxu0 0.0
    %2049 = vmatmul.mubr.f32.gmra.mrb[0].mxu0 %v446
    %v2050 = vpop.f32.mrb[0].mxu0
    %v2051 = vadd.f32 0.0, %v2050
    %v2052 = vpop.f32.mrb[0].mxu0
    %2053 = vmatprep.mubr.f32.mxu0 0.0
    %2054 = vmatmul.mubr.f32.gmra.mrb[0].mxu0 %v449
    %v2055 = vpop.f32.mrb[0].mxu0
    %v2056 = vadd.f32 0.0, %v2055
    %v2057 = vpop.f32.mrb[0].mxu0
    %2058 = vmatprep.mubr.f32.mxu0 0.0
    %2059 = vmatmul.mubr.f32.gmra.mrb[0].mxu0 %v452
    %v2060 = vpop.f32.mrb[0].mxu0
    %v2061 = vadd.f32 0.0, %v2060
    %v2062 = vpop.f32.mrb[0].mxu0
    %2063 = vmatprep.mubr.f32.mxu0 0.0
    %2064 = vmatmul.mubr.f32.gmra.mrb[0].mxu0 %v455
    %v2065 = vpop.f32.mrb[0].mxu0
    %v2066 = vadd.f32 0.0, %v2065
    %v2067 = vpop.f32.mrb[0].mxu0
    %2068 = vmatprep.mubr.f32.mxu0 0.0
    %2069 = vmatmul.mubr.f32.gmra.mrb[0].mxu0 %v458
    %v2070 = vpop.f32.mrb[0].mxu0
    %v2071 = vadd.f32 0.0, %v2070
    %v2072 = vpop.f32.mrb[0].mxu0
    %2073 = vmatprep.mubr.f32.mxu0 0.0
    %2074 = vmatmul.mubr.f32.gmra.mrb[0].mxu0 %v461
    %v2075 = vpop.f32.mrb[0].mxu0
    %v2076 = vadd.f32 0.0, %v2075
    %v2077 = vpop.f32.mrb[0].mxu0
    %2078 = vmatprep.mubr.f32.mxu0 0.0
    %2079 = vmatmul.mubr.f32.gmra.mrb[0].mxu0 %v464
    %v2080 = vpop.f32.mrb[0].mxu0
    %v2081 = vadd.f32 0.0, %v2080
    %v2082 = vpop.f32.mrb[0].mxu0
    %2083 = vmatprep.mubr.f32.mxu0 0.0
    %2084 = vmatmul.mubr.f32.gmra.mrb[0].mxu0 %v467
    %v2085 = vpop.f32.mrb[0].mxu0
    %v2086 = vadd.f32 0.0, %v2085
    %v2087 = vpop.f32.mrb[0].mxu0
    %2088 = vmatprep.mubr.f32.mxu0 0.0
    %2089 = vmatmul.mubr.f32.gmra.mrb[0].mxu0 %v470
    %v2090 = vpop.f32.mrb[0].mxu0
    %v2091 = vadd.f32 0.0, %v2090
    %v2092 = vpop.f32.mrb[0].mxu0
    %2093 = vmatprep.mubr.f32.mxu0 0.0
    %2094 = vmatmul.mubr.f32.gmra.mrb[0].mxu0 %v473
    %v2095 = vpop.f32.mrb[0].mxu0
    %v2096 = vadd.f32 0.0, %v2095
    %v2097 = vpop.f32.mrb[0].mxu0
    %2098 = vmatprep.mubr.f32.mxu0 0.0
    %2099 = vmatmul.mubr.f32.gmra.mrb[0].mxu0 %v476
    %v2100 = vpop.f32.mrb[0].mxu0
    %v2101 = vadd.f32 0.0, %v2100
    %v2102 = vpop.f32.mrb[0].mxu0
    %2103 = vmatprep.mubr.f32.mxu0 0.0
    %2104 = vmatmul.mubr.f32.gmra.mrb[0].mxu0 %v479
    %v2105 = vpop.f32.mrb[0].mxu0
    %v2106 = vadd.f32 0.0, %v2105
    %v2107 = vpop.f32.mrb[0].mxu0
    %2108 = vmatprep.mubr.f32.mxu0 0.0
    %2109 = vmatmul.mubr.f32.gmra.mrb[0].mxu0 %v482
    %v2110 = vpop.f32.mrb[0].mxu0
    %v2111 = vadd.f32 0.0, %v2110
    %v2112 = vpop.f32.mrb[0].mxu0
    %2113 = vmatprep.mubr.f32.mxu0 0.0
    %2114 = vmatmul.mubr.f32.gmra.mrb[0].mxu0 %v485
    %v2115 = vpop.f32.mrb[0].mxu0
    %v2116 = vadd.f32 0.0, %v2115
    %v2117 = vpop.f32.mrb[0].mxu0
    %2118 = vmatprep.mubr.f32.mxu0 0.0
    %2119 = vmatmul.mubr.f32.gmra.mrb[0].mxu0 %v488
    %v2120 = vpop.f32.mrb[0].mxu0
    %v2121 = vadd.f32 0.0, %v2120
    %v2122 = vpop.f32.mrb[0].mxu0
    %2123 = vmatprep.mubr.f32.mxu0 0.0
    %2124 = vmatmul.mubr.f32.gmra.mrb[0].mxu0 %v491
    %v2125 = vpop.f32.mrb[0].mxu0
    %v2126 = vadd.f32 0.0, %v2125
    %v2127 = vpop.f32.mrb[0].mxu0
    %2128 = vmatprep.mubr.f32.mxu0 0.0
    %2129 = vmatmul.mubr.f32.gmra.mrb[0].mxu0 %v494
    %v2130 = vpop.f32.mrb[0].mxu0
    %v2131 = vadd.f32 0.0, %v2130
    %v2132 = vpop.f32.mrb[0].mxu0
    %2133 = vmatprep.mubr.f32.mxu0 0.0
    %2134 = vmatmul.mubr.f32.gmra.mrb[0].mxu0 %v497
    %v2135 = vpop.f32.mrb[0].mxu0
    %v2136 = vadd.f32 0.0, %v2135
    %v2137 = vpop.f32.mrb[0].mxu0
    %2138 = vdwg.mxu0
    %v2139 = vadd.f32 %v566, %v568
    %v2140 = vadd.f32 %v2139, %v991
    %v2141 = vadd.f32 %v2140, %v993
    %v2142 = vadd.f32 %v2141, %v1416
    %v2143 = vadd.f32 %v2142, %v1418
    %vm2144 = vcmask 130048
    %v2145 = vsel %vm2144, %v1841, 0.0
    %v2146 = vadd.f32 %v2143, %v2145
    %2147 = vadd.xlane.f32.xlu0 %v2146
    %v2148 = vpop.xlane.xlu0 %2147
    %v2149 = vadd.f32 %v572, %v574
    %v2150 = vadd.f32 %v2149, %v997
    %v2151 = vadd.f32 %v2150, %v999
    %v2152 = vadd.f32 %v2151, %v1422
    %v2153 = vadd.f32 %v2152, %v1424
    %v2154 = vsel %vm2144, %v1846, 0.0
    %v2155 = vadd.f32 %v2153, %v2154
    %2156 = vadd.xlane.f32.xlu0 %v2155
    %v2157 = vpop.xlane.xlu0 %2156
    %v2158 = vadd.f32 %v578, %v580
    %v2159 = vadd.f32 %v2158, %v1003
    %v2160 = vadd.f32 %v2159, %v1005
    %v2161 = vadd.f32 %v2160, %v1428
    %v2162 = vadd.f32 %v2161, %v1430
    %v2163 = vsel %vm2144, %v1851, 0.0
    %v2164 = vadd.f32 %v2162, %v2163
    %2165 = vadd.xlane.f32.xlu0 %v2164
    %v2166 = vpop.xlane.xlu0 %2165
    %v2167 = vadd.f32 %v584, %v586
    %v2168 = vadd.f32 %v2167, %v1009
    %v2169 = vadd.f32 %v2168, %v1011
    %v2170 = vadd.f32 %v2169, %v1434
    %v2171 = vadd.f32 %v2170, %v1436
    %v2172 = vsel %vm2144, %v1856, 0.0
    %v2173 = vadd.f32 %v2171, %v2172
    %2174 = vadd.xlane.f32.xlu0 %v2173
    %v2175 = vpop.xlane.xlu0 %2174
    %v2176 = vadd.f32 %v590, %v592
    %v2177 = vadd.f32 %v2176, %v1015
    %v2178 = vadd.f32 %v2177, %v1017
    %v2179 = vadd.f32 %v2178, %v1440
    %v2180 = vadd.f32 %v2179, %v1442
    %v2181 = vsel %vm2144, %v1861, 0.0
    %v2182 = vadd.f32 %v2180, %v2181
    %2183 = vadd.xlane.f32.xlu0 %v2182
    %v2184 = vpop.xlane.xlu0 %2183
    %v2185 = vadd.f32 %v596, %v598
    %v2186 = vadd.f32 %v2185, %v1021
    %v2187 = vadd.f32 %v2186, %v1023
    %v2188 = vadd.f32 %v2187, %v1446
    %v2189 = vadd.f32 %v2188, %v1448
    %v2190 = vsel %vm2144, %v1866, 0.0
    %v2191 = vadd.f32 %v2189, %v2190
    %2192 = vadd.xlane.f32.xlu0 %v2191
    %v2193 = vpop.xlane.xlu0 %2192
    %v2194 = vadd.f32 %v602, %v604
    %v2195 = vadd.f32 %v2194, %v1027
    %v2196 = vadd.f32 %v2195, %v1029
    %v2197 = vadd.f32 %v2196, %v1452
    %v2198 = vadd.f32 %v2197, %v1454
    %v2199 = vsel %vm2144, %v1871, 0.0
    %v2200 = vadd.f32 %v2198, %v2199
    %2201 = vadd.xlane.f32.xlu0 %v2200
    %v2202 = vpop.xlane.xlu0 %2201
    %v2203 = vadd.f32 %v608, %v610
    %v2204 = vadd.f32 %v2203, %v1033
    %v2205 = vadd.f32 %v2204, %v1035
    %v2206 = vadd.f32 %v2205, %v1458
    %v2207 = vadd.f32 %v2206, %v1460
    %v2208 = vsel %vm2144, %v1876, 0.0
    %v2209 = vadd.f32 %v2207, %v2208
    %2210 = vadd.xlane.f32.xlu0 %v2209
    %v2211 = vpop.xlane.xlu0 %2210
    %v2212 = vadd.f32 %v614, %v616
    %v2213 = vadd.f32 %v2212, %v1039
    %v2214 = vadd.f32 %v2213, %v1041
    %v2215 = vadd.f32 %v2214, %v1464
    %v2216 = vadd.f32 %v2215, %v1466
    %v2217 = vsel %vm2144, %v1881, 0.0
    %v2218 = vadd.f32 %v2216, %v2217
    %2219 = vadd.xlane.f32.xlu0 %v2218
    %v2220 = vpop.xlane.xlu0 %2219
    %v2221 = vadd.f32 %v620, %v622
    %v2222 = vadd.f32 %v2221, %v1045
    %v2223 = vadd.f32 %v2222, %v1047
    %v2224 = vadd.f32 %v2223, %v1470
    %v2225 = vadd.f32 %v2224, %v1472
    %v2226 = vsel %vm2144, %v1886, 0.0
    %v2227 = vadd.f32 %v2225, %v2226
    %2228 = vadd.xlane.f32.xlu0 %v2227
    %v2229 = vpop.xlane.xlu0 %2228
    %v2230 = vadd.f32 %v626, %v628
    %v2231 = vadd.f32 %v2230, %v1051
    %v2232 = vadd.f32 %v2231, %v1053
    %v2233 = vadd.f32 %v2232, %v1476
    %v2234 = vadd.f32 %v2233, %v1478
    %v2235 = vsel %vm2144, %v1891, 0.0
    %v2236 = vadd.f32 %v2234, %v2235
    %2237 = vadd.xlane.f32.xlu0 %v2236
    %v2238 = vpop.xlane.xlu0 %2237
    %v2239 = vadd.f32 %v632, %v634
    %v2240 = vadd.f32 %v2239, %v1057
    %v2241 = vadd.f32 %v2240, %v1059
    %v2242 = vadd.f32 %v2241, %v1482
    %v2243 = vadd.f32 %v2242, %v1484
    %v2244 = vsel %vm2144, %v1896, 0.0
    %v2245 = vadd.f32 %v2243, %v2244
    %2246 = vadd.xlane.f32.xlu0 %v2245
    %v2247 = vpop.xlane.xlu0 %2246
    %v2248 = vadd.f32 %v638, %v640
    %v2249 = vadd.f32 %v2248, %v1063
    %v2250 = vadd.f32 %v2249, %v1065
    %v2251 = vadd.f32 %v2250, %v1488
    %v2252 = vadd.f32 %v2251, %v1490
    %v2253 = vsel %vm2144, %v1901, 0.0
    %v2254 = vadd.f32 %v2252, %v2253
    %2255 = vadd.xlane.f32.xlu0 %v2254
    %v2256 = vpop.xlane.xlu0 %2255
    %v2257 = vadd.f32 %v644, %v646
    %v2258 = vadd.f32 %v2257, %v1069
    %v2259 = vadd.f32 %v2258, %v1071
    %v2260 = vadd.f32 %v2259, %v1494
    %v2261 = vadd.f32 %v2260, %v1496
    %v2262 = vsel %vm2144, %v1906, 0.0
    %v2263 = vadd.f32 %v2261, %v2262
    %2264 = vadd.xlane.f32.xlu0 %v2263
    %v2265 = vpop.xlane.xlu0 %2264
    %v2266 = vadd.f32 %v650, %v652
    %v2267 = vadd.f32 %v2266, %v1075
    %v2268 = vadd.f32 %v2267, %v1077
    %v2269 = vadd.f32 %v2268, %v1500
    %v2270 = vadd.f32 %v2269, %v1502
    %v2271 = vsel %vm2144, %v1911, 0.0
    %v2272 = vadd.f32 %v2270, %v2271
    %2273 = vadd.xlane.f32.xlu0 %v2272
    %v2274 = vpop.xlane.xlu0 %2273
    %v2275 = vadd.f32 %v656, %v658
    %v2276 = vadd.f32 %v2275, %v1081
    %v2277 = vadd.f32 %v2276, %v1083
    %v2278 = vadd.f32 %v2277, %v1506
    %v2279 = vadd.f32 %v2278, %v1508
    %v2280 = vsel %vm2144, %v1916, 0.0
    %v2281 = vadd.f32 %v2279, %v2280
    %2282 = vadd.xlane.f32.xlu0 %v2281
    %v2283 = vpop.xlane.xlu0 %2282
    %v2284 = vadd.f32 %v662, %v664
    %v2285 = vadd.f32 %v2284, %v1087
    %v2286 = vadd.f32 %v2285, %v1089
    %v2287 = vadd.f32 %v2286, %v1512
    %v2288 = vadd.f32 %v2287, %v1514
    %v2289 = vsel %vm2144, %v1921, 0.0
    %v2290 = vadd.f32 %v2288, %v2289
    %2291 = vadd.xlane.f32.xlu0 %v2290
    %v2292 = vpop.xlane.xlu0 %2291
    %v2293 = vadd.f32 %v668, %v670
    %v2294 = vadd.f32 %v2293, %v1093
    %v2295 = vadd.f32 %v2294, %v1095
    %v2296 = vadd.f32 %v2295, %v1518
    %v2297 = vadd.f32 %v2296, %v1520
    %v2298 = vsel %vm2144, %v1926, 0.0
    %v2299 = vadd.f32 %v2297, %v2298
    %2300 = vadd.xlane.f32.xlu0 %v2299
    %v2301 = vpop.xlane.xlu0 %2300
    %v2302 = vadd.f32 %v674, %v676
    %v2303 = vadd.f32 %v2302, %v1099
    %v2304 = vadd.f32 %v2303, %v1101
    %v2305 = vadd.f32 %v2304, %v1524
    %v2306 = vadd.f32 %v2305, %v1526
    %v2307 = vsel %vm2144, %v1931, 0.0
    %v2308 = vadd.f32 %v2306, %v2307
    %2309 = vadd.xlane.f32.xlu0 %v2308
    %v2310 = vpop.xlane.xlu0 %2309
    %v2311 = vadd.f32 %v680, %v682
    %v2312 = vadd.f32 %v2311, %v1105
    %v2313 = vadd.f32 %v2312, %v1107
    %v2314 = vadd.f32 %v2313, %v1530
    %v2315 = vadd.f32 %v2314, %v1532
    %v2316 = vsel %vm2144, %v1936, 0.0
    %v2317 = vadd.f32 %v2315, %v2316
    %2318 = vadd.xlane.f32.xlu0 %v2317
    %v2319 = vpop.xlane.xlu0 %2318
    %v2320 = vadd.f32 %v686, %v688
    %v2321 = vadd.f32 %v2320, %v1111
    %v2322 = vadd.f32 %v2321, %v1113
    %v2323 = vadd.f32 %v2322, %v1536
    %v2324 = vadd.f32 %v2323, %v1538
    %v2325 = vsel %vm2144, %v1941, 0.0
    %v2326 = vadd.f32 %v2324, %v2325
    %2327 = vadd.xlane.f32.xlu0 %v2326
    %v2328 = vpop.xlane.xlu0 %2327
    %v2329 = vadd.f32 %v692, %v694
    %v2330 = vadd.f32 %v2329, %v1117
    %v2331 = vadd.f32 %v2330, %v1119
    %v2332 = vadd.f32 %v2331, %v1542
    %v2333 = vadd.f32 %v2332, %v1544
    %v2334 = vsel %vm2144, %v1946, 0.0
    %v2335 = vadd.f32 %v2333, %v2334
    %2336 = vadd.xlane.f32.xlu0 %v2335
    %v2337 = vpop.xlane.xlu0 %2336
    %v2338 = vadd.f32 %v698, %v700
    %v2339 = vadd.f32 %v2338, %v1123
    %v2340 = vadd.f32 %v2339, %v1125
    %v2341 = vadd.f32 %v2340, %v1548
    %v2342 = vadd.f32 %v2341, %v1550
    %v2343 = vsel %vm2144, %v1951, 0.0
    %v2344 = vadd.f32 %v2342, %v2343
    %2345 = vadd.xlane.f32.xlu0 %v2344
    %v2346 = vpop.xlane.xlu0 %2345
    %v2347 = vadd.f32 %v704, %v706
    %v2348 = vadd.f32 %v2347, %v1129
    %v2349 = vadd.f32 %v2348, %v1131
    %v2350 = vadd.f32 %v2349, %v1554
    %v2351 = vadd.f32 %v2350, %v1556
    %v2352 = vsel %vm2144, %v1956, 0.0
    %v2353 = vadd.f32 %v2351, %v2352
    %2354 = vadd.xlane.f32.xlu0 %v2353
    %v2355 = vpop.xlane.xlu0 %2354
    %v2356 = vadd.f32 %v710, %v712
    %v2357 = vadd.f32 %v2356, %v1135
    %v2358 = vadd.f32 %v2357, %v1137
    %v2359 = vadd.f32 %v2358, %v1560
    %v2360 = vadd.f32 %v2359, %v1562
    %v2361 = vsel %vm2144, %v1961, 0.0
    %v2362 = vadd.f32 %v2360, %v2361
    %2363 = vadd.xlane.f32.xlu0 %v2362
    %v2364 = vpop.xlane.xlu0 %2363
    %v2365 = vadd.f32 %v716, %v718
    %v2366 = vadd.f32 %v2365, %v1141
    %v2367 = vadd.f32 %v2366, %v1143
    %v2368 = vadd.f32 %v2367, %v1566
    %v2369 = vadd.f32 %v2368, %v1568
    %v2370 = vsel %vm2144, %v1966, 0.0
    %v2371 = vadd.f32 %v2369, %v2370
    %2372 = vadd.xlane.f32.xlu0 %v2371
    %v2373 = vpop.xlane.xlu0 %2372
    %v2374 = vadd.f32 %v722, %v724
    %v2375 = vadd.f32 %v2374, %v1147
    %v2376 = vadd.f32 %v2375, %v1149
    %v2377 = vadd.f32 %v2376, %v1572
    %v2378 = vadd.f32 %v2377, %v1574
    %v2379 = vsel %vm2144, %v1971, 0.0
    %v2380 = vadd.f32 %v2378, %v2379
    %2381 = vadd.xlane.f32.xlu0 %v2380
    %v2382 = vpop.xlane.xlu0 %2381
    %v2383 = vadd.f32 %v728, %v730
    %v2384 = vadd.f32 %v2383, %v1153
    %v2385 = vadd.f32 %v2384, %v1155
    %v2386 = vadd.f32 %v2385, %v1578
    %v2387 = vadd.f32 %v2386, %v1580
    %v2388 = vsel %vm2144, %v1976, 0.0
    %v2389 = vadd.f32 %v2387, %v2388
    %2390 = vadd.xlane.f32.xlu0 %v2389
    %v2391 = vpop.xlane.xlu0 %2390
    %v2392 = vadd.f32 %v734, %v736
    %v2393 = vadd.f32 %v2392, %v1159
    %v2394 = vadd.f32 %v2393, %v1161
    %v2395 = vadd.f32 %v2394, %v1584
    %v2396 = vadd.f32 %v2395, %v1586
    %v2397 = vsel %vm2144, %v1981, 0.0
    %v2398 = vadd.f32 %v2396, %v2397
    %2399 = vadd.xlane.f32.xlu0 %v2398
    %v2400 = vpop.xlane.xlu0 %2399
    %v2401 = vadd.f32 %v740, %v742
    %v2402 = vadd.f32 %v2401, %v1165
    %v2403 = vadd.f32 %v2402, %v1167
    %v2404 = vadd.f32 %v2403, %v1590
    %v2405 = vadd.f32 %v2404, %v1592
    %v2406 = vsel %vm2144, %v1986, 0.0
    %v2407 = vadd.f32 %v2405, %v2406
    %2408 = vadd.xlane.f32.xlu0 %v2407
    %v2409 = vpop.xlane.xlu0 %2408
    %v2410 = vadd.f32 %v746, %v748
    %v2411 = vadd.f32 %v2410, %v1171
    %v2412 = vadd.f32 %v2411, %v1173
    %v2413 = vadd.f32 %v2412, %v1596
    %v2414 = vadd.f32 %v2413, %v1598
    %v2415 = vsel %vm2144, %v1991, 0.0
    %v2416 = vadd.f32 %v2414, %v2415
    %2417 = vadd.xlane.f32.xlu0 %v2416
    %v2418 = vpop.xlane.xlu0 %2417
    %v2419 = vadd.f32 %v752, %v754
    %v2420 = vadd.f32 %v2419, %v1177
    %v2421 = vadd.f32 %v2420, %v1179
    %v2422 = vadd.f32 %v2421, %v1602
    %v2423 = vadd.f32 %v2422, %v1604
    %v2424 = vsel %vm2144, %v1996, 0.0
    %v2425 = vadd.f32 %v2423, %v2424
    %2426 = vadd.xlane.f32.xlu0 %v2425
    %v2427 = vpop.xlane.xlu0 %2426
    %v2428 = vadd.f32 %v758, %v760
    %v2429 = vadd.f32 %v2428, %v1183
    %v2430 = vadd.f32 %v2429, %v1185
    %v2431 = vadd.f32 %v2430, %v1608
    %v2432 = vadd.f32 %v2431, %v1610
    %v2433 = vsel %vm2144, %v2001, 0.0
    %v2434 = vadd.f32 %v2432, %v2433
    %2435 = vadd.xlane.f32.xlu0 %v2434
    %v2436 = vpop.xlane.xlu0 %2435
    %v2437 = vadd.f32 %v764, %v766
    %v2438 = vadd.f32 %v2437, %v1189
    %v2439 = vadd.f32 %v2438, %v1191
    %v2440 = vadd.f32 %v2439, %v1614
    %v2441 = vadd.f32 %v2440, %v1616
    %v2442 = vsel %vm2144, %v2006, 0.0
    %v2443 = vadd.f32 %v2441, %v2442
    %2444 = vadd.xlane.f32.xlu0 %v2443
    %v2445 = vpop.xlane.xlu0 %2444
    %v2446 = vadd.f32 %v770, %v772
    %v2447 = vadd.f32 %v2446, %v1195
    %v2448 = vadd.f32 %v2447, %v1197
    %v2449 = vadd.f32 %v2448, %v1620
    %v2450 = vadd.f32 %v2449, %v1622
    %v2451 = vsel %vm2144, %v2011, 0.0
    %v2452 = vadd.f32 %v2450, %v2451
    %2453 = vadd.xlane.f32.xlu0 %v2452
    %v2454 = vpop.xlane.xlu0 %2453
    %v2455 = vadd.f32 %v776, %v778
    %v2456 = vadd.f32 %v2455, %v1201
    %v2457 = vadd.f32 %v2456, %v1203
    %v2458 = vadd.f32 %v2457, %v1626
    %v2459 = vadd.f32 %v2458, %v1628
    %v2460 = vsel %vm2144, %v2016, 0.0
    %v2461 = vadd.f32 %v2459, %v2460
    %2462 = vadd.xlane.f32.xlu0 %v2461
    %v2463 = vpop.xlane.xlu0 %2462
    %v2464 = vadd.f32 %v782, %v784
    %v2465 = vadd.f32 %v2464, %v1207
    %v2466 = vadd.f32 %v2465, %v1209
    %v2467 = vadd.f32 %v2466, %v1632
    %v2468 = vadd.f32 %v2467, %v1634
    %v2469 = vsel %vm2144, %v2021, 0.0
    %v2470 = vadd.f32 %v2468, %v2469
    %2471 = vadd.xlane.f32.xlu0 %v2470
    %v2472 = vpop.xlane.xlu0 %2471
    %v2473 = vadd.f32 %v788, %v790
    %v2474 = vadd.f32 %v2473, %v1213
    %v2475 = vadd.f32 %v2474, %v1215
    %v2476 = vadd.f32 %v2475, %v1638
    %v2477 = vadd.f32 %v2476, %v1640
    %v2478 = vsel %vm2144, %v2026, 0.0
    %v2479 = vadd.f32 %v2477, %v2478
    %2480 = vadd.xlane.f32.xlu0 %v2479
    %v2481 = vpop.xlane.xlu0 %2480
    %v2482 = vadd.f32 %v794, %v796
    %v2483 = vadd.f32 %v2482, %v1219
    %v2484 = vadd.f32 %v2483, %v1221
    %v2485 = vadd.f32 %v2484, %v1644
    %v2486 = vadd.f32 %v2485, %v1646
    %v2487 = vsel %vm2144, %v2031, 0.0
    %v2488 = vadd.f32 %v2486, %v2487
    %2489 = vadd.xlane.f32.xlu0 %v2488
    %v2490 = vpop.xlane.xlu0 %2489
    %v2491 = vadd.f32 %v800, %v802
    %v2492 = vadd.f32 %v2491, %v1225
    %v2493 = vadd.f32 %v2492, %v1227
    %v2494 = vadd.f32 %v2493, %v1650
    %v2495 = vadd.f32 %v2494, %v1652
    %v2496 = vsel %vm2144, %v2036, 0.0
    %v2497 = vadd.f32 %v2495, %v2496
    %2498 = vadd.xlane.f32.xlu0 %v2497
    %v2499 = vpop.xlane.xlu0 %2498
    %v2500 = vadd.f32 %v806, %v808
    %v2501 = vadd.f32 %v2500, %v1231
    %v2502 = vadd.f32 %v2501, %v1233
    %v2503 = vadd.f32 %v2502, %v1656
    %v2504 = vadd.f32 %v2503, %v1658
    %v2505 = vsel %vm2144, %v2041, 0.0
    %v2506 = vadd.f32 %v2504, %v2505
    %2507 = vadd.xlane.f32.xlu0 %v2506
    %v2508 = vpop.xlane.xlu0 %2507
    %v2509 = vadd.f32 %v812, %v814
    %v2510 = vadd.f32 %v2509, %v1237
    %v2511 = vadd.f32 %v2510, %v1239
    %v2512 = vadd.f32 %v2511, %v1662
    %v2513 = vadd.f32 %v2512, %v1664
    %v2514 = vsel %vm2144, %v2046, 0.0
    %v2515 = vadd.f32 %v2513, %v2514
    %2516 = vadd.xlane.f32.xlu0 %v2515
    %v2517 = vpop.xlane.xlu0 %2516
    %v2518 = vadd.f32 %v818, %v820
    %v2519 = vadd.f32 %v2518, %v1243
    %v2520 = vadd.f32 %v2519, %v1245
    %v2521 = vadd.f32 %v2520, %v1668
    %v2522 = vadd.f32 %v2521, %v1670
    %v2523 = vsel %vm2144, %v2051, 0.0
    %v2524 = vadd.f32 %v2522, %v2523
    %2525 = vadd.xlane.f32.xlu0 %v2524
    %v2526 = vpop.xlane.xlu0 %2525
    %v2527 = vadd.f32 %v824, %v826
    %v2528 = vadd.f32 %v2527, %v1249
    %v2529 = vadd.f32 %v2528, %v1251
    %v2530 = vadd.f32 %v2529, %v1674
    %v2531 = vadd.f32 %v2530, %v1676
    %v2532 = vsel %vm2144, %v2056, 0.0
    %v2533 = vadd.f32 %v2531, %v2532
    %2534 = vadd.xlane.f32.xlu0 %v2533
    %v2535 = vpop.xlane.xlu0 %2534
    %v2536 = vadd.f32 %v830, %v832
    %v2537 = vadd.f32 %v2536, %v1255
    %v2538 = vadd.f32 %v2537, %v1257
    %v2539 = vadd.f32 %v2538, %v1680
    %v2540 = vadd.f32 %v2539, %v1682
    %v2541 = vsel %vm2144, %v2061, 0.0
    %v2542 = vadd.f32 %v2540, %v2541
    %2543 = vadd.xlane.f32.xlu0 %v2542
    %v2544 = vpop.xlane.xlu0 %2543
    %v2545 = vadd.f32 %v836, %v838
    %v2546 = vadd.f32 %v2545, %v1261
    %v2547 = vadd.f32 %v2546, %v1263
    %v2548 = vadd.f32 %v2547, %v1686
    %v2549 = vadd.f32 %v2548, %v1688
    %v2550 = vsel %vm2144, %v2066, 0.0
    %v2551 = vadd.f32 %v2549, %v2550
    %2552 = vadd.xlane.f32.xlu0 %v2551
    %v2553 = vpop.xlane.xlu0 %2552
    %v2554 = vadd.f32 %v842, %v844
    %v2555 = vadd.f32 %v2554, %v1267
    %v2556 = vadd.f32 %v2555, %v1269
    %v2557 = vadd.f32 %v2556, %v1692
    %v2558 = vadd.f32 %v2557, %v1694
    %v2559 = vsel %vm2144, %v2071, 0.0
    %v2560 = vadd.f32 %v2558, %v2559
    %2561 = vadd.xlane.f32.xlu0 %v2560
    %v2562 = vpop.xlane.xlu0 %2561
    %v2563 = vadd.f32 %v848, %v850
    %v2564 = vadd.f32 %v2563, %v1273
    %v2565 = vadd.f32 %v2564, %v1275
    %v2566 = vadd.f32 %v2565, %v1698
    %v2567 = vadd.f32 %v2566, %v1700
    %v2568 = vsel %vm2144, %v2076, 0.0
    %v2569 = vadd.f32 %v2567, %v2568
    %2570 = vadd.xlane.f32.xlu0 %v2569
    %v2571 = vpop.xlane.xlu0 %2570
    %v2572 = vadd.f32 %v854, %v856
    %v2573 = vadd.f32 %v2572, %v1279
    %v2574 = vadd.f32 %v2573, %v1281
    %v2575 = vadd.f32 %v2574, %v1704
    %v2576 = vadd.f32 %v2575, %v1706
    %v2577 = vsel %vm2144, %v2081, 0.0
    %v2578 = vadd.f32 %v2576, %v2577
    %2579 = vadd.xlane.f32.xlu0 %v2578
    %v2580 = vpop.xlane.xlu0 %2579
    %v2581 = vadd.f32 %v860, %v862
    %v2582 = vadd.f32 %v2581, %v1285
    %v2583 = vadd.f32 %v2582, %v1287
    %v2584 = vadd.f32 %v2583, %v1710
    %v2585 = vadd.f32 %v2584, %v1712
    %v2586 = vsel %vm2144, %v2086, 0.0
    %v2587 = vadd.f32 %v2585, %v2586
    %2588 = vadd.xlane.f32.xlu0 %v2587
    %v2589 = vpop.xlane.xlu0 %2588
    %v2590 = vadd.f32 %v866, %v868
    %v2591 = vadd.f32 %v2590, %v1291
    %v2592 = vadd.f32 %v2591, %v1293
    %v2593 = vadd.f32 %v2592, %v1716
    %v2594 = vadd.f32 %v2593, %v1718
    %v2595 = vsel %vm2144, %v2091, 0.0
    %v2596 = vadd.f32 %v2594, %v2595
    %2597 = vadd.xlane.f32.xlu0 %v2596
    %v2598 = vpop.xlane.xlu0 %2597
    %v2599 = vadd.f32 %v872, %v874
    %v2600 = vadd.f32 %v2599, %v1297
    %v2601 = vadd.f32 %v2600, %v1299
    %v2602 = vadd.f32 %v2601, %v1722
    %v2603 = vadd.f32 %v2602, %v1724
    %v2604 = vsel %vm2144, %v2096, 0.0
    %v2605 = vadd.f32 %v2603, %v2604
    %2606 = vadd.xlane.f32.xlu0 %v2605
    %v2607 = vpop.xlane.xlu0 %2606
    %v2608 = vadd.f32 %v878, %v880
    %v2609 = vadd.f32 %v2608, %v1303
    %v2610 = vadd.f32 %v2609, %v1305
    %v2611 = vadd.f32 %v2610, %v1728
    %v2612 = vadd.f32 %v2611, %v1730
    %v2613 = vsel %vm2144, %v2101, 0.0
    %v2614 = vadd.f32 %v2612, %v2613
    %2615 = vadd.xlane.f32.xlu0 %v2614
    %v2616 = vpop.xlane.xlu0 %2615
    %v2617 = vadd.f32 %v884, %v886
    %v2618 = vadd.f32 %v2617, %v1309
    %v2619 = vadd.f32 %v2618, %v1311
    %v2620 = vadd.f32 %v2619, %v1734
    %v2621 = vadd.f32 %v2620, %v1736
    %v2622 = vsel %vm2144, %v2106, 0.0
    %v2623 = vadd.f32 %v2621, %v2622
    %2624 = vadd.xlane.f32.xlu0 %v2623
    %v2625 = vpop.xlane.xlu0 %2624
    %v2626 = vadd.f32 %v890, %v892
    %v2627 = vadd.f32 %v2626, %v1315
    %v2628 = vadd.f32 %v2627, %v1317
    %v2629 = vadd.f32 %v2628, %v1740
    %v2630 = vadd.f32 %v2629, %v1742
    %v2631 = vsel %vm2144, %v2111, 0.0
    %v2632 = vadd.f32 %v2630, %v2631
    %2633 = vadd.xlane.f32.xlu0 %v2632
    %v2634 = vpop.xlane.xlu0 %2633
    %v2635 = vadd.f32 %v896, %v898
    %v2636 = vadd.f32 %v2635, %v1321
    %v2637 = vadd.f32 %v2636, %v1323
    %v2638 = vadd.f32 %v2637, %v1746
    %v2639 = vadd.f32 %v2638, %v1748
    %v2640 = vsel %vm2144, %v2116, 0.0
    %v2641 = vadd.f32 %v2639, %v2640
    %2642 = vadd.xlane.f32.xlu0 %v2641
    %v2643 = vpop.xlane.xlu0 %2642
    %v2644 = vadd.f32 %v902, %v904
    %v2645 = vadd.f32 %v2644, %v1327
    %v2646 = vadd.f32 %v2645, %v1329
    %v2647 = vadd.f32 %v2646, %v1752
    %v2648 = vadd.f32 %v2647, %v1754
    %v2649 = vsel %vm2144, %v2121, 0.0
    %v2650 = vadd.f32 %v2648, %v2649
    %2651 = vadd.xlane.f32.xlu0 %v2650
    %v2652 = vpop.xlane.xlu0 %2651
    %v2653 = vadd.f32 %v908, %v910
    %v2654 = vadd.f32 %v2653, %v1333
    %v2655 = vadd.f32 %v2654, %v1335
    %v2656 = vadd.f32 %v2655, %v1758
    %v2657 = vadd.f32 %v2656, %v1760
    %v2658 = vsel %vm2144, %v2126, 0.0
    %v2659 = vadd.f32 %v2657, %v2658
    %2660 = vadd.xlane.f32.xlu0 %v2659
    %v2661 = vpop.xlane.xlu0 %2660
    %v2662 = vadd.f32 %v914, %v916
    %v2663 = vadd.f32 %v2662, %v1339
    %v2664 = vadd.f32 %v2663, %v1341
    %v2665 = vadd.f32 %v2664, %v1764
    %v2666 = vadd.f32 %v2665, %v1766
    %v2667 = vsel %vm2144, %v2131, 0.0
    %v2668 = vadd.f32 %v2666, %v2667
    %2669 = vadd.xlane.f32.xlu0 %v2668
    %v2670 = vpop.xlane.xlu0 %2669
    %v2671 = vadd.f32 %v920, %v922
    %v2672 = vadd.f32 %v2671, %v1345
    %v2673 = vadd.f32 %v2672, %v1347
    %v2674 = vadd.f32 %v2673, %v1770
    %v2675 = vadd.f32 %v2674, %v1772
    %v2676 = vsel %vm2144, %v2136, 0.0
    %v2677 = vadd.f32 %v2675, %v2676
    %2678 = vadd.xlane.f32.xlu0 %v2677
    %v2679 = vpop.xlane.xlu0 %2678
    %v2680 = vmul.f32 %v2148, 0.0012755102
    %v2681 = vmul.f32 %v2157, 0.0012755102
    %v2682 = vmul.f32 %v2166, 0.0012755102
    %v2683 = vmul.f32 %v2175, 0.0012755102
    %v2684 = vmul.f32 %v2184, 0.0012755102
    %v2685 = vmul.f32 %v2193, 0.0012755102
    %v2686 = vmul.f32 %v2202, 0.0012755102
    %v2687 = vmul.f32 %v2211, 0.0012755102
    %v2688 = vmul.f32 %v2220, 0.0012755102
    %v2689 = vmul.f32 %v2229, 0.0012755102
    %v2690 = vmul.f32 %v2238, 0.0012755102
    %v2691 = vmul.f32 %v2247, 0.0012755102
    %v2692 = vmul.f32 %v2256, 0.0012755102
    %v2693 = vmul.f32 %v2265, 0.0012755102
    %v2694 = vmul.f32 %v2274, 0.0012755102
    %v2695 = vmul.f32 %v2283, 0.0012755102
    %v2696 = vmul.f32 %v2292, 0.0012755102
    %v2697 = vmul.f32 %v2301, 0.0012755102
    %v2698 = vmul.f32 %v2310, 0.0012755102
    %v2699 = vmul.f32 %v2319, 0.0012755102
    %v2700 = vmul.f32 %v2328, 0.0012755102
    %v2701 = vmul.f32 %v2337, 0.0012755102
    %v2702 = vmul.f32 %v2346, 0.0012755102
    %v2703 = vmul.f32 %v2355, 0.0012755102
    %v2704 = vmul.f32 %v2364, 0.0012755102
    %v2705 = vmul.f32 %v2373, 0.0012755102
    %v2706 = vmul.f32 %v2382, 0.0012755102
    %v2707 = vmul.f32 %v2391, 0.0012755102
    %v2708 = vmul.f32 %v2400, 0.0012755102
    %v2709 = vmul.f32 %v2409, 0.0012755102
    %v2710 = vmul.f32 %v2418, 0.0012755102
    %v2711 = vmul.f32 %v2427, 0.0012755102
    %v2712 = vmul.f32 %v2436, 0.0012755102
    %v2713 = vmul.f32 %v2445, 0.0012755102
    %v2714 = vmul.f32 %v2454, 0.0012755102
    %v2715 = vmul.f32 %v2463, 0.0012755102
    %v2716 = vmul.f32 %v2472, 0.0012755102
    %v2717 = vmul.f32 %v2481, 0.0012755102
    %v2718 = vmul.f32 %v2490, 0.0012755102
    %v2719 = vmul.f32 %v2499, 0.0012755102
    %v2720 = vmul.f32 %v2508, 0.0012755102
    %v2721 = vmul.f32 %v2517, 0.0012755102
    %v2722 = vmul.f32 %v2526, 0.0012755102
    %v2723 = vmul.f32 %v2535, 0.0012755102
    %v2724 = vmul.f32 %v2544, 0.0012755102
    %v2725 = vmul.f32 %v2553, 0.0012755102
    %v2726 = vmul.f32 %v2562, 0.0012755102
    %v2727 = vmul.f32 %v2571, 0.0012755102
    %v2728 = vmul.f32 %v2580, 0.0012755102
    %v2729 = vmul.f32 %v2589, 0.0012755102
    %v2730 = vmul.f32 %v2598, 0.0012755102
    %v2731 = vmul.f32 %v2607, 0.0012755102
    %v2732 = vmul.f32 %v2616, 0.0012755102
    %v2733 = vmul.f32 %v2625, 0.0012755102
    %v2734 = vmul.f32 %v2634, 0.0012755102
    %v2735 = vmul.f32 %v2643, 0.0012755102
    %v2736 = vmul.f32 %v2652, 0.0012755102
    %v2737 = vmul.f32 %v2661, 0.0012755102
    %v2738 = vmul.f32 %v2670, 0.0012755102
    %v2739 = vmul.f32 %v2679, 0.0012755102
    %v2740 = vmul.f32 %v566, %v566
    %v2741 = vmul.f32 %v568, %v568
    %v2742 = vmul.f32 %v991, %v991
    %v2743 = vmul.f32 %v993, %v993
    %v2744 = vmul.f32 %v1416, %v1416
    %v2745 = vmul.f32 %v1418, %v1418
    %v2746 = vmul.f32 %v1841, %v1841
    %v2747 = vmul.f32 %v572, %v572
    %v2748 = vmul.f32 %v574, %v574
    %v2749 = vmul.f32 %v997, %v997
    %v2750 = vmul.f32 %v999, %v999
    %v2751 = vmul.f32 %v1422, %v1422
    %v2752 = vmul.f32 %v1424, %v1424
    %v2753 = vmul.f32 %v1846, %v1846
    %v2754 = vmul.f32 %v578, %v578
    %v2755 = vmul.f32 %v580, %v580
    %v2756 = vmul.f32 %v1003, %v1003
    %v2757 = vmul.f32 %v1005, %v1005
    %v2758 = vmul.f32 %v1428, %v1428
    %v2759 = vmul.f32 %v1430, %v1430
    %v2760 = vmul.f32 %v1851, %v1851
    %v2761 = vmul.f32 %v584, %v584
    %v2762 = vmul.f32 %v586, %v586
    %v2763 = vmul.f32 %v1009, %v1009
    %v2764 = vmul.f32 %v1011, %v1011
    %v2765 = vmul.f32 %v1434, %v1434
    %v2766 = vmul.f32 %v1436, %v1436
    %v2767 = vmul.f32 %v1856, %v1856
    %v2768 = vmul.f32 %v590, %v590
    %v2769 = vmul.f32 %v592, %v592
    %v2770 = vmul.f32 %v1015, %v1015
    %v2771 = vmul.f32 %v1017, %v1017
    %v2772 = vmul.f32 %v1440, %v1440
    %v2773 = vmul.f32 %v1442, %v1442
    %v2774 = vmul.f32 %v1861, %v1861
    %v2775 = vmul.f32 %v596, %v596
    %v2776 = vmul.f32 %v598, %v598
    %v2777 = vmul.f32 %v1021, %v1021
    %v2778 = vmul.f32 %v1023, %v1023
    %v2779 = vmul.f32 %v1446, %v1446
    %v2780 = vmul.f32 %v1448, %v1448
    %v2781 = vmul.f32 %v1866, %v1866
    %v2782 = vmul.f32 %v602, %v602
    %v2783 = vmul.f32 %v604, %v604
    %v2784 = vmul.f32 %v1027, %v1027
    %v2785 = vmul.f32 %v1029, %v1029
    %v2786 = vmul.f32 %v1452, %v1452
    %v2787 = vmul.f32 %v1454, %v1454
    %v2788 = vmul.f32 %v1871, %v1871
    %v2789 = vmul.f32 %v608, %v608
    %v2790 = vmul.f32 %v610, %v610
    %v2791 = vmul.f32 %v1033, %v1033
    %v2792 = vmul.f32 %v1035, %v1035
    %v2793 = vmul.f32 %v1458, %v1458
    %v2794 = vmul.f32 %v1460, %v1460
    %v2795 = vmul.f32 %v1876, %v1876
    %v2796 = vmul.f32 %v614, %v614
    %v2797 = vmul.f32 %v616, %v616
    %v2798 = vmul.f32 %v1039, %v1039
    %v2799 = vmul.f32 %v1041, %v1041
    %v2800 = vmul.f32 %v1464, %v1464
    %v2801 = vmul.f32 %v1466, %v1466
    %v2802 = vmul.f32 %v1881, %v1881
    %v2803 = vmul.f32 %v620, %v620
    %v2804 = vmul.f32 %v622, %v622
    %v2805 = vmul.f32 %v1045, %v1045
    %v2806 = vmul.f32 %v1047, %v1047
    %v2807 = vmul.f32 %v1470, %v1470
    %v2808 = vmul.f32 %v1472, %v1472
    %v2809 = vmul.f32 %v1886, %v1886
    %v2810 = vmul.f32 %v626, %v626
    %v2811 = vmul.f32 %v628, %v628
    %v2812 = vmul.f32 %v1051, %v1051
    %v2813 = vmul.f32 %v1053, %v1053
    %v2814 = vmul.f32 %v1476, %v1476
    %v2815 = vmul.f32 %v1478, %v1478
    %v2816 = vmul.f32 %v1891, %v1891
    %v2817 = vmul.f32 %v632, %v632
    %v2818 = vmul.f32 %v634, %v634
    %v2819 = vmul.f32 %v1057, %v1057
    %v2820 = vmul.f32 %v1059, %v1059
    %v2821 = vmul.f32 %v1482, %v1482
    %v2822 = vmul.f32 %v1484, %v1484
    %v2823 = vmul.f32 %v1896, %v1896
    %v2824 = vmul.f32 %v638, %v638
    %v2825 = vmul.f32 %v640, %v640
    %v2826 = vmul.f32 %v1063, %v1063
    %v2827 = vmul.f32 %v1065, %v1065
    %v2828 = vmul.f32 %v1488, %v1488
    %v2829 = vmul.f32 %v1490, %v1490
    %v2830 = vmul.f32 %v1901, %v1901
    %v2831 = vmul.f32 %v644, %v644
    %v2832 = vmul.f32 %v646, %v646
    %v2833 = vmul.f32 %v1069, %v1069
    %v2834 = vmul.f32 %v1071, %v1071
    %v2835 = vmul.f32 %v1494, %v1494
    %v2836 = vmul.f32 %v1496, %v1496
    %v2837 = vmul.f32 %v1906, %v1906
    %v2838 = vmul.f32 %v650, %v650
    %v2839 = vmul.f32 %v652, %v652
    %v2840 = vmul.f32 %v1075, %v1075
    %v2841 = vmul.f32 %v1077, %v1077
    %v2842 = vmul.f32 %v1500, %v1500
    %v2843 = vmul.f32 %v1502, %v1502
    %v2844 = vmul.f32 %v1911, %v1911
    %v2845 = vmul.f32 %v656, %v656
    %v2846 = vmul.f32 %v658, %v658
    %v2847 = vmul.f32 %v1081, %v1081
    %v2848 = vmul.f32 %v1083, %v1083
    %v2849 = vmul.f32 %v1506, %v1506
    %v2850 = vmul.f32 %v1508, %v1508
    %v2851 = vmul.f32 %v1916, %v1916
    %v2852 = vmul.f32 %v662, %v662
    %v2853 = vmul.f32 %v664, %v664
    %v2854 = vmul.f32 %v1087, %v1087
    %v2855 = vmul.f32 %v1089, %v1089
    %v2856 = vmul.f32 %v1512, %v1512
    %v2857 = vmul.f32 %v1514, %v1514
    %v2858 = vmul.f32 %v1921, %v1921
    %v2859 = vmul.f32 %v668, %v668
    %v2860 = vmul.f32 %v670, %v670
    %v2861 = vmul.f32 %v1093, %v1093
    %v2862 = vmul.f32 %v1095, %v1095
    %v2863 = vmul.f32 %v1518, %v1518
    %v2864 = vmul.f32 %v1520, %v1520
    %v2865 = vmul.f32 %v1926, %v1926
    %v2866 = vmul.f32 %v674, %v674
    %v2867 = vmul.f32 %v676, %v676
    %v2868 = vmul.f32 %v1099, %v1099
    %v2869 = vmul.f32 %v1101, %v1101
    %v2870 = vmul.f32 %v1524, %v1524
    %v2871 = vmul.f32 %v1526, %v1526
    %v2872 = vmul.f32 %v1931, %v1931
    %v2873 = vmul.f32 %v680, %v680
    %v2874 = vmul.f32 %v682, %v682
    %v2875 = vmul.f32 %v1105, %v1105
    %v2876 = vmul.f32 %v1107, %v1107
    %v2877 = vmul.f32 %v1530, %v1530
    %v2878 = vmul.f32 %v1532, %v1532
    %v2879 = vmul.f32 %v1936, %v1936
    %v2880 = vmul.f32 %v686, %v686
    %v2881 = vmul.f32 %v688, %v688
    %v2882 = vmul.f32 %v1111, %v1111
    %v2883 = vmul.f32 %v1113, %v1113
    %v2884 = vmul.f32 %v1536, %v1536
    %v2885 = vmul.f32 %v1538, %v1538
    %v2886 = vmul.f32 %v1941, %v1941
    %v2887 = vmul.f32 %v692, %v692
    %v2888 = vmul.f32 %v694, %v694
    %v2889 = vmul.f32 %v1117, %v1117
    %v2890 = vmul.f32 %v1119, %v1119
    %v2891 = vmul.f32 %v1542, %v1542
    %v2892 = vmul.f32 %v1544, %v1544
    %v2893 = vmul.f32 %v1946, %v1946
    %v2894 = vmul.f32 %v698, %v698
    %v2895 = vmul.f32 %v700, %v700
    %v2896 = vmul.f32 %v1123, %v1123
    %v2897 = vmul.f32 %v1125, %v1125
    %v2898 = vmul.f32 %v1548, %v1548
    %v2899 = vmul.f32 %v1550, %v1550
    %v2900 = vmul.f32 %v1951, %v1951
    %v2901 = vmul.f32 %v704, %v704
    %v2902 = vmul.f32 %v706, %v706
    %v2903 = vmul.f32 %v1129, %v1129
    %v2904 = vmul.f32 %v1131, %v1131
    %v2905 = vmul.f32 %v1554, %v1554
    %v2906 = vmul.f32 %v1556, %v1556
    %v2907 = vmul.f32 %v1956, %v1956
    %v2908 = vmul.f32 %v710, %v710
    %v2909 = vmul.f32 %v712, %v712
    %v2910 = vmul.f32 %v1135, %v1135
    %v2911 = vmul.f32 %v1137, %v1137
    %v2912 = vmul.f32 %v1560, %v1560
    %v2913 = vmul.f32 %v1562, %v1562
    %v2914 = vmul.f32 %v1961, %v1961
    %v2915 = vmul.f32 %v716, %v716
    %v2916 = vmul.f32 %v718, %v718
    %v2917 = vmul.f32 %v1141, %v1141
    %v2918 = vmul.f32 %v1143, %v1143
    %v2919 = vmul.f32 %v1566, %v1566
    %v2920 = vmul.f32 %v1568, %v1568
    %v2921 = vmul.f32 %v1966, %v1966
    %v2922 = vmul.f32 %v722, %v722
    %v2923 = vmul.f32 %v724, %v724
    %v2924 = vmul.f32 %v1147, %v1147
    %v2925 = vmul.f32 %v1149, %v1149
    %v2926 = vmul.f32 %v1572, %v1572
    %v2927 = vmul.f32 %v1574, %v1574
    %v2928 = vmul.f32 %v1971, %v1971
    %v2929 = vmul.f32 %v728, %v728
    %v2930 = vmul.f32 %v730, %v730
    %v2931 = vmul.f32 %v1153, %v1153
    %v2932 = vmul.f32 %v1155, %v1155
    %v2933 = vmul.f32 %v1578, %v1578
    %v2934 = vmul.f32 %v1580, %v1580
    %v2935 = vmul.f32 %v1976, %v1976
    %v2936 = vmul.f32 %v734, %v734
    %v2937 = vmul.f32 %v736, %v736
    %v2938 = vmul.f32 %v1159, %v1159
    %v2939 = vmul.f32 %v1161, %v1161
    %v2940 = vmul.f32 %v1584, %v1584
    %v2941 = vmul.f32 %v1586, %v1586
    %v2942 = vmul.f32 %v1981, %v1981
    %v2943 = vmul.f32 %v740, %v740
    %v2944 = vmul.f32 %v742, %v742
    %v2945 = vmul.f32 %v1165, %v1165
    %v2946 = vmul.f32 %v1167, %v1167
    %v2947 = vmul.f32 %v1590, %v1590
    %v2948 = vmul.f32 %v1592, %v1592
    %v2949 = vmul.f32 %v1986, %v1986
    %v2950 = vmul.f32 %v746, %v746
    %v2951 = vmul.f32 %v748, %v748
    %v2952 = vmul.f32 %v1171, %v1171
    %v2953 = vmul.f32 %v1173, %v1173
    %v2954 = vmul.f32 %v1596, %v1596
    %v2955 = vmul.f32 %v1598, %v1598
    %v2956 = vmul.f32 %v1991, %v1991
    %v2957 = vmul.f32 %v752, %v752
    %v2958 = vmul.f32 %v754, %v754
    %v2959 = vmul.f32 %v1177, %v1177
    %v2960 = vmul.f32 %v1179, %v1179
    %v2961 = vmul.f32 %v1602, %v1602
    %v2962 = vmul.f32 %v1604, %v1604
    %v2963 = vmul.f32 %v1996, %v1996
    %v2964 = vmul.f32 %v758, %v758
    %v2965 = vmul.f32 %v760, %v760
    %v2966 = vmul.f32 %v1183, %v1183
    %v2967 = vmul.f32 %v1185, %v1185
    %v2968 = vmul.f32 %v1608, %v1608
    %v2969 = vmul.f32 %v1610, %v1610
    %v2970 = vmul.f32 %v2001, %v2001
    %v2971 = vmul.f32 %v764, %v764
    %v2972 = vmul.f32 %v766, %v766
    %v2973 = vmul.f32 %v1189, %v1189
    %v2974 = vmul.f32 %v1191, %v1191
    %v2975 = vmul.f32 %v1614, %v1614
    %v2976 = vmul.f32 %v1616, %v1616
    %v2977 = vmul.f32 %v2006, %v2006
    %v2978 = vmul.f32 %v770, %v770
    %v2979 = vmul.f32 %v772, %v772
    %v2980 = vmul.f32 %v1195, %v1195
    %v2981 = vmul.f32 %v1197, %v1197
    %v2982 = vmul.f32 %v1620, %v1620
    %v2983 = vmul.f32 %v1622, %v1622
    %v2984 = vmul.f32 %v2011, %v2011
    %v2985 = vmul.f32 %v776, %v776
    %v2986 = vmul.f32 %v778, %v778
    %v2987 = vmul.f32 %v1201, %v1201
    %v2988 = vmul.f32 %v1203, %v1203
    %v2989 = vmul.f32 %v1626, %v1626
    %v2990 = vmul.f32 %v1628, %v1628
    %v2991 = vmul.f32 %v2016, %v2016
    %v2992 = vmul.f32 %v782, %v782
    %v2993 = vmul.f32 %v784, %v784
    %v2994 = vmul.f32 %v1207, %v1207
    %v2995 = vmul.f32 %v1209, %v1209
    %v2996 = vmul.f32 %v1632, %v1632
    %v2997 = vmul.f32 %v1634, %v1634
    %v2998 = vmul.f32 %v2021, %v2021
    %v2999 = vmul.f32 %v788, %v788
    %v3000 = vmul.f32 %v790, %v790
    %v3001 = vmul.f32 %v1213, %v1213
    %v3002 = vmul.f32 %v1215, %v1215
    %v3003 = vmul.f32 %v1638, %v1638
    %v3004 = vmul.f32 %v1640, %v1640
    %v3005 = vmul.f32 %v2026, %v2026
    %v3006 = vmul.f32 %v794, %v794
    %v3007 = vmul.f32 %v796, %v796
    %v3008 = vmul.f32 %v1219, %v1219
    %v3009 = vmul.f32 %v1221, %v1221
    %v3010 = vmul.f32 %v1644, %v1644
    %v3011 = vmul.f32 %v1646, %v1646
    %v3012 = vmul.f32 %v2031, %v2031
    %v3013 = vmul.f32 %v800, %v800
    %v3014 = vmul.f32 %v802, %v802
    %v3015 = vmul.f32 %v1225, %v1225
    %v3016 = vmul.f32 %v1227, %v1227
    %v3017 = vmul.f32 %v1650, %v1650
    %v3018 = vmul.f32 %v1652, %v1652
    %v3019 = vmul.f32 %v2036, %v2036
    %v3020 = vmul.f32 %v806, %v806
    %v3021 = vmul.f32 %v808, %v808
    %v3022 = vmul.f32 %v1231, %v1231
    %v3023 = vmul.f32 %v1233, %v1233
    %v3024 = vmul.f32 %v1656, %v1656
    %v3025 = vmul.f32 %v1658, %v1658
    %v3026 = vmul.f32 %v2041, %v2041
    %v3027 = vmul.f32 %v812, %v812
    %v3028 = vmul.f32 %v814, %v814
    %v3029 = vmul.f32 %v1237, %v1237
    %v3030 = vmul.f32 %v1239, %v1239
    %v3031 = vmul.f32 %v1662, %v1662
    %v3032 = vmul.f32 %v1664, %v1664
    %v3033 = vmul.f32 %v2046, %v2046
    %v3034 = vmul.f32 %v818, %v818
    %v3035 = vmul.f32 %v820, %v820
    %v3036 = vmul.f32 %v1243, %v1243
    %v3037 = vmul.f32 %v1245, %v1245
    %v3038 = vmul.f32 %v1668, %v1668
    %v3039 = vmul.f32 %v1670, %v1670
    %v3040 = vmul.f32 %v2051, %v2051
    %v3041 = vmul.f32 %v824, %v824
    %v3042 = vmul.f32 %v826, %v826
    %v3043 = vmul.f32 %v1249, %v1249
    %v3044 = vmul.f32 %v1251, %v1251
    %v3045 = vmul.f32 %v1674, %v1674
    %v3046 = vmul.f32 %v1676, %v1676
    %v3047 = vmul.f32 %v2056, %v2056
    %v3048 = vmul.f32 %v830, %v830
    %v3049 = vmul.f32 %v832, %v832
    %v3050 = vmul.f32 %v1255, %v1255
    %v3051 = vmul.f32 %v1257, %v1257
    %v3052 = vmul.f32 %v1680, %v1680
    %v3053 = vmul.f32 %v1682, %v1682
    %v3054 = vmul.f32 %v2061, %v2061
    %v3055 = vmul.f32 %v836, %v836
    %v3056 = vmul.f32 %v838, %v838
    %v3057 = vmul.f32 %v1261, %v1261
    %v3058 = vmul.f32 %v1263, %v1263
    %v3059 = vmul.f32 %v1686, %v1686
    %v3060 = vmul.f32 %v1688, %v1688
    %v3061 = vmul.f32 %v2066, %v2066
    %v3062 = vmul.f32 %v842, %v842
    %v3063 = vmul.f32 %v844, %v844
    %v3064 = vmul.f32 %v1267, %v1267
    %v3065 = vmul.f32 %v1269, %v1269
    %v3066 = vmul.f32 %v1692, %v1692
    %v3067 = vmul.f32 %v1694, %v1694
    %v3068 = vmul.f32 %v2071, %v2071
    %v3069 = vmul.f32 %v848, %v848
    %v3070 = vmul.f32 %v850, %v850
    %v3071 = vmul.f32 %v1273, %v1273
    %v3072 = vmul.f32 %v1275, %v1275
    %v3073 = vmul.f32 %v1698, %v1698
    %v3074 = vmul.f32 %v1700, %v1700
    %v3075 = vmul.f32 %v2076, %v2076
    %v3076 = vmul.f32 %v854, %v854
    %v3077 = vmul.f32 %v856, %v856
    %v3078 = vmul.f32 %v1279, %v1279
    %v3079 = vmul.f32 %v1281, %v1281
    %v3080 = vmul.f32 %v1704, %v1704
    %v3081 = vmul.f32 %v1706, %v1706
    %v3082 = vmul.f32 %v2081, %v2081
    %v3083 = vmul.f32 %v860, %v860
    %v3084 = vmul.f32 %v862, %v862
    %v3085 = vmul.f32 %v1285, %v1285
    %v3086 = vmul.f32 %v1287, %v1287
    %v3087 = vmul.f32 %v1710, %v1710
    %v3088 = vmul.f32 %v1712, %v1712
    %v3089 = vmul.f32 %v2086, %v2086
    %v3090 = vmul.f32 %v866, %v866
    %v3091 = vmul.f32 %v868, %v868
    %v3092 = vmul.f32 %v1291, %v1291
    %v3093 = vmul.f32 %v1293, %v1293
    %v3094 = vmul.f32 %v1716, %v1716
    %v3095 = vmul.f32 %v1718, %v1718
    %v3096 = vmul.f32 %v2091, %v2091
    %v3097 = vmul.f32 %v872, %v872
    %v3098 = vmul.f32 %v874, %v874
    %v3099 = vmul.f32 %v1297, %v1297
    %v3100 = vmul.f32 %v1299, %v1299
    %v3101 = vmul.f32 %v1722, %v1722
    %v3102 = vmul.f32 %v1724, %v1724
    %v3103 = vmul.f32 %v2096, %v2096
    %v3104 = vmul.f32 %v878, %v878
    %v3105 = vmul.f32 %v880, %v880
    %v3106 = vmul.f32 %v1303, %v1303
    %v3107 = vmul.f32 %v1305, %v1305
    %v3108 = vmul.f32 %v1728, %v1728
    %v3109 = vmul.f32 %v1730, %v1730
    %v3110 = vmul.f32 %v2101, %v2101
    %v3111 = vmul.f32 %v884, %v884
    %v3112 = vmul.f32 %v886, %v886
    %v3113 = vmul.f32 %v1309, %v1309
    %v3114 = vmul.f32 %v1311, %v1311
    %v3115 = vmul.f32 %v1734, %v1734
    %v3116 = vmul.f32 %v1736, %v1736
    %v3117 = vmul.f32 %v2106, %v2106
    %v3118 = vmul.f32 %v890, %v890
    %v3119 = vmul.f32 %v892, %v892
    %v3120 = vmul.f32 %v1315, %v1315
    %v3121 = vmul.f32 %v1317, %v1317
    %v3122 = vmul.f32 %v1740, %v1740
    %v3123 = vmul.f32 %v1742, %v1742
    %v3124 = vmul.f32 %v2111, %v2111
    %v3125 = vmul.f32 %v896, %v896
    %v3126 = vmul.f32 %v898, %v898
    %v3127 = vmul.f32 %v1321, %v1321
    %v3128 = vmul.f32 %v1323, %v1323
    %v3129 = vmul.f32 %v1746, %v1746
    %v3130 = vmul.f32 %v1748, %v1748
    %v3131 = vmul.f32 %v2116, %v2116
    %v3132 = vmul.f32 %v902, %v902
    %v3133 = vmul.f32 %v904, %v904
    %v3134 = vmul.f32 %v1327, %v1327
    %v3135 = vmul.f32 %v1329, %v1329
    %v3136 = vmul.f32 %v1752, %v1752
    %v3137 = vmul.f32 %v1754, %v1754
    %v3138 = vmul.f32 %v2121, %v2121
    %v3139 = vmul.f32 %v908, %v908
    %v3140 = vmul.f32 %v910, %v910
    %v3141 = vmul.f32 %v1333, %v1333
    %v3142 = vmul.f32 %v1335, %v1335
    %v3143 = vmul.f32 %v1758, %v1758
    %v3144 = vmul.f32 %v1760, %v1760
    %v3145 = vmul.f32 %v2126, %v2126
    %v3146 = vmul.f32 %v914, %v914
    %v3147 = vmul.f32 %v916, %v916
    %v3148 = vmul.f32 %v1339, %v1339
    %v3149 = vmul.f32 %v1341, %v1341
    %v3150 = vmul.f32 %v1764, %v1764
    %v3151 = vmul.f32 %v1766, %v1766
    %v3152 = vmul.f32 %v2131, %v2131
    %v3153 = vmul.f32 %v920, %v920
    %v3154 = vmul.f32 %v922, %v922
    %v3155 = vmul.f32 %v1345, %v1345
    %v3156 = vmul.f32 %v1347, %v1347
    %v3157 = vmul.f32 %v1770, %v1770
    %v3158 = vmul.f32 %v1772, %v1772
    %v3159 = vmul.f32 %v2136, %v2136
    %v3160 = vadd.f32 %v2740, %v2741
    %v3161 = vadd.f32 %v3160, %v2742
    %v3162 = vadd.f32 %v3161, %v2743
    %v3163 = vadd.f32 %v3162, %v2744
    %v3164 = vadd.f32 %v3163, %v2745
    %v3165 = vsel %vm2144, %v2746, 0.0
    %v3166 = vadd.f32 %v3164, %v3165
    %3167 = vadd.xlane.f32.xlu0 %v3166
    %v3168 = vpop.xlane.xlu0 %3167
    %v3169 = vadd.f32 %v2747, %v2748
    %v3170 = vadd.f32 %v3169, %v2749
    %v3171 = vadd.f32 %v3170, %v2750
    %v3172 = vadd.f32 %v3171, %v2751
    %v3173 = vadd.f32 %v3172, %v2752
    %v3174 = vsel %vm2144, %v2753, 0.0
    %v3175 = vadd.f32 %v3173, %v3174
    %3176 = vadd.xlane.f32.xlu0 %v3175
    %v3177 = vpop.xlane.xlu0 %3176
    %v3178 = vadd.f32 %v2754, %v2755
    %v3179 = vadd.f32 %v3178, %v2756
    %v3180 = vadd.f32 %v3179, %v2757
    %v3181 = vadd.f32 %v3180, %v2758
    %v3182 = vadd.f32 %v3181, %v2759
    %v3183 = vsel %vm2144, %v2760, 0.0
    %v3184 = vadd.f32 %v3182, %v3183
    %3185 = vadd.xlane.f32.xlu0 %v3184
    %v3186 = vpop.xlane.xlu0 %3185
    %v3187 = vadd.f32 %v2761, %v2762
    %v3188 = vadd.f32 %v3187, %v2763
    %v3189 = vadd.f32 %v3188, %v2764
    %v3190 = vadd.f32 %v3189, %v2765
    %v3191 = vadd.f32 %v3190, %v2766
    %v3192 = vsel %vm2144, %v2767, 0.0
    %v3193 = vadd.f32 %v3191, %v3192
    %3194 = vadd.xlane.f32.xlu0 %v3193
    %v3195 = vpop.xlane.xlu0 %3194
    %v3196 = vadd.f32 %v2768, %v2769
    %v3197 = vadd.f32 %v3196, %v2770
    %v3198 = vadd.f32 %v3197, %v2771
    %v3199 = vadd.f32 %v3198, %v2772
    %v3200 = vadd.f32 %v3199, %v2773
    %v3201 = vsel %vm2144, %v2774, 0.0
    %v3202 = vadd.f32 %v3200, %v3201
    %3203 = vadd.xlane.f32.xlu0 %v3202
    %v3204 = vpop.xlane.xlu0 %3203
    %v3205 = vadd.f32 %v2775, %v2776
    %v3206 = vadd.f32 %v3205, %v2777
    %v3207 = vadd.f32 %v3206, %v2778
    %v3208 = vadd.f32 %v3207, %v2779
    %v3209 = vadd.f32 %v3208, %v2780
    %v3210 = vsel %vm2144, %v2781, 0.0
    %v3211 = vadd.f32 %v3209, %v3210
    %3212 = vadd.xlane.f32.xlu0 %v3211
    %v3213 = vpop.xlane.xlu0 %3212
    %v3214 = vadd.f32 %v2782, %v2783
    %v3215 = vadd.f32 %v3214, %v2784
    %v3216 = vadd.f32 %v3215, %v2785
    %v3217 = vadd.f32 %v3216, %v2786
    %v3218 = vadd.f32 %v3217, %v2787
    %v3219 = vsel %vm2144, %v2788, 0.0
    %v3220 = vadd.f32 %v3218, %v3219
    %3221 = vadd.xlane.f32.xlu0 %v3220
    %v3222 = vpop.xlane.xlu0 %3221
    %v3223 = vadd.f32 %v2789, %v2790
    %v3224 = vadd.f32 %v3223, %v2791
    %v3225 = vadd.f32 %v3224, %v2792
    %v3226 = vadd.f32 %v3225, %v2793
    %v3227 = vadd.f32 %v3226, %v2794
    %v3228 = vsel %vm2144, %v2795, 0.0
    %v3229 = vadd.f32 %v3227, %v3228
    %3230 = vadd.xlane.f32.xlu0 %v3229
    %v3231 = vpop.xlane.xlu0 %3230
    %v3232 = vadd.f32 %v2796, %v2797
    %v3233 = vadd.f32 %v3232, %v2798
    %v3234 = vadd.f32 %v3233, %v2799
    %v3235 = vadd.f32 %v3234, %v2800
    %v3236 = vadd.f32 %v3235, %v2801
    %v3237 = vsel %vm2144, %v2802, 0.0
    %v3238 = vadd.f32 %v3236, %v3237
    %3239 = vadd.xlane.f32.xlu0 %v3238
    %v3240 = vpop.xlane.xlu0 %3239
    %v3241 = vadd.f32 %v2803, %v2804
    %v3242 = vadd.f32 %v3241, %v2805
    %v3243 = vadd.f32 %v3242, %v2806
    %v3244 = vadd.f32 %v3243, %v2807
    %v3245 = vadd.f32 %v3244, %v2808
    %v3246 = vsel %vm2144, %v2809, 0.0
    %v3247 = vadd.f32 %v3245, %v3246
    %3248 = vadd.xlane.f32.xlu0 %v3247
    %v3249 = vpop.xlane.xlu0 %3248
    %v3250 = vadd.f32 %v2810, %v2811
    %v3251 = vadd.f32 %v3250, %v2812
    %v3252 = vadd.f32 %v3251, %v2813
    %v3253 = vadd.f32 %v3252, %v2814
    %v3254 = vadd.f32 %v3253, %v2815
    %v3255 = vsel %vm2144, %v2816, 0.0
    %v3256 = vadd.f32 %v3254, %v3255
    %3257 = vadd.xlane.f32.xlu0 %v3256
    %v3258 = vpop.xlane.xlu0 %3257
    %v3259 = vadd.f32 %v2817, %v2818
    %v3260 = vadd.f32 %v3259, %v2819
    %v3261 = vadd.f32 %v3260, %v2820
    %v3262 = vadd.f32 %v3261, %v2821
    %v3263 = vadd.f32 %v3262, %v2822
    %v3264 = vsel %vm2144, %v2823, 0.0
    %v3265 = vadd.f32 %v3263, %v3264
    %3266 = vadd.xlane.f32.xlu0 %v3265
    %v3267 = vpop.xlane.xlu0 %3266
    %v3268 = vadd.f32 %v2824, %v2825
    %v3269 = vadd.f32 %v3268, %v2826
    %v3270 = vadd.f32 %v3269, %v2827
    %v3271 = vadd.f32 %v3270, %v2828
    %v3272 = vadd.f32 %v3271, %v2829
    %v3273 = vsel %vm2144, %v2830, 0.0
    %v3274 = vadd.f32 %v3272, %v3273
    %3275 = vadd.xlane.f32.xlu0 %v3274
    %v3276 = vpop.xlane.xlu0 %3275
    %v3277 = vadd.f32 %v2831, %v2832
    %v3278 = vadd.f32 %v3277, %v2833
    %v3279 = vadd.f32 %v3278, %v2834
    %v3280 = vadd.f32 %v3279, %v2835
    %v3281 = vadd.f32 %v3280, %v2836
    %v3282 = vsel %vm2144, %v2837, 0.0
    %v3283 = vadd.f32 %v3281, %v3282
    %3284 = vadd.xlane.f32.xlu0 %v3283
    %v3285 = vpop.xlane.xlu0 %3284
    %v3286 = vadd.f32 %v2838, %v2839
    %v3287 = vadd.f32 %v3286, %v2840
    %v3288 = vadd.f32 %v3287, %v2841
    %v3289 = vadd.f32 %v3288, %v2842
    %v3290 = vadd.f32 %v3289, %v2843
    %v3291 = vsel %vm2144, %v2844, 0.0
    %v3292 = vadd.f32 %v3290, %v3291
    %3293 = vadd.xlane.f32.xlu0 %v3292
    %v3294 = vpop.xlane.xlu0 %3293
    %v3295 = vadd.f32 %v2845, %v2846
    %v3296 = vadd.f32 %v3295, %v2847
    %v3297 = vadd.f32 %v3296, %v2848
    %v3298 = vadd.f32 %v3297, %v2849
    %v3299 = vadd.f32 %v3298, %v2850
    %v3300 = vsel %vm2144, %v2851, 0.0
    %v3301 = vadd.f32 %v3299, %v3300
    %3302 = vadd.xlane.f32.xlu0 %v3301
    %v3303 = vpop.xlane.xlu0 %3302
    %v3304 = vadd.f32 %v2852, %v2853
    %v3305 = vadd.f32 %v3304, %v2854
    %v3306 = vadd.f32 %v3305, %v2855
    %v3307 = vadd.f32 %v3306, %v2856
    %v3308 = vadd.f32 %v3307, %v2857
    %v3309 = vsel %vm2144, %v2858, 0.0
    %v3310 = vadd.f32 %v3308, %v3309
    %3311 = vadd.xlane.f32.xlu0 %v3310
    %v3312 = vpop.xlane.xlu0 %3311
    %v3313 = vadd.f32 %v2859, %v2860
    %v3314 = vadd.f32 %v3313, %v2861
    %v3315 = vadd.f32 %v3314, %v2862
    %v3316 = vadd.f32 %v3315, %v2863
    %v3317 = vadd.f32 %v3316, %v2864
    %v3318 = vsel %vm2144, %v2865, 0.0
    %v3319 = vadd.f32 %v3317, %v3318
    %3320 = vadd.xlane.f32.xlu0 %v3319
    %v3321 = vpop.xlane.xlu0 %3320
    %v3322 = vadd.f32 %v2866, %v2867
    %v3323 = vadd.f32 %v3322, %v2868
    %v3324 = vadd.f32 %v3323, %v2869
    %v3325 = vadd.f32 %v3324, %v2870
    %v3326 = vadd.f32 %v3325, %v2871
    %v3327 = vsel %vm2144, %v2872, 0.0
    %v3328 = vadd.f32 %v3326, %v3327
    %3329 = vadd.xlane.f32.xlu0 %v3328
    %v3330 = vpop.xlane.xlu0 %3329
    %v3331 = vadd.f32 %v2873, %v2874
    %v3332 = vadd.f32 %v3331, %v2875
    %v3333 = vadd.f32 %v3332, %v2876
    %v3334 = vadd.f32 %v3333, %v2877
    %v3335 = vadd.f32 %v3334, %v2878
    %v3336 = vsel %vm2144, %v2879, 0.0
    %v3337 = vadd.f32 %v3335, %v3336
    %3338 = vadd.xlane.f32.xlu0 %v3337
    %v3339 = vpop.xlane.xlu0 %3338
    %v3340 = vadd.f32 %v2880, %v2881
    %v3341 = vadd.f32 %v3340, %v2882
    %v3342 = vadd.f32 %v3341, %v2883
    %v3343 = vadd.f32 %v3342, %v2884
    %v3344 = vadd.f32 %v3343, %v2885
    %v3345 = vsel %vm2144, %v2886, 0.0
    %v3346 = vadd.f32 %v3344, %v3345
    %3347 = vadd.xlane.f32.xlu0 %v3346
    %v3348 = vpop.xlane.xlu0 %3347
    %v3349 = vadd.f32 %v2887, %v2888
    %v3350 = vadd.f32 %v3349, %v2889
    %v3351 = vadd.f32 %v3350, %v2890
    %v3352 = vadd.f32 %v3351, %v2891
    %v3353 = vadd.f32 %v3352, %v2892
    %v3354 = vsel %vm2144, %v2893, 0.0
    %v3355 = vadd.f32 %v3353, %v3354
    %3356 = vadd.xlane.f32.xlu0 %v3355
    %v3357 = vpop.xlane.xlu0 %3356
    %v3358 = vadd.f32 %v2894, %v2895
    %v3359 = vadd.f32 %v3358, %v2896
    %v3360 = vadd.f32 %v3359, %v2897
    %v3361 = vadd.f32 %v3360, %v2898
    %v3362 = vadd.f32 %v3361, %v2899
    %v3363 = vsel %vm2144, %v2900, 0.0
    %v3364 = vadd.f32 %v3362, %v3363
    %3365 = vadd.xlane.f32.xlu0 %v3364
    %v3366 = vpop.xlane.xlu0 %3365
    %v3367 = vadd.f32 %v2901, %v2902
    %v3368 = vadd.f32 %v3367, %v2903
    %v3369 = vadd.f32 %v3368, %v2904
    %v3370 = vadd.f32 %v3369, %v2905
    %v3371 = vadd.f32 %v3370, %v2906
    %v3372 = vsel %vm2144, %v2907, 0.0
    %v3373 = vadd.f32 %v3371, %v3372
    %3374 = vadd.xlane.f32.xlu0 %v3373
    %v3375 = vpop.xlane.xlu0 %3374
    %v3376 = vadd.f32 %v2908, %v2909
    %v3377 = vadd.f32 %v3376, %v2910
    %v3378 = vadd.f32 %v3377, %v2911
    %v3379 = vadd.f32 %v3378, %v2912
    %v3380 = vadd.f32 %v3379, %v2913
    %v3381 = vsel %vm2144, %v2914, 0.0
    %v3382 = vadd.f32 %v3380, %v3381
    %3383 = vadd.xlane.f32.xlu0 %v3382
    %v3384 = vpop.xlane.xlu0 %3383
    %v3385 = vadd.f32 %v2915, %v2916
    %v3386 = vadd.f32 %v3385, %v2917
    %v3387 = vadd.f32 %v3386, %v2918
    %v3388 = vadd.f32 %v3387, %v2919
    %v3389 = vadd.f32 %v3388, %v2920
    %v3390 = vsel %vm2144, %v2921, 0.0
    %v3391 = vadd.f32 %v3389, %v3390
    %3392 = vadd.xlane.f32.xlu0 %v3391
    %v3393 = vpop.xlane.xlu0 %3392
    %v3394 = vadd.f32 %v2922, %v2923
    %v3395 = vadd.f32 %v3394, %v2924
    %v3396 = vadd.f32 %v3395, %v2925
    %v3397 = vadd.f32 %v3396, %v2926
    %v3398 = vadd.f32 %v3397, %v2927
    %v3399 = vsel %vm2144, %v2928, 0.0
    %v3400 = vadd.f32 %v3398, %v3399
    %3401 = vadd.xlane.f32.xlu0 %v3400
    %v3402 = vpop.xlane.xlu0 %3401
    %v3403 = vadd.f32 %v2929, %v2930
    %v3404 = vadd.f32 %v3403, %v2931
    %v3405 = vadd.f32 %v3404, %v2932
    %v3406 = vadd.f32 %v3405, %v2933
    %v3407 = vadd.f32 %v3406, %v2934
    %v3408 = vsel %vm2144, %v2935, 0.0
    %v3409 = vadd.f32 %v3407, %v3408
    %3410 = vadd.xlane.f32.xlu0 %v3409
    %v3411 = vpop.xlane.xlu0 %3410
    %v3412 = vadd.f32 %v2936, %v2937
    %v3413 = vadd.f32 %v3412, %v2938
    %v3414 = vadd.f32 %v3413, %v2939
    %v3415 = vadd.f32 %v3414, %v2940
    %v3416 = vadd.f32 %v3415, %v2941
    %v3417 = vsel %vm2144, %v2942, 0.0
    %v3418 = vadd.f32 %v3416, %v3417
    %3419 = vadd.xlane.f32.xlu0 %v3418
    %v3420 = vpop.xlane.xlu0 %3419
    %v3421 = vadd.f32 %v2943, %v2944
    %v3422 = vadd.f32 %v3421, %v2945
    %v3423 = vadd.f32 %v3422, %v2946
    %v3424 = vadd.f32 %v3423, %v2947
    %v3425 = vadd.f32 %v3424, %v2948
    %v3426 = vsel %vm2144, %v2949, 0.0
    %v3427 = vadd.f32 %v3425, %v3426
    %3428 = vadd.xlane.f32.xlu0 %v3427
    %v3429 = vpop.xlane.xlu0 %3428
    %v3430 = vadd.f32 %v2950, %v2951
    %v3431 = vadd.f32 %v3430, %v2952
    %v3432 = vadd.f32 %v3431, %v2953
    %v3433 = vadd.f32 %v3432, %v2954
    %v3434 = vadd.f32 %v3433, %v2955
    %v3435 = vsel %vm2144, %v2956, 0.0
    %v3436 = vadd.f32 %v3434, %v3435
    %3437 = vadd.xlane.f32.xlu0 %v3436
    %v3438 = vpop.xlane.xlu0 %3437
    %v3439 = vadd.f32 %v2957, %v2958
    %v3440 = vadd.f32 %v3439, %v2959
    %v3441 = vadd.f32 %v3440, %v2960
    %v3442 = vadd.f32 %v3441, %v2961
    %v3443 = vadd.f32 %v3442, %v2962
    %v3444 = vsel %vm2144, %v2963, 0.0
    %v3445 = vadd.f32 %v3443, %v3444
    %3446 = vadd.xlane.f32.xlu0 %v3445
    %v3447 = vpop.xlane.xlu0 %3446
    %v3448 = vadd.f32 %v2964, %v2965
    %v3449 = vadd.f32 %v3448, %v2966
    %v3450 = vadd.f32 %v3449, %v2967
    %v3451 = vadd.f32 %v3450, %v2968
    %v3452 = vadd.f32 %v3451, %v2969
    %v3453 = vsel %vm2144, %v2970, 0.0
    %v3454 = vadd.f32 %v3452, %v3453
    %3455 = vadd.xlane.f32.xlu0 %v3454
    %v3456 = vpop.xlane.xlu0 %3455
    %v3457 = vadd.f32 %v2971, %v2972
    %v3458 = vadd.f32 %v3457, %v2973
    %v3459 = vadd.f32 %v3458, %v2974
    %v3460 = vadd.f32 %v3459, %v2975
    %v3461 = vadd.f32 %v3460, %v2976
    %v3462 = vsel %vm2144, %v2977, 0.0
    %v3463 = vadd.f32 %v3461, %v3462
    %3464 = vadd.xlane.f32.xlu0 %v3463
    %v3465 = vpop.xlane.xlu0 %3464
    %v3466 = vadd.f32 %v2978, %v2979
    %v3467 = vadd.f32 %v3466, %v2980
    %v3468 = vadd.f32 %v3467, %v2981
    %v3469 = vadd.f32 %v3468, %v2982
    %v3470 = vadd.f32 %v3469, %v2983
    %v3471 = vsel %vm2144, %v2984, 0.0
    %v3472 = vadd.f32 %v3470, %v3471
    %3473 = vadd.xlane.f32.xlu0 %v3472
    %v3474 = vpop.xlane.xlu0 %3473
    %v3475 = vadd.f32 %v2985, %v2986
    %v3476 = vadd.f32 %v3475, %v2987
    %v3477 = vadd.f32 %v3476, %v2988
    %v3478 = vadd.f32 %v3477, %v2989
    %v3479 = vadd.f32 %v3478, %v2990
    %v3480 = vsel %vm2144, %v2991, 0.0
    %v3481 = vadd.f32 %v3479, %v3480
    %3482 = vadd.xlane.f32.xlu0 %v3481
    %v3483 = vpop.xlane.xlu0 %3482
    %v3484 = vadd.f32 %v2992, %v2993
    %v3485 = vadd.f32 %v3484, %v2994
    %v3486 = vadd.f32 %v3485, %v2995
    %v3487 = vadd.f32 %v3486, %v2996
    %v3488 = vadd.f32 %v3487, %v2997
    %v3489 = vsel %vm2144, %v2998, 0.0
    %v3490 = vadd.f32 %v3488, %v3489
    %3491 = vadd.xlane.f32.xlu0 %v3490
    %v3492 = vpop.xlane.xlu0 %3491
    %v3493 = vadd.f32 %v2999, %v3000
    %v3494 = vadd.f32 %v3493, %v3001
    %v3495 = vadd.f32 %v3494, %v3002
    %v3496 = vadd.f32 %v3495, %v3003
    %v3497 = vadd.f32 %v3496, %v3004
    %v3498 = vsel %vm2144, %v3005, 0.0
    %v3499 = vadd.f32 %v3497, %v3498
    %3500 = vadd.xlane.f32.xlu0 %v3499
    %v3501 = vpop.xlane.xlu0 %3500
    %v3502 = vadd.f32 %v3006, %v3007
    %v3503 = vadd.f32 %v3502, %v3008
    %v3504 = vadd.f32 %v3503, %v3009
    %v3505 = vadd.f32 %v3504, %v3010
    %v3506 = vadd.f32 %v3505, %v3011
    %v3507 = vsel %vm2144, %v3012, 0.0
    %v3508 = vadd.f32 %v3506, %v3507
    %3509 = vadd.xlane.f32.xlu0 %v3508
    %v3510 = vpop.xlane.xlu0 %3509
    %v3511 = vadd.f32 %v3013, %v3014
    %v3512 = vadd.f32 %v3511, %v3015
    %v3513 = vadd.f32 %v3512, %v3016
    %v3514 = vadd.f32 %v3513, %v3017
    %v3515 = vadd.f32 %v3514, %v3018
    %v3516 = vsel %vm2144, %v3019, 0.0
    %v3517 = vadd.f32 %v3515, %v3516
    %3518 = vadd.xlane.f32.xlu0 %v3517
    %v3519 = vpop.xlane.xlu0 %3518
    %v3520 = vadd.f32 %v3020, %v3021
    %v3521 = vadd.f32 %v3520, %v3022
    %v3522 = vadd.f32 %v3521, %v3023
    %v3523 = vadd.f32 %v3522, %v3024
    %v3524 = vadd.f32 %v3523, %v3025
    %v3525 = vsel %vm2144, %v3026, 0.0
    %v3526 = vadd.f32 %v3524, %v3525
    %3527 = vadd.xlane.f32.xlu0 %v3526
    %v3528 = vpop.xlane.xlu0 %3527
    %v3529 = vadd.f32 %v3027, %v3028
    %v3530 = vadd.f32 %v3529, %v3029
    %v3531 = vadd.f32 %v3530, %v3030
    %v3532 = vadd.f32 %v3531, %v3031
    %v3533 = vadd.f32 %v3532, %v3032
    %v3534 = vsel %vm2144, %v3033, 0.0
    %v3535 = vadd.f32 %v3533, %v3534
    %3536 = vadd.xlane.f32.xlu0 %v3535
    %v3537 = vpop.xlane.xlu0 %3536
    %v3538 = vadd.f32 %v3034, %v3035
    %v3539 = vadd.f32 %v3538, %v3036
    %v3540 = vadd.f32 %v3539, %v3037
    %v3541 = vadd.f32 %v3540, %v3038
    %v3542 = vadd.f32 %v3541, %v3039
    %v3543 = vsel %vm2144, %v3040, 0.0
    %v3544 = vadd.f32 %v3542, %v3543
    %3545 = vadd.xlane.f32.xlu0 %v3544
    %v3546 = vpop.xlane.xlu0 %3545
    %v3547 = vadd.f32 %v3041, %v3042
    %v3548 = vadd.f32 %v3547, %v3043
    %v3549 = vadd.f32 %v3548, %v3044
    %v3550 = vadd.f32 %v3549, %v3045
    %v3551 = vadd.f32 %v3550, %v3046
    %v3552 = vsel %vm2144, %v3047, 0.0
    %v3553 = vadd.f32 %v3551, %v3552
    %3554 = vadd.xlane.f32.xlu0 %v3553
    %v3555 = vpop.xlane.xlu0 %3554
    %v3556 = vadd.f32 %v3048, %v3049
    %v3557 = vadd.f32 %v3556, %v3050
    %v3558 = vadd.f32 %v3557, %v3051
    %v3559 = vadd.f32 %v3558, %v3052
    %v3560 = vadd.f32 %v3559, %v3053
    %v3561 = vsel %vm2144, %v3054, 0.0
    %v3562 = vadd.f32 %v3560, %v3561
    %3563 = vadd.xlane.f32.xlu0 %v3562
    %v3564 = vpop.xlane.xlu0 %3563
    %v3565 = vadd.f32 %v3055, %v3056
    %v3566 = vadd.f32 %v3565, %v3057
    %v3567 = vadd.f32 %v3566, %v3058
    %v3568 = vadd.f32 %v3567, %v3059
    %v3569 = vadd.f32 %v3568, %v3060
    %v3570 = vsel %vm2144, %v3061, 0.0
    %v3571 = vadd.f32 %v3569, %v3570
    %3572 = vadd.xlane.f32.xlu0 %v3571
    %v3573 = vpop.xlane.xlu0 %3572
    %v3574 = vadd.f32 %v3062, %v3063
    %v3575 = vadd.f32 %v3574, %v3064
    %v3576 = vadd.f32 %v3575, %v3065
    %v3577 = vadd.f32 %v3576, %v3066
    %v3578 = vadd.f32 %v3577, %v3067
    %v3579 = vsel %vm2144, %v3068, 0.0
    %v3580 = vadd.f32 %v3578, %v3579
    %3581 = vadd.xlane.f32.xlu0 %v3580
    %v3582 = vpop.xlane.xlu0 %3581
    %v3583 = vadd.f32 %v3069, %v3070
    %v3584 = vadd.f32 %v3583, %v3071
    %v3585 = vadd.f32 %v3584, %v3072
    %v3586 = vadd.f32 %v3585, %v3073
    %v3587 = vadd.f32 %v3586, %v3074
    %v3588 = vsel %vm2144, %v3075, 0.0
    %v3589 = vadd.f32 %v3587, %v3588
    %3590 = vadd.xlane.f32.xlu0 %v3589
    %v3591 = vpop.xlane.xlu0 %3590
    %v3592 = vadd.f32 %v3076, %v3077
    %v3593 = vadd.f32 %v3592, %v3078
    %v3594 = vadd.f32 %v3593, %v3079
    %v3595 = vadd.f32 %v3594, %v3080
    %v3596 = vadd.f32 %v3595, %v3081
    %v3597 = vsel %vm2144, %v3082, 0.0
    %v3598 = vadd.f32 %v3596, %v3597
    %3599 = vadd.xlane.f32.xlu0 %v3598
    %v3600 = vpop.xlane.xlu0 %3599
    %v3601 = vadd.f32 %v3083, %v3084
    %v3602 = vadd.f32 %v3601, %v3085
    %v3603 = vadd.f32 %v3602, %v3086
    %v3604 = vadd.f32 %v3603, %v3087
    %v3605 = vadd.f32 %v3604, %v3088
    %v3606 = vsel %vm2144, %v3089, 0.0
    %v3607 = vadd.f32 %v3605, %v3606
    %3608 = vadd.xlane.f32.xlu0 %v3607
    %v3609 = vpop.xlane.xlu0 %3608
    %v3610 = vadd.f32 %v3090, %v3091
    %v3611 = vadd.f32 %v3610, %v3092
    %v3612 = vadd.f32 %v3611, %v3093
    %v3613 = vadd.f32 %v3612, %v3094
    %v3614 = vadd.f32 %v3613, %v3095
    %v3615 = vsel %vm2144, %v3096, 0.0
    %v3616 = vadd.f32 %v3614, %v3615
    %3617 = vadd.xlane.f32.xlu0 %v3616
    %v3618 = vpop.xlane.xlu0 %3617
    %v3619 = vadd.f32 %v3097, %v3098
    %v3620 = vadd.f32 %v3619, %v3099
    %v3621 = vadd.f32 %v3620, %v3100
    %v3622 = vadd.f32 %v3621, %v3101
    %v3623 = vadd.f32 %v3622, %v3102
    %v3624 = vsel %vm2144, %v3103, 0.0
    %v3625 = vadd.f32 %v3623, %v3624
    %3626 = vadd.xlane.f32.xlu0 %v3625
    %v3627 = vpop.xlane.xlu0 %3626
    %v3628 = vadd.f32 %v3104, %v3105
    %v3629 = vadd.f32 %v3628, %v3106
    %v3630 = vadd.f32 %v3629, %v3107
    %v3631 = vadd.f32 %v3630, %v3108
    %v3632 = vadd.f32 %v3631, %v3109
    %v3633 = vsel %vm2144, %v3110, 0.0
    %v3634 = vadd.f32 %v3632, %v3633
    %3635 = vadd.xlane.f32.xlu0 %v3634
    %v3636 = vpop.xlane.xlu0 %3635
    %v3637 = vadd.f32 %v3111, %v3112
    %v3638 = vadd.f32 %v3637, %v3113
    %v3639 = vadd.f32 %v3638, %v3114
    %v3640 = vadd.f32 %v3639, %v3115
    %v3641 = vadd.f32 %v3640, %v3116
    %v3642 = vsel %vm2144, %v3117, 0.0
    %v3643 = vadd.f32 %v3641, %v3642
    %3644 = vadd.xlane.f32.xlu0 %v3643
    %v3645 = vpop.xlane.xlu0 %3644
    %v3646 = vadd.f32 %v3118, %v3119
    %v3647 = vadd.f32 %v3646, %v3120
    %v3648 = vadd.f32 %v3647, %v3121
    %v3649 = vadd.f32 %v3648, %v3122
    %v3650 = vadd.f32 %v3649, %v3123
    %v3651 = vsel %vm2144, %v3124, 0.0
    %v3652 = vadd.f32 %v3650, %v3651
    %3653 = vadd.xlane.f32.xlu0 %v3652
    %v3654 = vpop.xlane.xlu0 %3653
    %v3655 = vadd.f32 %v3125, %v3126
    %v3656 = vadd.f32 %v3655, %v3127
    %v3657 = vadd.f32 %v3656, %v3128
    %v3658 = vadd.f32 %v3657, %v3129
    %v3659 = vadd.f32 %v3658, %v3130
    %v3660 = vsel %vm2144, %v3131, 0.0
    %v3661 = vadd.f32 %v3659, %v3660
    %3662 = vadd.xlane.f32.xlu0 %v3661
    %v3663 = vpop.xlane.xlu0 %3662
    %v3664 = vadd.f32 %v3132, %v3133
    %v3665 = vadd.f32 %v3664, %v3134
    %v3666 = vadd.f32 %v3665, %v3135
    %v3667 = vadd.f32 %v3666, %v3136
    %v3668 = vadd.f32 %v3667, %v3137
    %v3669 = vsel %vm2144, %v3138, 0.0
    %v3670 = vadd.f32 %v3668, %v3669
    %3671 = vadd.xlane.f32.xlu0 %v3670
    %v3672 = vpop.xlane.xlu0 %3671
    %v3673 = vadd.f32 %v3139, %v3140
    %v3674 = vadd.f32 %v3673, %v3141
    %v3675 = vadd.f32 %v3674, %v3142
    %v3676 = vadd.f32 %v3675, %v3143
    %v3677 = vadd.f32 %v3676, %v3144
    %v3678 = vsel %vm2144, %v3145, 0.0
    %v3679 = vadd.f32 %v3677, %v3678
    %3680 = vadd.xlane.f32.xlu0 %v3679
    %v3681 = vpop.xlane.xlu0 %3680
    %v3682 = vadd.f32 %v3146, %v3147
    %v3683 = vadd.f32 %v3682, %v3148
    %v3684 = vadd.f32 %v3683, %v3149
    %v3685 = vadd.f32 %v3684, %v3150
    %v3686 = vadd.f32 %v3685, %v3151
    %v3687 = vsel %vm2144, %v3152, 0.0
    %v3688 = vadd.f32 %v3686, %v3687
    %3689 = vadd.xlane.f32.xlu0 %v3688
    %v3690 = vpop.xlane.xlu0 %3689
    %v3691 = vadd.f32 %v3153, %v3154
    %v3692 = vadd.f32 %v3691, %v3155
    %v3693 = vadd.f32 %v3692, %v3156
    %v3694 = vadd.f32 %v3693, %v3157
    %v3695 = vadd.f32 %v3694, %v3158
    %v3696 = vsel %vm2144, %v3159, 0.0
    %v3697 = vadd.f32 %v3695, %v3696
    %3698 = vadd.xlane.f32.xlu0 %v3697
    %v3699 = vpop.xlane.xlu0 %3698
    %v3700 = vmul.f32 %v3168, 0.0012755102
    %v3701 = vmul.f32 %v3177, 0.0012755102
    %v3702 = vmul.f32 %v3186, 0.0012755102
    %v3703 = vmul.f32 %v3195, 0.0012755102
    %v3704 = vmul.f32 %v3204, 0.0012755102
    %v3705 = vmul.f32 %v3213, 0.0012755102
    %v3706 = vmul.f32 %v3222, 0.0012755102
    %v3707 = vmul.f32 %v3231, 0.0012755102
    %v3708 = vmul.f32 %v3240, 0.0012755102
    %v3709 = vmul.f32 %v3249, 0.0012755102
    %v3710 = vmul.f32 %v3258, 0.0012755102
    %v3711 = vmul.f32 %v3267, 0.0012755102
    %v3712 = vmul.f32 %v3276, 0.0012755102
    %v3713 = vmul.f32 %v3285, 0.0012755102
    %v3714 = vmul.f32 %v3294, 0.0012755102
    %v3715 = vmul.f32 %v3303, 0.0012755102
    %v3716 = vmul.f32 %v3312, 0.0012755102
    %v3717 = vmul.f32 %v3321, 0.0012755102
    %v3718 = vmul.f32 %v3330, 0.0012755102
    %v3719 = vmul.f32 %v3339, 0.0012755102
    %v3720 = vmul.f32 %v3348, 0.0012755102
    %v3721 = vmul.f32 %v3357, 0.0012755102
    %v3722 = vmul.f32 %v3366, 0.0012755102
    %v3723 = vmul.f32 %v3375, 0.0012755102
    %v3724 = vmul.f32 %v3384, 0.0012755102
    %v3725 = vmul.f32 %v3393, 0.0012755102
    %v3726 = vmul.f32 %v3402, 0.0012755102
    %v3727 = vmul.f32 %v3411, 0.0012755102
    %v3728 = vmul.f32 %v3420, 0.0012755102
    %v3729 = vmul.f32 %v3429, 0.0012755102
    %v3730 = vmul.f32 %v3438, 0.0012755102
    %v3731 = vmul.f32 %v3447, 0.0012755102
    %v3732 = vmul.f32 %v3456, 0.0012755102
    %v3733 = vmul.f32 %v3465, 0.0012755102
    %v3734 = vmul.f32 %v3474, 0.0012755102
    %v3735 = vmul.f32 %v3483, 0.0012755102
    %v3736 = vmul.f32 %v3492, 0.0012755102
    %v3737 = vmul.f32 %v3501, 0.0012755102
    %v3738 = vmul.f32 %v3510, 0.0012755102
    %v3739 = vmul.f32 %v3519, 0.0012755102
    %v3740 = vmul.f32 %v3528, 0.0012755102
    %v3741 = vmul.f32 %v3537, 0.0012755102
    %v3742 = vmul.f32 %v3546, 0.0012755102
    %v3743 = vmul.f32 %v3555, 0.0012755102
    %v3744 = vmul.f32 %v3564, 0.0012755102
    %v3745 = vmul.f32 %v3573, 0.0012755102
    %v3746 = vmul.f32 %v3582, 0.0012755102
    %v3747 = vmul.f32 %v3591, 0.0012755102
    %v3748 = vmul.f32 %v3600, 0.0012755102
    %v3749 = vmul.f32 %v3609, 0.0012755102
    %v3750 = vmul.f32 %v3618, 0.0012755102
    %v3751 = vmul.f32 %v3627, 0.0012755102
    %v3752 = vmul.f32 %v3636, 0.0012755102
    %v3753 = vmul.f32 %v3645, 0.0012755102
    %v3754 = vmul.f32 %v3654, 0.0012755102
    %v3755 = vmul.f32 %v3663, 0.0012755102
    %v3756 = vmul.f32 %v3672, 0.0012755102
    %v3757 = vmul.f32 %v3681, 0.0012755102
    %v3758 = vmul.f32 %v3690, 0.0012755102
    %v3759 = vmul.f32 %v3699, 0.0012755102
    %v3760 = vmul.f32 %v2680, %v2680
    %v3761 = vmul.f32 %v2681, %v2681
    %v3762 = vmul.f32 %v2682, %v2682
    %v3763 = vmul.f32 %v2683, %v2683
    %v3764 = vmul.f32 %v2684, %v2684
    %v3765 = vmul.f32 %v2685, %v2685
    %v3766 = vmul.f32 %v2686, %v2686
    %v3767 = vmul.f32 %v2687, %v2687
    %v3768 = vmul.f32 %v2688, %v2688
    %v3769 = vmul.f32 %v2689, %v2689
    %v3770 = vmul.f32 %v2690, %v2690
    %v3771 = vmul.f32 %v2691, %v2691
    %v3772 = vmul.f32 %v2692, %v2692
    %v3773 = vmul.f32 %v2693, %v2693
    %v3774 = vmul.f32 %v2694, %v2694
    %v3775 = vmul.f32 %v2695, %v2695
    %v3776 = vmul.f32 %v2696, %v2696
    %v3777 = vmul.f32 %v2697, %v2697
    %v3778 = vmul.f32 %v2698, %v2698
    %v3779 = vmul.f32 %v2699, %v2699
    %v3780 = vmul.f32 %v2700, %v2700
    %v3781 = vmul.f32 %v2701, %v2701
    %v3782 = vmul.f32 %v2702, %v2702
    %v3783 = vmul.f32 %v2703, %v2703
    %v3784 = vmul.f32 %v2704, %v2704
    %v3785 = vmul.f32 %v2705, %v2705
    %v3786 = vmul.f32 %v2706, %v2706
    %v3787 = vmul.f32 %v2707, %v2707
    %v3788 = vmul.f32 %v2708, %v2708
    %v3789 = vmul.f32 %v2709, %v2709
    %v3790 = vmul.f32 %v2710, %v2710
    %v3791 = vmul.f32 %v2711, %v2711
    %v3792 = vmul.f32 %v2712, %v2712
    %v3793 = vmul.f32 %v2713, %v2713
    %v3794 = vmul.f32 %v2714, %v2714
    %v3795 = vmul.f32 %v2715, %v2715
    %v3796 = vmul.f32 %v2716, %v2716
    %v3797 = vmul.f32 %v2717, %v2717
    %v3798 = vmul.f32 %v2718, %v2718
    %v3799 = vmul.f32 %v2719, %v2719
    %v3800 = vmul.f32 %v2720, %v2720
    %v3801 = vmul.f32 %v2721, %v2721
    %v3802 = vmul.f32 %v2722, %v2722
    %v3803 = vmul.f32 %v2723, %v2723
    %v3804 = vmul.f32 %v2724, %v2724
    %v3805 = vmul.f32 %v2725, %v2725
    %v3806 = vmul.f32 %v2726, %v2726
    %v3807 = vmul.f32 %v2727, %v2727
    %v3808 = vmul.f32 %v2728, %v2728
    %v3809 = vmul.f32 %v2729, %v2729
    %v3810 = vmul.f32 %v2730, %v2730
    %v3811 = vmul.f32 %v2731, %v2731
    %v3812 = vmul.f32 %v2732, %v2732
    %v3813 = vmul.f32 %v2733, %v2733
    %v3814 = vmul.f32 %v2734, %v2734
    %v3815 = vmul.f32 %v2735, %v2735
    %v3816 = vmul.f32 %v2736, %v2736
    %v3817 = vmul.f32 %v2737, %v2737
    %v3818 = vmul.f32 %v2738, %v2738
    %v3819 = vmul.f32 %v2739, %v2739
    %v3820 = vsub.f32 %v3700, %v3760
    %v3821 = vsub.f32 %v3701, %v3761
    %v3822 = vsub.f32 %v3702, %v3762
    %v3823 = vsub.f32 %v3703, %v3763
    %v3824 = vsub.f32 %v3704, %v3764
    %v3825 = vsub.f32 %v3705, %v3765
    %v3826 = vsub.f32 %v3706, %v3766
    %v3827 = vsub.f32 %v3707, %v3767
    %v3828 = vsub.f32 %v3708, %v3768
    %v3829 = vsub.f32 %v3709, %v3769
    %v3830 = vsub.f32 %v3710, %v3770
    %v3831 = vsub.f32 %v3711, %v3771
    %v3832 = vsub.f32 %v3712, %v3772
    %v3833 = vsub.f32 %v3713, %v3773
    %v3834 = vsub.f32 %v3714, %v3774
    %v3835 = vsub.f32 %v3715, %v3775
    %v3836 = vsub.f32 %v3716, %v3776
    %v3837 = vsub.f32 %v3717, %v3777
    %v3838 = vsub.f32 %v3718, %v3778
    %v3839 = vsub.f32 %v3719, %v3779
    %v3840 = vsub.f32 %v3720, %v3780
    %v3841 = vsub.f32 %v3721, %v3781
    %v3842 = vsub.f32 %v3722, %v3782
    %v3843 = vsub.f32 %v3723, %v3783
    %v3844 = vsub.f32 %v3724, %v3784
    %v3845 = vsub.f32 %v3725, %v3785
    %v3846 = vsub.f32 %v3726, %v3786
    %v3847 = vsub.f32 %v3727, %v3787
    %v3848 = vsub.f32 %v3728, %v3788
    %v3849 = vsub.f32 %v3729, %v3789
    %v3850 = vsub.f32 %v3730, %v3790
    %v3851 = vsub.f32 %v3731, %v3791
    %v3852 = vsub.f32 %v3732, %v3792
    %v3853 = vsub.f32 %v3733, %v3793
    %v3854 = vsub.f32 %v3734, %v3794
    %v3855 = vsub.f32 %v3735, %v3795
    %v3856 = vsub.f32 %v3736, %v3796
    %v3857 = vsub.f32 %v3737, %v3797
    %v3858 = vsub.f32 %v3738, %v3798
    %v3859 = vsub.f32 %v3739, %v3799
    %v3860 = vsub.f32 %v3740, %v3800
    %v3861 = vsub.f32 %v3741, %v3801
    %v3862 = vsub.f32 %v3742, %v3802
    %v3863 = vsub.f32 %v3743, %v3803
    %v3864 = vsub.f32 %v3744, %v3804
    %v3865 = vsub.f32 %v3745, %v3805
    %v3866 = vsub.f32 %v3746, %v3806
    %v3867 = vsub.f32 %v3747, %v3807
    %v3868 = vsub.f32 %v3748, %v3808
    %v3869 = vsub.f32 %v3749, %v3809
    %v3870 = vsub.f32 %v3750, %v3810
    %v3871 = vsub.f32 %v3751, %v3811
    %v3872 = vsub.f32 %v3752, %v3812
    %v3873 = vsub.f32 %v3753, %v3813
    %v3874 = vsub.f32 %v3754, %v3814
    %v3875 = vsub.f32 %v3755, %v3815
    %v3876 = vsub.f32 %v3756, %v3816
    %v3877 = vsub.f32 %v3757, %v3817
    %v3878 = vsub.f32 %v3758, %v3818
    %v3879 = vsub.f32 %v3759, %v3819
    %v3880 = vmax.f32 %v3820, 0.0
    %v3881 = vmax.f32 %v3821, 0.0
    %v3882 = vmax.f32 %v3822, 0.0
    %v3883 = vmax.f32 %v3823, 0.0
    %v3884 = vmax.f32 %v3824, 0.0
    %v3885 = vmax.f32 %v3825, 0.0
    %v3886 = vmax.f32 %v3826, 0.0
    %v3887 = vmax.f32 %v3827, 0.0
    %v3888 = vmax.f32 %v3828, 0.0
    %v3889 = vmax.f32 %v3829, 0.0
    %v3890 = vmax.f32 %v3830, 0.0
    %v3891 = vmax.f32 %v3831, 0.0
    %v3892 = vmax.f32 %v3832, 0.0
    %v3893 = vmax.f32 %v3833, 0.0
    %v3894 = vmax.f32 %v3834, 0.0
    %v3895 = vmax.f32 %v3835, 0.0
    %v3896 = vmax.f32 %v3836, 0.0
    %v3897 = vmax.f32 %v3837, 0.0
    %v3898 = vmax.f32 %v3838, 0.0
    %v3899 = vmax.f32 %v3839, 0.0
    %v3900 = vmax.f32 %v3840, 0.0
    %v3901 = vmax.f32 %v3841, 0.0
    %v3902 = vmax.f32 %v3842, 0.0
    %v3903 = vmax.f32 %v3843, 0.0
    %v3904 = vmax.f32 %v3844, 0.0
    %v3905 = vmax.f32 %v3845, 0.0
    %v3906 = vmax.f32 %v3846, 0.0
    %v3907 = vmax.f32 %v3847, 0.0
    %v3908 = vmax.f32 %v3848, 0.0
    %v3909 = vmax.f32 %v3849, 0.0
    %v3910 = vmax.f32 %v3850, 0.0
    %v3911 = vmax.f32 %v3851, 0.0
    %v3912 = vmax.f32 %v3852, 0.0
    %v3913 = vmax.f32 %v3853, 0.0
    %v3914 = vmax.f32 %v3854, 0.0
    %v3915 = vmax.f32 %v3855, 0.0
    %v3916 = vmax.f32 %v3856, 0.0
    %v3917 = vmax.f32 %v3857, 0.0
    %v3918 = vmax.f32 %v3858, 0.0
    %v3919 = vmax.f32 %v3859, 0.0
    %v3920 = vmax.f32 %v3860, 0.0
    %v3921 = vmax.f32 %v3861, 0.0
    %v3922 = vmax.f32 %v3862, 0.0
    %v3923 = vmax.f32 %v3863, 0.0
    %v3924 = vmax.f32 %v3864, 0.0
    %v3925 = vmax.f32 %v3865, 0.0
    %v3926 = vmax.f32 %v3866, 0.0
    %v3927 = vmax.f32 %v3867, 0.0
    %v3928 = vmax.f32 %v3868, 0.0
    %v3929 = vmax.f32 %v3869, 0.0
    %v3930 = vmax.f32 %v3870, 0.0
    %v3931 = vmax.f32 %v3871, 0.0
    %v3932 = vmax.f32 %v3872, 0.0
    %v3933 = vmax.f32 %v3873, 0.0
    %v3934 = vmax.f32 %v3874, 0.0
    %v3935 = vmax.f32 %v3875, 0.0
    %v3936 = vmax.f32 %v3876, 0.0
    %v3937 = vmax.f32 %v3877, 0.0
    %v3938 = vmax.f32 %v3878, 0.0
    %v3939 = vmax.f32 %v3879, 0.0
    %v3940 = vadd.f32 %v3880, 1e-05
    %v3941 = vadd.f32 %v3881, 1e-05
    %v3942 = vadd.f32 %v3882, 1e-05
    %v3943 = vadd.f32 %v3883, 1e-05
    %v3944 = vadd.f32 %v3884, 1e-05
    %v3945 = vadd.f32 %v3885, 1e-05
    %v3946 = vadd.f32 %v3886, 1e-05
    %v3947 = vadd.f32 %v3887, 1e-05
    %v3948 = vadd.f32 %v3888, 1e-05
    %v3949 = vadd.f32 %v3889, 1e-05
    %v3950 = vadd.f32 %v3890, 1e-05
    %v3951 = vadd.f32 %v3891, 1e-05
    %v3952 = vadd.f32 %v3892, 1e-05
    %v3953 = vadd.f32 %v3893, 1e-05
    %v3954 = vadd.f32 %v3894, 1e-05
    %v3955 = vadd.f32 %v3895, 1e-05
    %v3956 = vadd.f32 %v3896, 1e-05
    %v3957 = vadd.f32 %v3897, 1e-05
    %v3958 = vadd.f32 %v3898, 1e-05
    %v3959 = vadd.f32 %v3899, 1e-05
    %v3960 = vadd.f32 %v3900, 1e-05
    %v3961 = vadd.f32 %v3901, 1e-05
    %v3962 = vadd.f32 %v3902, 1e-05
    %v3963 = vadd.f32 %v3903, 1e-05
    %v3964 = vadd.f32 %v3904, 1e-05
    %v3965 = vadd.f32 %v3905, 1e-05
    %v3966 = vadd.f32 %v3906, 1e-05
    %v3967 = vadd.f32 %v3907, 1e-05
    %v3968 = vadd.f32 %v3908, 1e-05
    %v3969 = vadd.f32 %v3909, 1e-05
    %v3970 = vadd.f32 %v3910, 1e-05
    %v3971 = vadd.f32 %v3911, 1e-05
    %v3972 = vadd.f32 %v3912, 1e-05
    %v3973 = vadd.f32 %v3913, 1e-05
    %v3974 = vadd.f32 %v3914, 1e-05
    %v3975 = vadd.f32 %v3915, 1e-05
    %v3976 = vadd.f32 %v3916, 1e-05
    %v3977 = vadd.f32 %v3917, 1e-05
    %v3978 = vadd.f32 %v3918, 1e-05
    %v3979 = vadd.f32 %v3919, 1e-05
    %v3980 = vadd.f32 %v3920, 1e-05
    %v3981 = vadd.f32 %v3921, 1e-05
    %v3982 = vadd.f32 %v3922, 1e-05
    %v3983 = vadd.f32 %v3923, 1e-05
    %v3984 = vadd.f32 %v3924, 1e-05
    %v3985 = vadd.f32 %v3925, 1e-05
    %v3986 = vadd.f32 %v3926, 1e-05
    %v3987 = vadd.f32 %v3927, 1e-05
    %v3988 = vadd.f32 %v3928, 1e-05
    %v3989 = vadd.f32 %v3929, 1e-05
    %v3990 = vadd.f32 %v3930, 1e-05
    %v3991 = vadd.f32 %v3931, 1e-05
    %v3992 = vadd.f32 %v3932, 1e-05
    %v3993 = vadd.f32 %v3933, 1e-05
    %v3994 = vadd.f32 %v3934, 1e-05
    %v3995 = vadd.f32 %v3935, 1e-05
    %v3996 = vadd.f32 %v3936, 1e-05
    %v3997 = vadd.f32 %v3937, 1e-05
    %v3998 = vadd.f32 %v3938, 1e-05
    %v3999 = vadd.f32 %v3939, 1e-05
    %v4000 = vrsqrt.pop %v3940
    %v4001 = vrsqrt.pop %v3941
    %v4002 = vrsqrt.pop %v3942
    %v4003 = vrsqrt.pop %v3943
    %v4004 = vrsqrt.pop %v3944
    %v4005 = vrsqrt.pop %v3945
    %v4006 = vrsqrt.pop %v3946
    %v4007 = vrsqrt.pop %v3947
    %v4008 = vrsqrt.pop %v3948
    %v4009 = vrsqrt.pop %v3949
    %v4010 = vrsqrt.pop %v3950
    %v4011 = vrsqrt.pop %v3951
    %v4012 = vrsqrt.pop %v3952
    %v4013 = vrsqrt.pop %v3953
    %v4014 = vrsqrt.pop %v3954
    %v4015 = vrsqrt.pop %v3955
    %v4016 = vrsqrt.pop %v3956
    %v4017 = vrsqrt.pop %v3957
    %v4018 = vrsqrt.pop %v3958
    %v4019 = vrsqrt.pop %v3959
    %v4020 = vrsqrt.pop %v3960
    %v4021 = vrsqrt.pop %v3961
    %v4022 = vrsqrt.pop %v3962
    %v4023 = vrsqrt.pop %v3963
    %v4024 = vrsqrt.pop %v3964
    %v4025 = vrsqrt.pop %v3965
    %v4026 = vrsqrt.pop %v3966
    %v4027 = vrsqrt.pop %v3967
    %v4028 = vrsqrt.pop %v3968
    %v4029 = vrsqrt.pop %v3969
    %v4030 = vrsqrt.pop %v3970
    %v4031 = vrsqrt.pop %v3971
    %v4032 = vrsqrt.pop %v3972
    %v4033 = vrsqrt.pop %v3973
    %v4034 = vrsqrt.pop %v3974
    %v4035 = vrsqrt.pop %v3975
    %v4036 = vrsqrt.pop %v3976
    %v4037 = vrsqrt.pop %v3977
    %v4038 = vrsqrt.pop %v3978
    %v4039 = vrsqrt.pop %v3979
    %v4040 = vrsqrt.pop %v3980
    %v4041 = vrsqrt.pop %v3981
    %v4042 = vrsqrt.pop %v3982
    %v4043 = vrsqrt.pop %v3983
    %v4044 = vrsqrt.pop %v3984
    %v4045 = vrsqrt.pop %v3985
    %v4046 = vrsqrt.pop %v3986
    %v4047 = vrsqrt.pop %v3987
    %v4048 = vrsqrt.pop %v3988
    %v4049 = vrsqrt.pop %v3989
    %v4050 = vrsqrt.pop %v3990
    %v4051 = vrsqrt.pop %v3991
    %v4052 = vrsqrt.pop %v3992
    %v4053 = vrsqrt.pop %v3993
    %v4054 = vrsqrt.pop %v3994
    %v4055 = vrsqrt.pop %v3995
    %v4056 = vrsqrt.pop %v3996
    %v4057 = vrsqrt.pop %v3997
    %v4058 = vrsqrt.pop %v3998
    %v4059 = vrsqrt.pop %v3999
    %v4060 = vld [vmem:[%s3] sm:$0xff]
    %v4061 = vld [vmem:[%s3 + $0x8] sm:$0xff]
    %v4062 = vld [vmem:[%s3 + $0x10] sm:$0xff]
    %v4063 = vld [vmem:[%s3 + $0x18] sm:$0xff]
    %v4064 = vld [vmem:[%s3 + $0x20] sm:$0xff]
    %v4065 = vld [vmem:[%s3 + $0x28] sm:$0xff]
    %v4066 = vld [vmem:[%s3 + $0x30] sm:$0xff]
    %v4067 = vld [vmem:[%s3 + $0x38] sm:$0xff]
    %v4068 = vld [vmem:[%s3 + $0x40] sm:$0xff]
    %v4069 = vld [vmem:[%s3 + $0x48] sm:$0xff]
    %v4070 = vld [vmem:[%s3 + $0x50] sm:$0xff]
    %v4071 = vld [vmem:[%s3 + $0x58] sm:$0xff]
    %v4072 = vld [vmem:[%s3 + $0x60] sm:$0xff]
    %v4073 = vld [vmem:[%s3 + $0x68] sm:$0xff]
    %v4074 = vld [vmem:[%s3 + $0x70] sm:$0xff]
    %v4075 = vld [vmem:[%s3 + $0x78] sm:$0xff]
    %v4076 = vld [vmem:[%s3 + $0x80] sm:$0xff]
    %v4077 = vld [vmem:[%s3 + $0x88] sm:$0xff]
    %v4078 = vld [vmem:[%s3 + $0x90] sm:$0xff]
    %v4079 = vld [vmem:[%s3 + $0x98] sm:$0xff]
    %v4080 = vld [vmem:[%s3 + $0xa0] sm:$0xff]
    %v4081 = vld [vmem:[%s3 + $0xa8] sm:$0xff]
    %v4082 = vld [vmem:[%s3 + $0xb0] sm:$0xff]
    %v4083 = vld [vmem:[%s3 + $0xb8] sm:$0xff]
    %v4084 = vld [vmem:[%s3 + $0xc0] sm:$0xff]
    %v4085 = vld [vmem:[%s3 + $0xc8] sm:$0xff]
    %v4086 = vld [vmem:[%s3 + $0xd0] sm:$0xff]
    %v4087 = vld [vmem:[%s3 + $0xd8] sm:$0xff]
    %v4088 = vld [vmem:[%s3 + $0xe0] sm:$0xff]
    %v4089 = vld [vmem:[%s3 + $0xe8] sm:$0xff]
    %v4090 = vld [vmem:[%s3 + $0xf0] sm:$0xff]
    %v4091 = vld [vmem:[%s3 + $0xf8] sm:$0xff]
    %v4092 = vld [vmem:[%s3 + $0x100] sm:$0xff]
    %v4093 = vld [vmem:[%s3 + $0x108] sm:$0xff]
    %v4094 = vld [vmem:[%s3 + $0x110] sm:$0xff]
    %v4095 = vld [vmem:[%s3 + $0x118] sm:$0xff]
    %v4096 = vld [vmem:[%s3 + $0x120] sm:$0xff]
    %v4097 = vld [vmem:[%s3 + $0x128] sm:$0xff]
    %v4098 = vld [vmem:[%s3 + $0x130] sm:$0xff]
    %v4099 = vld [vmem:[%s3 + $0x138] sm:$0xff]
    %v4100 = vld [vmem:[%s3 + $0x140] sm:$0xff]
    %v4101 = vld [vmem:[%s3 + $0x148] sm:$0xff]
    %v4102 = vld [vmem:[%s3 + $0x150] sm:$0xff]
    %v4103 = vld [vmem:[%s3 + $0x158] sm:$0xff]
    %v4104 = vld [vmem:[%s3 + $0x160] sm:$0xff]
    %v4105 = vld [vmem:[%s3 + $0x168] sm:$0xff]
    %v4106 = vld [vmem:[%s3 + $0x170] sm:$0xff]
    %v4107 = vld [vmem:[%s3 + $0x178] sm:$0xff]
    %v4108 = vld [vmem:[%s3 + $0x180] sm:$0xff]
    %v4109 = vld [vmem:[%s3 + $0x188] sm:$0xff]
    %v4110 = vld [vmem:[%s3 + $0x190] sm:$0xff]
    %v4111 = vld [vmem:[%s3 + $0x198] sm:$0xff]
    %v4112 = vld [vmem:[%s3 + $0x1a0] sm:$0xff]
    %v4113 = vld [vmem:[%s3 + $0x1a8] sm:$0xff]
    %v4114 = vld [vmem:[%s3 + $0x1b0] sm:$0xff]
    %v4115 = vld [vmem:[%s3 + $0x1b8] sm:$0xff]
    %v4116 = vld [vmem:[%s3 + $0x1c0] sm:$0xff]
    %v4117 = vld [vmem:[%s3 + $0x1c8] sm:$0xff]
    %v4118 = vld [vmem:[%s3 + $0x1d0] sm:$0xff]
    %v4119 = vld [vmem:[%s3 + $0x1d8] sm:$0xff]
    %v4120 = vmul.f32 %v4000, %v4060
    %v4121 = vmul.f32 %v4001, %v4061
    %v4122 = vmul.f32 %v4002, %v4062
    %v4123 = vmul.f32 %v4003, %v4063
    %v4124 = vmul.f32 %v4004, %v4064
    %v4125 = vmul.f32 %v4005, %v4065
    %v4126 = vmul.f32 %v4006, %v4066
    %v4127 = vmul.f32 %v4007, %v4067
    %v4128 = vmul.f32 %v4008, %v4068
    %v4129 = vmul.f32 %v4009, %v4069
    %v4130 = vmul.f32 %v4010, %v4070
    %v4131 = vmul.f32 %v4011, %v4071
    %v4132 = vmul.f32 %v4012, %v4072
    %v4133 = vmul.f32 %v4013, %v4073
    %v4134 = vmul.f32 %v4014, %v4074
    %v4135 = vmul.f32 %v4015, %v4075
    %v4136 = vmul.f32 %v4016, %v4076
    %v4137 = vmul.f32 %v4017, %v4077
    %v4138 = vmul.f32 %v4018, %v4078
    %v4139 = vmul.f32 %v4019, %v4079
    %v4140 = vmul.f32 %v4020, %v4080
    %v4141 = vmul.f32 %v4021, %v4081
    %v4142 = vmul.f32 %v4022, %v4082
    %v4143 = vmul.f32 %v4023, %v4083
    %v4144 = vmul.f32 %v4024, %v4084
    %v4145 = vmul.f32 %v4025, %v4085
    %v4146 = vmul.f32 %v4026, %v4086
    %v4147 = vmul.f32 %v4027, %v4087
    %v4148 = vmul.f32 %v4028, %v4088
    %v4149 = vmul.f32 %v4029, %v4089
    %v4150 = vmul.f32 %v4030, %v4090
    %v4151 = vmul.f32 %v4031, %v4091
    %v4152 = vmul.f32 %v4032, %v4092
    %v4153 = vmul.f32 %v4033, %v4093
    %v4154 = vmul.f32 %v4034, %v4094
    %v4155 = vmul.f32 %v4035, %v4095
    %v4156 = vmul.f32 %v4036, %v4096
    %v4157 = vmul.f32 %v4037, %v4097
    %v4158 = vmul.f32 %v4038, %v4098
    %v4159 = vmul.f32 %v4039, %v4099
    %v4160 = vmul.f32 %v4040, %v4100
    %v4161 = vmul.f32 %v4041, %v4101
    %v4162 = vmul.f32 %v4042, %v4102
    %v4163 = vmul.f32 %v4043, %v4103
    %v4164 = vmul.f32 %v4044, %v4104
    %v4165 = vmul.f32 %v4045, %v4105
    %v4166 = vmul.f32 %v4046, %v4106
    %v4167 = vmul.f32 %v4047, %v4107
    %v4168 = vmul.f32 %v4048, %v4108
    %v4169 = vmul.f32 %v4049, %v4109
    %v4170 = vmul.f32 %v4050, %v4110
    %v4171 = vmul.f32 %v4051, %v4111
    %v4172 = vmul.f32 %v4052, %v4112
    %v4173 = vmul.f32 %v4053, %v4113
    %v4174 = vmul.f32 %v4054, %v4114
    %v4175 = vmul.f32 %v4055, %v4115
    %v4176 = vmul.f32 %v4056, %v4116
    %v4177 = vmul.f32 %v4057, %v4117
    %v4178 = vmul.f32 %v4058, %v4118
    %v4179 = vmul.f32 %v4059, %v4119
    %v4180 = vld [vmem:[%s4] sm:$0xff]
    %v4181 = vld [vmem:[%s4 + $0x8] sm:$0xff]
    %v4182 = vld [vmem:[%s4 + $0x10] sm:$0xff]
    %v4183 = vld [vmem:[%s4 + $0x18] sm:$0xff]
    %v4184 = vld [vmem:[%s4 + $0x20] sm:$0xff]
    %v4185 = vld [vmem:[%s4 + $0x28] sm:$0xff]
    %v4186 = vld [vmem:[%s4 + $0x30] sm:$0xff]
    %v4187 = vld [vmem:[%s4 + $0x38] sm:$0xff]
    %v4188 = vld [vmem:[%s4 + $0x40] sm:$0xff]
    %v4189 = vld [vmem:[%s4 + $0x48] sm:$0xff]
    %v4190 = vld [vmem:[%s4 + $0x50] sm:$0xff]
    %v4191 = vld [vmem:[%s4 + $0x58] sm:$0xff]
    %v4192 = vld [vmem:[%s4 + $0x60] sm:$0xff]
    %v4193 = vld [vmem:[%s4 + $0x68] sm:$0xff]
    %v4194 = vld [vmem:[%s4 + $0x70] sm:$0xff]
    %v4195 = vld [vmem:[%s4 + $0x78] sm:$0xff]
    %v4196 = vld [vmem:[%s4 + $0x80] sm:$0xff]
    %v4197 = vld [vmem:[%s4 + $0x88] sm:$0xff]
    %v4198 = vld [vmem:[%s4 + $0x90] sm:$0xff]
    %v4199 = vld [vmem:[%s4 + $0x98] sm:$0xff]
    %v4200 = vld [vmem:[%s4 + $0xa0] sm:$0xff]
    %v4201 = vld [vmem:[%s4 + $0xa8] sm:$0xff]
    %v4202 = vld [vmem:[%s4 + $0xb0] sm:$0xff]
    %v4203 = vld [vmem:[%s4 + $0xb8] sm:$0xff]
    %v4204 = vld [vmem:[%s4 + $0xc0] sm:$0xff]
    %v4205 = vld [vmem:[%s4 + $0xc8] sm:$0xff]
    %v4206 = vld [vmem:[%s4 + $0xd0] sm:$0xff]
    %v4207 = vld [vmem:[%s4 + $0xd8] sm:$0xff]
    %v4208 = vld [vmem:[%s4 + $0xe0] sm:$0xff]
    %v4209 = vld [vmem:[%s4 + $0xe8] sm:$0xff]
    %v4210 = vld [vmem:[%s4 + $0xf0] sm:$0xff]
    %v4211 = vld [vmem:[%s4 + $0xf8] sm:$0xff]
    %v4212 = vld [vmem:[%s4 + $0x100] sm:$0xff]
    %v4213 = vld [vmem:[%s4 + $0x108] sm:$0xff]
    %v4214 = vld [vmem:[%s4 + $0x110] sm:$0xff]
    %v4215 = vld [vmem:[%s4 + $0x118] sm:$0xff]
    %v4216 = vld [vmem:[%s4 + $0x120] sm:$0xff]
    %v4217 = vld [vmem:[%s4 + $0x128] sm:$0xff]
    %v4218 = vld [vmem:[%s4 + $0x130] sm:$0xff]
    %v4219 = vld [vmem:[%s4 + $0x138] sm:$0xff]
    %v4220 = vld [vmem:[%s4 + $0x140] sm:$0xff]
    %v4221 = vld [vmem:[%s4 + $0x148] sm:$0xff]
    %v4222 = vld [vmem:[%s4 + $0x150] sm:$0xff]
    %v4223 = vld [vmem:[%s4 + $0x158] sm:$0xff]
    %v4224 = vld [vmem:[%s4 + $0x160] sm:$0xff]
    %v4225 = vld [vmem:[%s4 + $0x168] sm:$0xff]
    %v4226 = vld [vmem:[%s4 + $0x170] sm:$0xff]
    %v4227 = vld [vmem:[%s4 + $0x178] sm:$0xff]
    %v4228 = vld [vmem:[%s4 + $0x180] sm:$0xff]
    %v4229 = vld [vmem:[%s4 + $0x188] sm:$0xff]
    %v4230 = vld [vmem:[%s4 + $0x190] sm:$0xff]
    %v4231 = vld [vmem:[%s4 + $0x198] sm:$0xff]
    %v4232 = vld [vmem:[%s4 + $0x1a0] sm:$0xff]
    %v4233 = vld [vmem:[%s4 + $0x1a8] sm:$0xff]
    %v4234 = vld [vmem:[%s4 + $0x1b0] sm:$0xff]
    %v4235 = vld [vmem:[%s4 + $0x1b8] sm:$0xff]
    %v4236 = vld [vmem:[%s4 + $0x1c0] sm:$0xff]
    %v4237 = vld [vmem:[%s4 + $0x1c8] sm:$0xff]
    %v4238 = vld [vmem:[%s4 + $0x1d0] sm:$0xff]
    %v4239 = vld [vmem:[%s4 + $0x1d8] sm:$0xff]
    %v4240 = vmul.f32 %v2680, %v4120
    %v4241 = vmul.f32 %v2681, %v4121
    %v4242 = vmul.f32 %v2682, %v4122
    %v4243 = vmul.f32 %v2683, %v4123
    %v4244 = vmul.f32 %v2684, %v4124
    %v4245 = vmul.f32 %v2685, %v4125
    %v4246 = vmul.f32 %v2686, %v4126
    %v4247 = vmul.f32 %v2687, %v4127
    %v4248 = vmul.f32 %v2688, %v4128
    %v4249 = vmul.f32 %v2689, %v4129
    %v4250 = vmul.f32 %v2690, %v4130
    %v4251 = vmul.f32 %v2691, %v4131
    %v4252 = vmul.f32 %v2692, %v4132
    %v4253 = vmul.f32 %v2693, %v4133
    %v4254 = vmul.f32 %v2694, %v4134
    %v4255 = vmul.f32 %v2695, %v4135
    %v4256 = vmul.f32 %v2696, %v4136
    %v4257 = vmul.f32 %v2697, %v4137
    %v4258 = vmul.f32 %v2698, %v4138
    %v4259 = vmul.f32 %v2699, %v4139
    %v4260 = vmul.f32 %v2700, %v4140
    %v4261 = vmul.f32 %v2701, %v4141
    %v4262 = vmul.f32 %v2702, %v4142
    %v4263 = vmul.f32 %v2703, %v4143
    %v4264 = vmul.f32 %v2704, %v4144
    %v4265 = vmul.f32 %v2705, %v4145
    %v4266 = vmul.f32 %v2706, %v4146
    %v4267 = vmul.f32 %v2707, %v4147
    %v4268 = vmul.f32 %v2708, %v4148
    %v4269 = vmul.f32 %v2709, %v4149
    %v4270 = vmul.f32 %v2710, %v4150
    %v4271 = vmul.f32 %v2711, %v4151
    %v4272 = vmul.f32 %v2712, %v4152
    %v4273 = vmul.f32 %v2713, %v4153
    %v4274 = vmul.f32 %v2714, %v4154
    %v4275 = vmul.f32 %v2715, %v4155
    %v4276 = vmul.f32 %v2716, %v4156
    %v4277 = vmul.f32 %v2717, %v4157
    %v4278 = vmul.f32 %v2718, %v4158
    %v4279 = vmul.f32 %v2719, %v4159
    %v4280 = vmul.f32 %v2720, %v4160
    %v4281 = vmul.f32 %v2721, %v4161
    %v4282 = vmul.f32 %v2722, %v4162
    %v4283 = vmul.f32 %v2723, %v4163
    %v4284 = vmul.f32 %v2724, %v4164
    %v4285 = vmul.f32 %v2725, %v4165
    %v4286 = vmul.f32 %v2726, %v4166
    %v4287 = vmul.f32 %v2727, %v4167
    %v4288 = vmul.f32 %v2728, %v4168
    %v4289 = vmul.f32 %v2729, %v4169
    %v4290 = vmul.f32 %v2730, %v4170
    %v4291 = vmul.f32 %v2731, %v4171
    %v4292 = vmul.f32 %v2732, %v4172
    %v4293 = vmul.f32 %v2733, %v4173
    %v4294 = vmul.f32 %v2734, %v4174
    %v4295 = vmul.f32 %v2735, %v4175
    %v4296 = vmul.f32 %v2736, %v4176
    %v4297 = vmul.f32 %v2737, %v4177
    %v4298 = vmul.f32 %v2738, %v4178
    %v4299 = vmul.f32 %v2739, %v4179
    %v4300 = vsub.f32 %v4180, %v4240
    %v4301 = vsub.f32 %v4181, %v4241
    %v4302 = vsub.f32 %v4182, %v4242
    %v4303 = vsub.f32 %v4183, %v4243
    %v4304 = vsub.f32 %v4184, %v4244
    %v4305 = vsub.f32 %v4185, %v4245
    %v4306 = vsub.f32 %v4186, %v4246
    %v4307 = vsub.f32 %v4187, %v4247
    %v4308 = vsub.f32 %v4188, %v4248
    %v4309 = vsub.f32 %v4189, %v4249
    %v4310 = vsub.f32 %v4190, %v4250
    %v4311 = vsub.f32 %v4191, %v4251
    %v4312 = vsub.f32 %v4192, %v4252
    %v4313 = vsub.f32 %v4193, %v4253
    %v4314 = vsub.f32 %v4194, %v4254
    %v4315 = vsub.f32 %v4195, %v4255
    %v4316 = vsub.f32 %v4196, %v4256
    %v4317 = vsub.f32 %v4197, %v4257
    %v4318 = vsub.f32 %v4198, %v4258
    %v4319 = vsub.f32 %v4199, %v4259
    %v4320 = vsub.f32 %v4200, %v4260
    %v4321 = vsub.f32 %v4201, %v4261
    %v4322 = vsub.f32 %v4202, %v4262
    %v4323 = vsub.f32 %v4203, %v4263
    %v4324 = vsub.f32 %v4204, %v4264
    %v4325 = vsub.f32 %v4205, %v4265
    %v4326 = vsub.f32 %v4206, %v4266
    %v4327 = vsub.f32 %v4207, %v4267
    %v4328 = vsub.f32 %v4208, %v4268
    %v4329 = vsub.f32 %v4209, %v4269
    %v4330 = vsub.f32 %v4210, %v4270
    %v4331 = vsub.f32 %v4211, %v4271
    %v4332 = vsub.f32 %v4212, %v4272
    %v4333 = vsub.f32 %v4213, %v4273
    %v4334 = vsub.f32 %v4214, %v4274
    %v4335 = vsub.f32 %v4215, %v4275
    %v4336 = vsub.f32 %v4216, %v4276
    %v4337 = vsub.f32 %v4217, %v4277
    %v4338 = vsub.f32 %v4218, %v4278
    %v4339 = vsub.f32 %v4219, %v4279
    %v4340 = vsub.f32 %v4220, %v4280
    %v4341 = vsub.f32 %v4221, %v4281
    %v4342 = vsub.f32 %v4222, %v4282
    %v4343 = vsub.f32 %v4223, %v4283
    %v4344 = vsub.f32 %v4224, %v4284
    %v4345 = vsub.f32 %v4225, %v4285
    %v4346 = vsub.f32 %v4226, %v4286
    %v4347 = vsub.f32 %v4227, %v4287
    %v4348 = vsub.f32 %v4228, %v4288
    %v4349 = vsub.f32 %v4229, %v4289
    %v4350 = vsub.f32 %v4230, %v4290
    %v4351 = vsub.f32 %v4231, %v4291
    %v4352 = vsub.f32 %v4232, %v4292
    %v4353 = vsub.f32 %v4233, %v4293
    %v4354 = vsub.f32 %v4234, %v4294
    %v4355 = vsub.f32 %v4235, %v4295
    %v4356 = vsub.f32 %v4236, %v4296
    %v4357 = vsub.f32 %v4237, %v4297
    %v4358 = vsub.f32 %v4238, %v4298
    %v4359 = vsub.f32 %v4239, %v4299
    %4361 = vset.pattern.permute.xlu0 0
    %4362 = vperm.xlu0 %4361, %v4120
    %v4363 = vpop.permute.xlu0 %4362
    %4366 = vset.pattern.permute.xlu0 0
    %4367 = vperm.xlu0 %4366, %v4121
    %v4368 = vpop.permute.xlu0 %4367
    %4371 = vset.pattern.permute.xlu0 0
    %4372 = vperm.xlu0 %4371, %v4122
    %v4373 = vpop.permute.xlu0 %4372
    %4376 = vset.pattern.permute.xlu0 0
    %4377 = vperm.xlu0 %4376, %v4123
    %v4378 = vpop.permute.xlu0 %4377
    %4381 = vset.pattern.permute.xlu0 0
    %4382 = vperm.xlu0 %4381, %v4124
    %v4383 = vpop.permute.xlu0 %4382
    %4386 = vset.pattern.permute.xlu0 0
    %4387 = vperm.xlu0 %4386, %v4125
    %v4388 = vpop.permute.xlu0 %4387
    %4391 = vset.pattern.permute.xlu0 0
    %4392 = vperm.xlu0 %4391, %v4126
    %v4393 = vpop.permute.xlu0 %4392
    %4396 = vset.pattern.permute.xlu0 0
    %4397 = vperm.xlu0 %4396, %v4127
    %v4398 = vpop.permute.xlu0 %4397
    %4401 = vset.pattern.permute.xlu0 0
    %4402 = vperm.xlu0 %4401, %v4128
    %v4403 = vpop.permute.xlu0 %4402
    %4406 = vset.pattern.permute.xlu0 0
    %4407 = vperm.xlu0 %4406, %v4129
    %v4408 = vpop.permute.xlu0 %4407
    %4411 = vset.pattern.permute.xlu0 0
    %4412 = vperm.xlu0 %4411, %v4130
    %v4413 = vpop.permute.xlu0 %4412
    %4416 = vset.pattern.permute.xlu0 0
    %4417 = vperm.xlu0 %4416, %v4131
    %v4418 = vpop.permute.xlu0 %4417
    %4421 = vset.pattern.permute.xlu0 0
    %4422 = vperm.xlu0 %4421, %v4132
    %v4423 = vpop.permute.xlu0 %4422
    %4426 = vset.pattern.permute.xlu0 0
    %4427 = vperm.xlu0 %4426, %v4133
    %v4428 = vpop.permute.xlu0 %4427
    %4431 = vset.pattern.permute.xlu0 0
    %4432 = vperm.xlu0 %4431, %v4134
    %v4433 = vpop.permute.xlu0 %4432
    %4436 = vset.pattern.permute.xlu0 0
    %4437 = vperm.xlu0 %4436, %v4135
    %v4438 = vpop.permute.xlu0 %4437
    %4441 = vset.pattern.permute.xlu0 0
    %4442 = vperm.xlu0 %4441, %v4136
    %v4443 = vpop.permute.xlu0 %4442
    %4446 = vset.pattern.permute.xlu0 0
    %4447 = vperm.xlu0 %4446, %v4137
    %v4448 = vpop.permute.xlu0 %4447
    %4451 = vset.pattern.permute.xlu0 0
    %4452 = vperm.xlu0 %4451, %v4138
    %v4453 = vpop.permute.xlu0 %4452
    %4456 = vset.pattern.permute.xlu0 0
    %4457 = vperm.xlu0 %4456, %v4139
    %v4458 = vpop.permute.xlu0 %4457
    %4461 = vset.pattern.permute.xlu0 0
    %4462 = vperm.xlu0 %4461, %v4140
    %v4463 = vpop.permute.xlu0 %4462
    %4466 = vset.pattern.permute.xlu0 0
    %4467 = vperm.xlu0 %4466, %v4141
    %v4468 = vpop.permute.xlu0 %4467
    %4471 = vset.pattern.permute.xlu0 0
    %4472 = vperm.xlu0 %4471, %v4142
    %v4473 = vpop.permute.xlu0 %4472
    %4476 = vset.pattern.permute.xlu0 0
    %4477 = vperm.xlu0 %4476, %v4143
    %v4478 = vpop.permute.xlu0 %4477
    %4481 = vset.pattern.permute.xlu0 0
    %4482 = vperm.xlu0 %4481, %v4144
    %v4483 = vpop.permute.xlu0 %4482
    %4486 = vset.pattern.permute.xlu0 0
    %4487 = vperm.xlu0 %4486, %v4145
    %v4488 = vpop.permute.xlu0 %4487
    %4491 = vset.pattern.permute.xlu0 0
    %4492 = vperm.xlu0 %4491, %v4146
    %v4493 = vpop.permute.xlu0 %4492
    %4496 = vset.pattern.permute.xlu0 0
    %4497 = vperm.xlu0 %4496, %v4147
    %v4498 = vpop.permute.xlu0 %4497
    %4501 = vset.pattern.permute.xlu0 0
    %4502 = vperm.xlu0 %4501, %v4148
    %v4503 = vpop.permute.xlu0 %4502
    %4506 = vset.pattern.permute.xlu0 0
    %4507 = vperm.xlu0 %4506, %v4149
    %v4508 = vpop.permute.xlu0 %4507
    %4511 = vset.pattern.permute.xlu0 0
    %4512 = vperm.xlu0 %4511, %v4150
    %v4513 = vpop.permute.xlu0 %4512
    %4516 = vset.pattern.permute.xlu0 0
    %4517 = vperm.xlu0 %4516, %v4151
    %v4518 = vpop.permute.xlu0 %4517
    %4521 = vset.pattern.permute.xlu0 0
    %4522 = vperm.xlu0 %4521, %v4152
    %v4523 = vpop.permute.xlu0 %4522
    %4526 = vset.pattern.permute.xlu0 0
    %4527 = vperm.xlu0 %4526, %v4153
    %v4528 = vpop.permute.xlu0 %4527
    %4531 = vset.pattern.permute.xlu0 0
    %4532 = vperm.xlu0 %4531, %v4154
    %v4533 = vpop.permute.xlu0 %4532
    %4536 = vset.pattern.permute.xlu0 0
    %4537 = vperm.xlu0 %4536, %v4155
    %v4538 = vpop.permute.xlu0 %4537
    %4541 = vset.pattern.permute.xlu0 0
    %4542 = vperm.xlu0 %4541, %v4156
    %v4543 = vpop.permute.xlu0 %4542
    %4546 = vset.pattern.permute.xlu0 0
    %4547 = vperm.xlu0 %4546, %v4157
    %v4548 = vpop.permute.xlu0 %4547
    %4551 = vset.pattern.permute.xlu0 0
    %4552 = vperm.xlu0 %4551, %v4158
    %v4553 = vpop.permute.xlu0 %4552
    %4556 = vset.pattern.permute.xlu0 0
    %4557 = vperm.xlu0 %4556, %v4159
    %v4558 = vpop.permute.xlu0 %4557
    %4561 = vset.pattern.permute.xlu0 0
    %4562 = vperm.xlu0 %4561, %v4160
    %v4563 = vpop.permute.xlu0 %4562
    %4566 = vset.pattern.permute.xlu0 0
    %4567 = vperm.xlu0 %4566, %v4161
    %v4568 = vpop.permute.xlu0 %4567
    %4571 = vset.pattern.permute.xlu0 0
    %4572 = vperm.xlu0 %4571, %v4162
    %v4573 = vpop.permute.xlu0 %4572
    %4576 = vset.pattern.permute.xlu0 0
    %4577 = vperm.xlu0 %4576, %v4163
    %v4578 = vpop.permute.xlu0 %4577
    %4581 = vset.pattern.permute.xlu0 0
    %4582 = vperm.xlu0 %4581, %v4164
    %v4583 = vpop.permute.xlu0 %4582
    %4586 = vset.pattern.permute.xlu0 0
    %4587 = vperm.xlu0 %4586, %v4165
    %v4588 = vpop.permute.xlu0 %4587
    %4591 = vset.pattern.permute.xlu0 0
    %4592 = vperm.xlu0 %4591, %v4166
    %v4593 = vpop.permute.xlu0 %4592
    %4596 = vset.pattern.permute.xlu0 0
    %4597 = vperm.xlu0 %4596, %v4167
    %v4598 = vpop.permute.xlu0 %4597
    %4601 = vset.pattern.permute.xlu0 0
    %4602 = vperm.xlu0 %4601, %v4168
    %v4603 = vpop.permute.xlu0 %4602
    %4606 = vset.pattern.permute.xlu0 0
    %4607 = vperm.xlu0 %4606, %v4169
    %v4608 = vpop.permute.xlu0 %4607
    %4611 = vset.pattern.permute.xlu0 0
    %4612 = vperm.xlu0 %4611, %v4170
    %v4613 = vpop.permute.xlu0 %4612
    %4616 = vset.pattern.permute.xlu0 0
    %4617 = vperm.xlu0 %4616, %v4171
    %v4618 = vpop.permute.xlu0 %4617
    %4621 = vset.pattern.permute.xlu0 0
    %4622 = vperm.xlu0 %4621, %v4172
    %v4623 = vpop.permute.xlu0 %4622
    %4626 = vset.pattern.permute.xlu0 0
    %4627 = vperm.xlu0 %4626, %v4173
    %v4628 = vpop.permute.xlu0 %4627
    %4631 = vset.pattern.permute.xlu0 0
    %4632 = vperm.xlu0 %4631, %v4174
    %v4633 = vpop.permute.xlu0 %4632
    %4636 = vset.pattern.permute.xlu0 0
    %4637 = vperm.xlu0 %4636, %v4175
    %v4638 = vpop.permute.xlu0 %4637
    %4641 = vset.pattern.permute.xlu0 0
    %4642 = vperm.xlu0 %4641, %v4176
    %v4643 = vpop.permute.xlu0 %4642
    %4646 = vset.pattern.permute.xlu0 0
    %4647 = vperm.xlu0 %4646, %v4177
    %v4648 = vpop.permute.xlu0 %4647
    %4651 = vset.pattern.permute.xlu0 0
    %4652 = vperm.xlu0 %4651, %v4178
    %v4653 = vpop.permute.xlu0 %4652
    %4656 = vset.pattern.permute.xlu0 0
    %4657 = vperm.xlu0 %4656, %v4179
    %v4658 = vpop.permute.xlu0 %4657
    %v4660 = vmul.f32 %v566, %v4363
    %v4661 = vmul.f32 %v568, %v4363
    %v4662 = vmul.f32 %v991, %v4363
    %v4663 = vmul.f32 %v993, %v4363
    %v4664 = vmul.f32 %v1416, %v4363
    %v4665 = vmul.f32 %v1418, %v4363
    %v4666 = vmul.f32 %v1841, %v4363
    %v4667 = vmul.f32 %v572, %v4368
    %v4668 = vmul.f32 %v574, %v4368
    %v4669 = vmul.f32 %v997, %v4368
    %v4670 = vmul.f32 %v999, %v4368
    %v4671 = vmul.f32 %v1422, %v4368
    %v4672 = vmul.f32 %v1424, %v4368
    %v4673 = vmul.f32 %v1846, %v4368
    %v4674 = vmul.f32 %v578, %v4373
    %v4675 = vmul.f32 %v580, %v4373
    %v4676 = vmul.f32 %v1003, %v4373
    %v4677 = vmul.f32 %v1005, %v4373
    %v4678 = vmul.f32 %v1428, %v4373
    %v4679 = vmul.f32 %v1430, %v4373
    %v4680 = vmul.f32 %v1851, %v4373
    %v4681 = vmul.f32 %v584, %v4378
    %v4682 = vmul.f32 %v586, %v4378
    %v4683 = vmul.f32 %v1009, %v4378
    %v4684 = vmul.f32 %v1011, %v4378
    %v4685 = vmul.f32 %v1434, %v4378
    %v4686 = vmul.f32 %v1436, %v4378
    %v4687 = vmul.f32 %v1856, %v4378
    %v4688 = vmul.f32 %v590, %v4383
    %v4689 = vmul.f32 %v592, %v4383
    %v4690 = vmul.f32 %v1015, %v4383
    %v4691 = vmul.f32 %v1017, %v4383
    %v4692 = vmul.f32 %v1440, %v4383
    %v4693 = vmul.f32 %v1442, %v4383
    %v4694 = vmul.f32 %v1861, %v4383
    %v4695 = vmul.f32 %v596, %v4388
    %v4696 = vmul.f32 %v598, %v4388
    %v4697 = vmul.f32 %v1021, %v4388
    %v4698 = vmul.f32 %v1023, %v4388
    %v4699 = vmul.f32 %v1446, %v4388
    %v4700 = vmul.f32 %v1448, %v4388
    %v4701 = vmul.f32 %v1866, %v4388
    %v4702 = vmul.f32 %v602, %v4393
    %v4703 = vmul.f32 %v604, %v4393
    %v4704 = vmul.f32 %v1027, %v4393
    %v4705 = vmul.f32 %v1029, %v4393
    %v4706 = vmul.f32 %v1452, %v4393
    %v4707 = vmul.f32 %v1454, %v4393
    %v4708 = vmul.f32 %v1871, %v4393
    %v4709 = vmul.f32 %v608, %v4398
    %v4710 = vmul.f32 %v610, %v4398
    %v4711 = vmul.f32 %v1033, %v4398
    %v4712 = vmul.f32 %v1035, %v4398
    %v4713 = vmul.f32 %v1458, %v4398
    %v4714 = vmul.f32 %v1460, %v4398
    %v4715 = vmul.f32 %v1876, %v4398
    %v4716 = vmul.f32 %v614, %v4403
    %v4717 = vmul.f32 %v616, %v4403
    %v4718 = vmul.f32 %v1039, %v4403
    %v4719 = vmul.f32 %v1041, %v4403
    %v4720 = vmul.f32 %v1464, %v4403
    %v4721 = vmul.f32 %v1466, %v4403
    %v4722 = vmul.f32 %v1881, %v4403
    %v4723 = vmul.f32 %v620, %v4408
    %v4724 = vmul.f32 %v622, %v4408
    %v4725 = vmul.f32 %v1045, %v4408
    %v4726 = vmul.f32 %v1047, %v4408
    %v4727 = vmul.f32 %v1470, %v4408
    %v4728 = vmul.f32 %v1472, %v4408
    %v4729 = vmul.f32 %v1886, %v4408
    %v4730 = vmul.f32 %v626, %v4413
    %v4731 = vmul.f32 %v628, %v4413
    %v4732 = vmul.f32 %v1051, %v4413
    %v4733 = vmul.f32 %v1053, %v4413
    %v4734 = vmul.f32 %v1476, %v4413
    %v4735 = vmul.f32 %v1478, %v4413
    %v4736 = vmul.f32 %v1891, %v4413
    %v4737 = vmul.f32 %v632, %v4418
    %v4738 = vmul.f32 %v634, %v4418
    %v4739 = vmul.f32 %v1057, %v4418
    %v4740 = vmul.f32 %v1059, %v4418
    %v4741 = vmul.f32 %v1482, %v4418
    %v4742 = vmul.f32 %v1484, %v4418
    %v4743 = vmul.f32 %v1896, %v4418
    %v4744 = vmul.f32 %v638, %v4423
    %v4745 = vmul.f32 %v640, %v4423
    %v4746 = vmul.f32 %v1063, %v4423
    %v4747 = vmul.f32 %v1065, %v4423
    %v4748 = vmul.f32 %v1488, %v4423
    %v4749 = vmul.f32 %v1490, %v4423
    %v4750 = vmul.f32 %v1901, %v4423
    %v4751 = vmul.f32 %v644, %v4428
    %v4752 = vmul.f32 %v646, %v4428
    %v4753 = vmul.f32 %v1069, %v4428
    %v4754 = vmul.f32 %v1071, %v4428
    %v4755 = vmul.f32 %v1494, %v4428
    %v4756 = vmul.f32 %v1496, %v4428
    %v4757 = vmul.f32 %v1906, %v4428
    %v4758 = vmul.f32 %v650, %v4433
    %v4759 = vmul.f32 %v652, %v4433
    %v4760 = vmul.f32 %v1075, %v4433
    %v4761 = vmul.f32 %v1077, %v4433
    %v4762 = vmul.f32 %v1500, %v4433
    %v4763 = vmul.f32 %v1502, %v4433
    %v4764 = vmul.f32 %v1911, %v4433
    %v4765 = vmul.f32 %v656, %v4438
    %v4766 = vmul.f32 %v658, %v4438
    %v4767 = vmul.f32 %v1081, %v4438
    %v4768 = vmul.f32 %v1083, %v4438
    %v4769 = vmul.f32 %v1506, %v4438
    %v4770 = vmul.f32 %v1508, %v4438
    %v4771 = vmul.f32 %v1916, %v4438
    %v4772 = vmul.f32 %v662, %v4443
    %v4773 = vmul.f32 %v664, %v4443
    %v4774 = vmul.f32 %v1087, %v4443
    %v4775 = vmul.f32 %v1089, %v4443
    %v4776 = vmul.f32 %v1512, %v4443
    %v4777 = vmul.f32 %v1514, %v4443
    %v4778 = vmul.f32 %v1921, %v4443
    %v4779 = vmul.f32 %v668, %v4448
    %v4780 = vmul.f32 %v670, %v4448
    %v4781 = vmul.f32 %v1093, %v4448
    %v4782 = vmul.f32 %v1095, %v4448
    %v4783 = vmul.f32 %v1518, %v4448
    %v4784 = vmul.f32 %v1520, %v4448
    %v4785 = vmul.f32 %v1926, %v4448
    %v4786 = vmul.f32 %v674, %v4453
    %v4787 = vmul.f32 %v676, %v4453
    %v4788 = vmul.f32 %v1099, %v4453
    %v4789 = vmul.f32 %v1101, %v4453
    %v4790 = vmul.f32 %v1524, %v4453
    %v4791 = vmul.f32 %v1526, %v4453
    %v4792 = vmul.f32 %v1931, %v4453
    %v4793 = vmul.f32 %v680, %v4458
    %v4794 = vmul.f32 %v682, %v4458
    %v4795 = vmul.f32 %v1105, %v4458
    %v4796 = vmul.f32 %v1107, %v4458
    %v4797 = vmul.f32 %v1530, %v4458
    %v4798 = vmul.f32 %v1532, %v4458
    %v4799 = vmul.f32 %v1936, %v4458
    %v4800 = vmul.f32 %v686, %v4463
    %v4801 = vmul.f32 %v688, %v4463
    %v4802 = vmul.f32 %v1111, %v4463
    %v4803 = vmul.f32 %v1113, %v4463
    %v4804 = vmul.f32 %v1536, %v4463
    %v4805 = vmul.f32 %v1538, %v4463
    %v4806 = vmul.f32 %v1941, %v4463
    %v4807 = vmul.f32 %v692, %v4468
    %v4808 = vmul.f32 %v694, %v4468
    %v4809 = vmul.f32 %v1117, %v4468
    %v4810 = vmul.f32 %v1119, %v4468
    %v4811 = vmul.f32 %v1542, %v4468
    %v4812 = vmul.f32 %v1544, %v4468
    %v4813 = vmul.f32 %v1946, %v4468
    %v4814 = vmul.f32 %v698, %v4473
    %v4815 = vmul.f32 %v700, %v4473
    %v4816 = vmul.f32 %v1123, %v4473
    %v4817 = vmul.f32 %v1125, %v4473
    %v4818 = vmul.f32 %v1548, %v4473
    %v4819 = vmul.f32 %v1550, %v4473
    %v4820 = vmul.f32 %v1951, %v4473
    %v4821 = vmul.f32 %v704, %v4478
    %v4822 = vmul.f32 %v706, %v4478
    %v4823 = vmul.f32 %v1129, %v4478
    %v4824 = vmul.f32 %v1131, %v4478
    %v4825 = vmul.f32 %v1554, %v4478
    %v4826 = vmul.f32 %v1556, %v4478
    %v4827 = vmul.f32 %v1956, %v4478
    %v4828 = vmul.f32 %v710, %v4483
    %v4829 = vmul.f32 %v712, %v4483
    %v4830 = vmul.f32 %v1135, %v4483
    %v4831 = vmul.f32 %v1137, %v4483
    %v4832 = vmul.f32 %v1560, %v4483
    %v4833 = vmul.f32 %v1562, %v4483
    %v4834 = vmul.f32 %v1961, %v4483
    %v4835 = vmul.f32 %v716, %v4488
    %v4836 = vmul.f32 %v718, %v4488
    %v4837 = vmul.f32 %v1141, %v4488
    %v4838 = vmul.f32 %v1143, %v4488
    %v4839 = vmul.f32 %v1566, %v4488
    %v4840 = vmul.f32 %v1568, %v4488
    %v4841 = vmul.f32 %v1966, %v4488
    %v4842 = vmul.f32 %v722, %v4493
    %v4843 = vmul.f32 %v724, %v4493
    %v4844 = vmul.f32 %v1147, %v4493
    %v4845 = vmul.f32 %v1149, %v4493
    %v4846 = vmul.f32 %v1572, %v4493
    %v4847 = vmul.f32 %v1574, %v4493
    %v4848 = vmul.f32 %v1971, %v4493
    %v4849 = vmul.f32 %v728, %v4498
    %v4850 = vmul.f32 %v730, %v4498
    %v4851 = vmul.f32 %v1153, %v4498
    %v4852 = vmul.f32 %v1155, %v4498
    %v4853 = vmul.f32 %v1578, %v4498
    %v4854 = vmul.f32 %v1580, %v4498
    %v4855 = vmul.f32 %v1976, %v4498
    %v4856 = vmul.f32 %v734, %v4503
    %v4857 = vmul.f32 %v736, %v4503
    %v4858 = vmul.f32 %v1159, %v4503
    %v4859 = vmul.f32 %v1161, %v4503
    %v4860 = vmul.f32 %v1584, %v4503
    %v4861 = vmul.f32 %v1586, %v4503
    %v4862 = vmul.f32 %v1981, %v4503
    %v4863 = vmul.f32 %v740, %v4508
    %v4864 = vmul.f32 %v742, %v4508
    %v4865 = vmul.f32 %v1165, %v4508
    %v4866 = vmul.f32 %v1167, %v4508
    %v4867 = vmul.f32 %v1590, %v4508
    %v4868 = vmul.f32 %v1592, %v4508
    %v4869 = vmul.f32 %v1986, %v4508
    %v4870 = vmul.f32 %v746, %v4513
    %v4871 = vmul.f32 %v748, %v4513
    %v4872 = vmul.f32 %v1171, %v4513
    %v4873 = vmul.f32 %v1173, %v4513
    %v4874 = vmul.f32 %v1596, %v4513
    %v4875 = vmul.f32 %v1598, %v4513
    %v4876 = vmul.f32 %v1991, %v4513
    %v4877 = vmul.f32 %v752, %v4518
    %v4878 = vmul.f32 %v754, %v4518
    %v4879 = vmul.f32 %v1177, %v4518
    %v4880 = vmul.f32 %v1179, %v4518
    %v4881 = vmul.f32 %v1602, %v4518
    %v4882 = vmul.f32 %v1604, %v4518
    %v4883 = vmul.f32 %v1996, %v4518
    %v4884 = vmul.f32 %v758, %v4523
    %v4885 = vmul.f32 %v760, %v4523
    %v4886 = vmul.f32 %v1183, %v4523
    %v4887 = vmul.f32 %v1185, %v4523
    %v4888 = vmul.f32 %v1608, %v4523
    %v4889 = vmul.f32 %v1610, %v4523
    %v4890 = vmul.f32 %v2001, %v4523
    %v4891 = vmul.f32 %v764, %v4528
    %v4892 = vmul.f32 %v766, %v4528
    %v4893 = vmul.f32 %v1189, %v4528
    %v4894 = vmul.f32 %v1191, %v4528
    %v4895 = vmul.f32 %v1614, %v4528
    %v4896 = vmul.f32 %v1616, %v4528
    %v4897 = vmul.f32 %v2006, %v4528
    %v4898 = vmul.f32 %v770, %v4533
    %v4899 = vmul.f32 %v772, %v4533
    %v4900 = vmul.f32 %v1195, %v4533
    %v4901 = vmul.f32 %v1197, %v4533
    %v4902 = vmul.f32 %v1620, %v4533
    %v4903 = vmul.f32 %v1622, %v4533
    %v4904 = vmul.f32 %v2011, %v4533
    %v4905 = vmul.f32 %v776, %v4538
    %v4906 = vmul.f32 %v778, %v4538
    %v4907 = vmul.f32 %v1201, %v4538
    %v4908 = vmul.f32 %v1203, %v4538
    %v4909 = vmul.f32 %v1626, %v4538
    %v4910 = vmul.f32 %v1628, %v4538
    %v4911 = vmul.f32 %v2016, %v4538
    %v4912 = vmul.f32 %v782, %v4543
    %v4913 = vmul.f32 %v784, %v4543
    %v4914 = vmul.f32 %v1207, %v4543
    %v4915 = vmul.f32 %v1209, %v4543
    %v4916 = vmul.f32 %v1632, %v4543
    %v4917 = vmul.f32 %v1634, %v4543
    %v4918 = vmul.f32 %v2021, %v4543
    %v4919 = vmul.f32 %v788, %v4548
    %v4920 = vmul.f32 %v790, %v4548
    %v4921 = vmul.f32 %v1213, %v4548
    %v4922 = vmul.f32 %v1215, %v4548
    %v4923 = vmul.f32 %v1638, %v4548
    %v4924 = vmul.f32 %v1640, %v4548
    %v4925 = vmul.f32 %v2026, %v4548
    %v4926 = vmul.f32 %v794, %v4553
    %v4927 = vmul.f32 %v796, %v4553
    %v4928 = vmul.f32 %v1219, %v4553
    %v4929 = vmul.f32 %v1221, %v4553
    %v4930 = vmul.f32 %v1644, %v4553
    %v4931 = vmul.f32 %v1646, %v4553
    %v4932 = vmul.f32 %v2031, %v4553
    %v4933 = vmul.f32 %v800, %v4558
    %v4934 = vmul.f32 %v802, %v4558
    %v4935 = vmul.f32 %v1225, %v4558
    %v4936 = vmul.f32 %v1227, %v4558
    %v4937 = vmul.f32 %v1650, %v4558
    %v4938 = vmul.f32 %v1652, %v4558
    %v4939 = vmul.f32 %v2036, %v4558
    %v4940 = vmul.f32 %v806, %v4563
    %v4941 = vmul.f32 %v808, %v4563
    %v4942 = vmul.f32 %v1231, %v4563
    %v4943 = vmul.f32 %v1233, %v4563
    %v4944 = vmul.f32 %v1656, %v4563
    %v4945 = vmul.f32 %v1658, %v4563
    %v4946 = vmul.f32 %v2041, %v4563
    %v4947 = vmul.f32 %v812, %v4568
    %v4948 = vmul.f32 %v814, %v4568
    %v4949 = vmul.f32 %v1237, %v4568
    %v4950 = vmul.f32 %v1239, %v4568
    %v4951 = vmul.f32 %v1662, %v4568
    %v4952 = vmul.f32 %v1664, %v4568
    %v4953 = vmul.f32 %v2046, %v4568
    %v4954 = vmul.f32 %v818, %v4573
    %v4955 = vmul.f32 %v820, %v4573
    %v4956 = vmul.f32 %v1243, %v4573
    %v4957 = vmul.f32 %v1245, %v4573
    %v4958 = vmul.f32 %v1668, %v4573
    %v4959 = vmul.f32 %v1670, %v4573
    %v4960 = vmul.f32 %v2051, %v4573
    %v4961 = vmul.f32 %v824, %v4578
    %v4962 = vmul.f32 %v826, %v4578
    %v4963 = vmul.f32 %v1249, %v4578
    %v4964 = vmul.f32 %v1251, %v4578
    %v4965 = vmul.f32 %v1674, %v4578
    %v4966 = vmul.f32 %v1676, %v4578
    %v4967 = vmul.f32 %v2056, %v4578
    %v4968 = vmul.f32 %v830, %v4583
    %v4969 = vmul.f32 %v832, %v4583
    %v4970 = vmul.f32 %v1255, %v4583
    %v4971 = vmul.f32 %v1257, %v4583
    %v4972 = vmul.f32 %v1680, %v4583
    %v4973 = vmul.f32 %v1682, %v4583
    %v4974 = vmul.f32 %v2061, %v4583
    %v4975 = vmul.f32 %v836, %v4588
    %v4976 = vmul.f32 %v838, %v4588
    %v4977 = vmul.f32 %v1261, %v4588
    %v4978 = vmul.f32 %v1263, %v4588
    %v4979 = vmul.f32 %v1686, %v4588
    %v4980 = vmul.f32 %v1688, %v4588
    %v4981 = vmul.f32 %v2066, %v4588
    %v4982 = vmul.f32 %v842, %v4593
    %v4983 = vmul.f32 %v844, %v4593
    %v4984 = vmul.f32 %v1267, %v4593
    %v4985 = vmul.f32 %v1269, %v4593
    %v4986 = vmul.f32 %v1692, %v4593
    %v4987 = vmul.f32 %v1694, %v4593
    %v4988 = vmul.f32 %v2071, %v4593
    %v4989 = vmul.f32 %v848, %v4598
    %v4990 = vmul.f32 %v850, %v4598
    %v4991 = vmul.f32 %v1273, %v4598
    %v4992 = vmul.f32 %v1275, %v4598
    %v4993 = vmul.f32 %v1698, %v4598
    %v4994 = vmul.f32 %v1700, %v4598
    %v4995 = vmul.f32 %v2076, %v4598
    %v4996 = vmul.f32 %v854, %v4603
    %v4997 = vmul.f32 %v856, %v4603
    %v4998 = vmul.f32 %v1279, %v4603
    %v4999 = vmul.f32 %v1281, %v4603
    %v5000 = vmul.f32 %v1704, %v4603
    %v5001 = vmul.f32 %v1706, %v4603
    %v5002 = vmul.f32 %v2081, %v4603
    %v5003 = vmul.f32 %v860, %v4608
    %v5004 = vmul.f32 %v862, %v4608
    %v5005 = vmul.f32 %v1285, %v4608
    %v5006 = vmul.f32 %v1287, %v4608
    %v5007 = vmul.f32 %v1710, %v4608
    %v5008 = vmul.f32 %v1712, %v4608
    %v5009 = vmul.f32 %v2086, %v4608
    %v5010 = vmul.f32 %v866, %v4613
    %v5011 = vmul.f32 %v868, %v4613
    %v5012 = vmul.f32 %v1291, %v4613
    %v5013 = vmul.f32 %v1293, %v4613
    %v5014 = vmul.f32 %v1716, %v4613
    %v5015 = vmul.f32 %v1718, %v4613
    %v5016 = vmul.f32 %v2091, %v4613
    %v5017 = vmul.f32 %v872, %v4618
    %v5018 = vmul.f32 %v874, %v4618
    %v5019 = vmul.f32 %v1297, %v4618
    %v5020 = vmul.f32 %v1299, %v4618
    %v5021 = vmul.f32 %v1722, %v4618
    %v5022 = vmul.f32 %v1724, %v4618
    %v5023 = vmul.f32 %v2096, %v4618
    %v5024 = vmul.f32 %v878, %v4623
    %v5025 = vmul.f32 %v880, %v4623
    %v5026 = vmul.f32 %v1303, %v4623
    %v5027 = vmul.f32 %v1305, %v4623
    %v5028 = vmul.f32 %v1728, %v4623
    %v5029 = vmul.f32 %v1730, %v4623
    %v5030 = vmul.f32 %v2101, %v4623
    %v5031 = vmul.f32 %v884, %v4628
    %v5032 = vmul.f32 %v886, %v4628
    %v5033 = vmul.f32 %v1309, %v4628
    %v5034 = vmul.f32 %v1311, %v4628
    %v5035 = vmul.f32 %v1734, %v4628
    %v5036 = vmul.f32 %v1736, %v4628
    %v5037 = vmul.f32 %v2106, %v4628
    %v5038 = vmul.f32 %v890, %v4633
    %v5039 = vmul.f32 %v892, %v4633
    %v5040 = vmul.f32 %v1315, %v4633
    %v5041 = vmul.f32 %v1317, %v4633
    %v5042 = vmul.f32 %v1740, %v4633
    %v5043 = vmul.f32 %v1742, %v4633
    %v5044 = vmul.f32 %v2111, %v4633
    %v5045 = vmul.f32 %v896, %v4638
    %v5046 = vmul.f32 %v898, %v4638
    %v5047 = vmul.f32 %v1321, %v4638
    %v5048 = vmul.f32 %v1323, %v4638
    %v5049 = vmul.f32 %v1746, %v4638
    %v5050 = vmul.f32 %v1748, %v4638
    %v5051 = vmul.f32 %v2116, %v4638
    %v5052 = vmul.f32 %v902, %v4643
    %v5053 = vmul.f32 %v904, %v4643
    %v5054 = vmul.f32 %v1327, %v4643
    %v5055 = vmul.f32 %v1329, %v4643
    %v5056 = vmul.f32 %v1752, %v4643
    %v5057 = vmul.f32 %v1754, %v4643
    %v5058 = vmul.f32 %v2121, %v4643
    %v5059 = vmul.f32 %v908, %v4648
    %v5060 = vmul.f32 %v910, %v4648
    %v5061 = vmul.f32 %v1333, %v4648
    %v5062 = vmul.f32 %v1335, %v4648
    %v5063 = vmul.f32 %v1758, %v4648
    %v5064 = vmul.f32 %v1760, %v4648
    %v5065 = vmul.f32 %v2126, %v4648
    %v5066 = vmul.f32 %v914, %v4653
    %v5067 = vmul.f32 %v916, %v4653
    %v5068 = vmul.f32 %v1339, %v4653
    %v5069 = vmul.f32 %v1341, %v4653
    %v5070 = vmul.f32 %v1764, %v4653
    %v5071 = vmul.f32 %v1766, %v4653
    %v5072 = vmul.f32 %v2131, %v4653
    %v5073 = vmul.f32 %v920, %v4658
    %v5074 = vmul.f32 %v922, %v4658
    %v5075 = vmul.f32 %v1345, %v4658
    %v5076 = vmul.f32 %v1347, %v4658
    %v5077 = vmul.f32 %v1770, %v4658
    %v5078 = vmul.f32 %v1772, %v4658
    %v5079 = vmul.f32 %v2136, %v4658
    %5081 = vset.pattern.permute.xlu0 0
    %5082 = vperm.xlu0 %5081, %v4300
    %v5083 = vpop.permute.xlu0 %5082
    %5086 = vset.pattern.permute.xlu0 0
    %5087 = vperm.xlu0 %5086, %v4301
    %v5088 = vpop.permute.xlu0 %5087
    %5091 = vset.pattern.permute.xlu0 0
    %5092 = vperm.xlu0 %5091, %v4302
    %v5093 = vpop.permute.xlu0 %5092
    %5096 = vset.pattern.permute.xlu0 0
    %5097 = vperm.xlu0 %5096, %v4303
    %v5098 = vpop.permute.xlu0 %5097
    %5101 = vset.pattern.permute.xlu0 0
    %5102 = vperm.xlu0 %5101, %v4304
    %v5103 = vpop.permute.xlu0 %5102
    %5106 = vset.pattern.permute.xlu0 0
    %5107 = vperm.xlu0 %5106, %v4305
    %v5108 = vpop.permute.xlu0 %5107
    %5111 = vset.pattern.permute.xlu0 0
    %5112 = vperm.xlu0 %5111, %v4306
    %v5113 = vpop.permute.xlu0 %5112
    %5116 = vset.pattern.permute.xlu0 0
    %5117 = vperm.xlu0 %5116, %v4307
    %v5118 = vpop.permute.xlu0 %5117
    %5121 = vset.pattern.permute.xlu0 0
    %5122 = vperm.xlu0 %5121, %v4308
    %v5123 = vpop.permute.xlu0 %5122
    %5126 = vset.pattern.permute.xlu0 0
    %5127 = vperm.xlu0 %5126, %v4309
    %v5128 = vpop.permute.xlu0 %5127
    %5131 = vset.pattern.permute.xlu0 0
    %5132 = vperm.xlu0 %5131, %v4310
    %v5133 = vpop.permute.xlu0 %5132
    %5136 = vset.pattern.permute.xlu0 0
    %5137 = vperm.xlu0 %5136, %v4311
    %v5138 = vpop.permute.xlu0 %5137
    %5141 = vset.pattern.permute.xlu0 0
    %5142 = vperm.xlu0 %5141, %v4312
    %v5143 = vpop.permute.xlu0 %5142
    %5146 = vset.pattern.permute.xlu0 0
    %5147 = vperm.xlu0 %5146, %v4313
    %v5148 = vpop.permute.xlu0 %5147
    %5151 = vset.pattern.permute.xlu0 0
    %5152 = vperm.xlu0 %5151, %v4314
    %v5153 = vpop.permute.xlu0 %5152
    %5156 = vset.pattern.permute.xlu0 0
    %5157 = vperm.xlu0 %5156, %v4315
    %v5158 = vpop.permute.xlu0 %5157
    %5161 = vset.pattern.permute.xlu0 0
    %5162 = vperm.xlu0 %5161, %v4316
    %v5163 = vpop.permute.xlu0 %5162
    %5166 = vset.pattern.permute.xlu0 0
    %5167 = vperm.xlu0 %5166, %v4317
    %v5168 = vpop.permute.xlu0 %5167
    %5171 = vset.pattern.permute.xlu0 0
    %5172 = vperm.xlu0 %5171, %v4318
    %v5173 = vpop.permute.xlu0 %5172
    %5176 = vset.pattern.permute.xlu0 0
    %5177 = vperm.xlu0 %5176, %v4319
    %v5178 = vpop.permute.xlu0 %5177
    %5181 = vset.pattern.permute.xlu0 0
    %5182 = vperm.xlu0 %5181, %v4320
    %v5183 = vpop.permute.xlu0 %5182
    %5186 = vset.pattern.permute.xlu0 0
    %5187 = vperm.xlu0 %5186, %v4321
    %v5188 = vpop.permute.xlu0 %5187
    %5191 = vset.pattern.permute.xlu0 0
    %5192 = vperm.xlu0 %5191, %v4322
    %v5193 = vpop.permute.xlu0 %5192
    %5196 = vset.pattern.permute.xlu0 0
    %5197 = vperm.xlu0 %5196, %v4323
    %v5198 = vpop.permute.xlu0 %5197
    %5201 = vset.pattern.permute.xlu0 0
    %5202 = vperm.xlu0 %5201, %v4324
    %v5203 = vpop.permute.xlu0 %5202
    %5206 = vset.pattern.permute.xlu0 0
    %5207 = vperm.xlu0 %5206, %v4325
    %v5208 = vpop.permute.xlu0 %5207
    %5211 = vset.pattern.permute.xlu0 0
    %5212 = vperm.xlu0 %5211, %v4326
    %v5213 = vpop.permute.xlu0 %5212
    %5216 = vset.pattern.permute.xlu0 0
    %5217 = vperm.xlu0 %5216, %v4327
    %v5218 = vpop.permute.xlu0 %5217
    %5221 = vset.pattern.permute.xlu0 0
    %5222 = vperm.xlu0 %5221, %v4328
    %v5223 = vpop.permute.xlu0 %5222
    %5226 = vset.pattern.permute.xlu0 0
    %5227 = vperm.xlu0 %5226, %v4329
    %v5228 = vpop.permute.xlu0 %5227
    %5231 = vset.pattern.permute.xlu0 0
    %5232 = vperm.xlu0 %5231, %v4330
    %v5233 = vpop.permute.xlu0 %5232
    %5236 = vset.pattern.permute.xlu0 0
    %5237 = vperm.xlu0 %5236, %v4331
    %v5238 = vpop.permute.xlu0 %5237
    %5241 = vset.pattern.permute.xlu0 0
    %5242 = vperm.xlu0 %5241, %v4332
    %v5243 = vpop.permute.xlu0 %5242
    %5246 = vset.pattern.permute.xlu0 0
    %5247 = vperm.xlu0 %5246, %v4333
    %v5248 = vpop.permute.xlu0 %5247
    %5251 = vset.pattern.permute.xlu0 0
    %5252 = vperm.xlu0 %5251, %v4334
    %v5253 = vpop.permute.xlu0 %5252
    %5256 = vset.pattern.permute.xlu0 0
    %5257 = vperm.xlu0 %5256, %v4335
    %v5258 = vpop.permute.xlu0 %5257
    %5261 = vset.pattern.permute.xlu0 0
    %5262 = vperm.xlu0 %5261, %v4336
    %v5263 = vpop.permute.xlu0 %5262
    %5266 = vset.pattern.permute.xlu0 0
    %5267 = vperm.xlu0 %5266, %v4337
    %v5268 = vpop.permute.xlu0 %5267
    %5271 = vset.pattern.permute.xlu0 0
    %5272 = vperm.xlu0 %5271, %v4338
    %v5273 = vpop.permute.xlu0 %5272
    %5276 = vset.pattern.permute.xlu0 0
    %5277 = vperm.xlu0 %5276, %v4339
    %v5278 = vpop.permute.xlu0 %5277
    %5281 = vset.pattern.permute.xlu0 0
    %5282 = vperm.xlu0 %5281, %v4340
    %v5283 = vpop.permute.xlu0 %5282
    %5286 = vset.pattern.permute.xlu0 0
    %5287 = vperm.xlu0 %5286, %v4341
    %v5288 = vpop.permute.xlu0 %5287
    %5291 = vset.pattern.permute.xlu0 0
    %5292 = vperm.xlu0 %5291, %v4342
    %v5293 = vpop.permute.xlu0 %5292
    %5296 = vset.pattern.permute.xlu0 0
    %5297 = vperm.xlu0 %5296, %v4343
    %v5298 = vpop.permute.xlu0 %5297
    %5301 = vset.pattern.permute.xlu0 0
    %5302 = vperm.xlu0 %5301, %v4344
    %v5303 = vpop.permute.xlu0 %5302
    %5306 = vset.pattern.permute.xlu0 0
    %5307 = vperm.xlu0 %5306, %v4345
    %v5308 = vpop.permute.xlu0 %5307
    %5311 = vset.pattern.permute.xlu0 0
    %5312 = vperm.xlu0 %5311, %v4346
    %v5313 = vpop.permute.xlu0 %5312
    %5316 = vset.pattern.permute.xlu0 0
    %5317 = vperm.xlu0 %5316, %v4347
    %v5318 = vpop.permute.xlu0 %5317
    %5321 = vset.pattern.permute.xlu0 0
    %5322 = vperm.xlu0 %5321, %v4348
    %v5323 = vpop.permute.xlu0 %5322
    %5326 = vset.pattern.permute.xlu0 0
    %5327 = vperm.xlu0 %5326, %v4349
    %v5328 = vpop.permute.xlu0 %5327
    %5331 = vset.pattern.permute.xlu0 0
    %5332 = vperm.xlu0 %5331, %v4350
    %v5333 = vpop.permute.xlu0 %5332
    %5336 = vset.pattern.permute.xlu0 0
    %5337 = vperm.xlu0 %5336, %v4351
    %v5338 = vpop.permute.xlu0 %5337
    %5341 = vset.pattern.permute.xlu0 0
    %5342 = vperm.xlu0 %5341, %v4352
    %v5343 = vpop.permute.xlu0 %5342
    %5346 = vset.pattern.permute.xlu0 0
    %5347 = vperm.xlu0 %5346, %v4353
    %v5348 = vpop.permute.xlu0 %5347
    %5351 = vset.pattern.permute.xlu0 0
    %5352 = vperm.xlu0 %5351, %v4354
    %v5353 = vpop.permute.xlu0 %5352
    %5356 = vset.pattern.permute.xlu0 0
    %5357 = vperm.xlu0 %5356, %v4355
    %v5358 = vpop.permute.xlu0 %5357
    %5361 = vset.pattern.permute.xlu0 0
    %5362 = vperm.xlu0 %5361, %v4356
    %v5363 = vpop.permute.xlu0 %5362
    %5366 = vset.pattern.permute.xlu0 0
    %5367 = vperm.xlu0 %5366, %v4357
    %v5368 = vpop.permute.xlu0 %5367
    %5371 = vset.pattern.permute.xlu0 0
    %5372 = vperm.xlu0 %5371, %v4358
    %v5373 = vpop.permute.xlu0 %5372
    %5376 = vset.pattern.permute.xlu0 0
    %5377 = vperm.xlu0 %5376, %v4359
    %v5378 = vpop.permute.xlu0 %5377
    %v5380 = vadd.f32 %v4660, %v5083
    %v5381 = vadd.f32 %v4661, %v5083
    %v5382 = vadd.f32 %v4662, %v5083
    %v5383 = vadd.f32 %v4663, %v5083
    %v5384 = vadd.f32 %v4664, %v5083
    %v5385 = vadd.f32 %v4665, %v5083
    %v5386 = vadd.f32 %v4666, %v5083
    %v5387 = vadd.f32 %v4667, %v5088
    %v5388 = vadd.f32 %v4668, %v5088
    %v5389 = vadd.f32 %v4669, %v5088
    %v5390 = vadd.f32 %v4670, %v5088
    %v5391 = vadd.f32 %v4671, %v5088
    %v5392 = vadd.f32 %v4672, %v5088
    %v5393 = vadd.f32 %v4673, %v5088
    %v5394 = vadd.f32 %v4674, %v5093
    %v5395 = vadd.f32 %v4675, %v5093
    %v5396 = vadd.f32 %v4676, %v5093
    %v5397 = vadd.f32 %v4677, %v5093
    %v5398 = vadd.f32 %v4678, %v5093
    %v5399 = vadd.f32 %v4679, %v5093
    %v5400 = vadd.f32 %v4680, %v5093
    %v5401 = vadd.f32 %v4681, %v5098
    %v5402 = vadd.f32 %v4682, %v5098
    %v5403 = vadd.f32 %v4683, %v5098
    %v5404 = vadd.f32 %v4684, %v5098
    %v5405 = vadd.f32 %v4685, %v5098
    %v5406 = vadd.f32 %v4686, %v5098
    %v5407 = vadd.f32 %v4687, %v5098
    %v5408 = vadd.f32 %v4688, %v5103
    %v5409 = vadd.f32 %v4689, %v5103
    %v5410 = vadd.f32 %v4690, %v5103
    %v5411 = vadd.f32 %v4691, %v5103
    %v5412 = vadd.f32 %v4692, %v5103
    %v5413 = vadd.f32 %v4693, %v5103
    %v5414 = vadd.f32 %v4694, %v5103
    %v5415 = vadd.f32 %v4695, %v5108
    %v5416 = vadd.f32 %v4696, %v5108
    %v5417 = vadd.f32 %v4697, %v5108
    %v5418 = vadd.f32 %v4698, %v5108
    %v5419 = vadd.f32 %v4699, %v5108
    %v5420 = vadd.f32 %v4700, %v5108
    %v5421 = vadd.f32 %v4701, %v5108
    %v5422 = vadd.f32 %v4702, %v5113
    %v5423 = vadd.f32 %v4703, %v5113
    %v5424 = vadd.f32 %v4704, %v5113
    %v5425 = vadd.f32 %v4705, %v5113
    %v5426 = vadd.f32 %v4706, %v5113
    %v5427 = vadd.f32 %v4707, %v5113
    %v5428 = vadd.f32 %v4708, %v5113
    %v5429 = vadd.f32 %v4709, %v5118
    %v5430 = vadd.f32 %v4710, %v5118
    %v5431 = vadd.f32 %v4711, %v5118
    %v5432 = vadd.f32 %v4712, %v5118
    %v5433 = vadd.f32 %v4713, %v5118
    %v5434 = vadd.f32 %v4714, %v5118
    %v5435 = vadd.f32 %v4715, %v5118
    %v5436 = vadd.f32 %v4716, %v5123
    %v5437 = vadd.f32 %v4717, %v5123
    %v5438 = vadd.f32 %v4718, %v5123
    %v5439 = vadd.f32 %v4719, %v5123
    %v5440 = vadd.f32 %v4720, %v5123
    %v5441 = vadd.f32 %v4721, %v5123
    %v5442 = vadd.f32 %v4722, %v5123
    %v5443 = vadd.f32 %v4723, %v5128
    %v5444 = vadd.f32 %v4724, %v5128
    %v5445 = vadd.f32 %v4725, %v5128
    %v5446 = vadd.f32 %v4726, %v5128
    %v5447 = vadd.f32 %v4727, %v5128
    %v5448 = vadd.f32 %v4728, %v5128
    %v5449 = vadd.f32 %v4729, %v5128
    %v5450 = vadd.f32 %v4730, %v5133
    %v5451 = vadd.f32 %v4731, %v5133
    %v5452 = vadd.f32 %v4732, %v5133
    %v5453 = vadd.f32 %v4733, %v5133
    %v5454 = vadd.f32 %v4734, %v5133
    %v5455 = vadd.f32 %v4735, %v5133
    %v5456 = vadd.f32 %v4736, %v5133
    %v5457 = vadd.f32 %v4737, %v5138
    %v5458 = vadd.f32 %v4738, %v5138
    %v5459 = vadd.f32 %v4739, %v5138
    %v5460 = vadd.f32 %v4740, %v5138
    %v5461 = vadd.f32 %v4741, %v5138
    %v5462 = vadd.f32 %v4742, %v5138
    %v5463 = vadd.f32 %v4743, %v5138
    %v5464 = vadd.f32 %v4744, %v5143
    %v5465 = vadd.f32 %v4745, %v5143
    %v5466 = vadd.f32 %v4746, %v5143
    %v5467 = vadd.f32 %v4747, %v5143
    %v5468 = vadd.f32 %v4748, %v5143
    %v5469 = vadd.f32 %v4749, %v5143
    %v5470 = vadd.f32 %v4750, %v5143
    %v5471 = vadd.f32 %v4751, %v5148
    %v5472 = vadd.f32 %v4752, %v5148
    %v5473 = vadd.f32 %v4753, %v5148
    %v5474 = vadd.f32 %v4754, %v5148
    %v5475 = vadd.f32 %v4755, %v5148
    %v5476 = vadd.f32 %v4756, %v5148
    %v5477 = vadd.f32 %v4757, %v5148
    %v5478 = vadd.f32 %v4758, %v5153
    %v5479 = vadd.f32 %v4759, %v5153
    %v5480 = vadd.f32 %v4760, %v5153
    %v5481 = vadd.f32 %v4761, %v5153
    %v5482 = vadd.f32 %v4762, %v5153
    %v5483 = vadd.f32 %v4763, %v5153
    %v5484 = vadd.f32 %v4764, %v5153
    %v5485 = vadd.f32 %v4765, %v5158
    %v5486 = vadd.f32 %v4766, %v5158
    %v5487 = vadd.f32 %v4767, %v5158
    %v5488 = vadd.f32 %v4768, %v5158
    %v5489 = vadd.f32 %v4769, %v5158
    %v5490 = vadd.f32 %v4770, %v5158
    %v5491 = vadd.f32 %v4771, %v5158
    %v5492 = vadd.f32 %v4772, %v5163
    %v5493 = vadd.f32 %v4773, %v5163
    %v5494 = vadd.f32 %v4774, %v5163
    %v5495 = vadd.f32 %v4775, %v5163
    %v5496 = vadd.f32 %v4776, %v5163
    %v5497 = vadd.f32 %v4777, %v5163
    %v5498 = vadd.f32 %v4778, %v5163
    %v5499 = vadd.f32 %v4779, %v5168
    %v5500 = vadd.f32 %v4780, %v5168
    %v5501 = vadd.f32 %v4781, %v5168
    %v5502 = vadd.f32 %v4782, %v5168
    %v5503 = vadd.f32 %v4783, %v5168
    %v5504 = vadd.f32 %v4784, %v5168
    %v5505 = vadd.f32 %v4785, %v5168
    %v5506 = vadd.f32 %v4786, %v5173
    %v5507 = vadd.f32 %v4787, %v5173
    %v5508 = vadd.f32 %v4788, %v5173
    %v5509 = vadd.f32 %v4789, %v5173
    %v5510 = vadd.f32 %v4790, %v5173
    %v5511 = vadd.f32 %v4791, %v5173
    %v5512 = vadd.f32 %v4792, %v5173
    %v5513 = vadd.f32 %v4793, %v5178
    %v5514 = vadd.f32 %v4794, %v5178
    %v5515 = vadd.f32 %v4795, %v5178
    %v5516 = vadd.f32 %v4796, %v5178
    %v5517 = vadd.f32 %v4797, %v5178
    %v5518 = vadd.f32 %v4798, %v5178
    %v5519 = vadd.f32 %v4799, %v5178
    %v5520 = vadd.f32 %v4800, %v5183
    %v5521 = vadd.f32 %v4801, %v5183
    %v5522 = vadd.f32 %v4802, %v5183
    %v5523 = vadd.f32 %v4803, %v5183
    %v5524 = vadd.f32 %v4804, %v5183
    %v5525 = vadd.f32 %v4805, %v5183
    %v5526 = vadd.f32 %v4806, %v5183
    %v5527 = vadd.f32 %v4807, %v5188
    %v5528 = vadd.f32 %v4808, %v5188
    %v5529 = vadd.f32 %v4809, %v5188
    %v5530 = vadd.f32 %v4810, %v5188
    %v5531 = vadd.f32 %v4811, %v5188
    %v5532 = vadd.f32 %v4812, %v5188
    %v5533 = vadd.f32 %v4813, %v5188
    %v5534 = vadd.f32 %v4814, %v5193
    %v5535 = vadd.f32 %v4815, %v5193
    %v5536 = vadd.f32 %v4816, %v5193
    %v5537 = vadd.f32 %v4817, %v5193
    %v5538 = vadd.f32 %v4818, %v5193
    %v5539 = vadd.f32 %v4819, %v5193
    %v5540 = vadd.f32 %v4820, %v5193
    %v5541 = vadd.f32 %v4821, %v5198
    %v5542 = vadd.f32 %v4822, %v5198
    %v5543 = vadd.f32 %v4823, %v5198
    %v5544 = vadd.f32 %v4824, %v5198
    %v5545 = vadd.f32 %v4825, %v5198
    %v5546 = vadd.f32 %v4826, %v5198
    %v5547 = vadd.f32 %v4827, %v5198
    %v5548 = vadd.f32 %v4828, %v5203
    %v5549 = vadd.f32 %v4829, %v5203
    %v5550 = vadd.f32 %v4830, %v5203
    %v5551 = vadd.f32 %v4831, %v5203
    %v5552 = vadd.f32 %v4832, %v5203
    %v5553 = vadd.f32 %v4833, %v5203
    %v5554 = vadd.f32 %v4834, %v5203
    %v5555 = vadd.f32 %v4835, %v5208
    %v5556 = vadd.f32 %v4836, %v5208
    %v5557 = vadd.f32 %v4837, %v5208
    %v5558 = vadd.f32 %v4838, %v5208
    %v5559 = vadd.f32 %v4839, %v5208
    %v5560 = vadd.f32 %v4840, %v5208
    %v5561 = vadd.f32 %v4841, %v5208
    %v5562 = vadd.f32 %v4842, %v5213
    %v5563 = vadd.f32 %v4843, %v5213
    %v5564 = vadd.f32 %v4844, %v5213
    %v5565 = vadd.f32 %v4845, %v5213
    %v5566 = vadd.f32 %v4846, %v5213
    %v5567 = vadd.f32 %v4847, %v5213
    %v5568 = vadd.f32 %v4848, %v5213
    %v5569 = vadd.f32 %v4849, %v5218
    %v5570 = vadd.f32 %v4850, %v5218
    %v5571 = vadd.f32 %v4851, %v5218
    %v5572 = vadd.f32 %v4852, %v5218
    %v5573 = vadd.f32 %v4853, %v5218
    %v5574 = vadd.f32 %v4854, %v5218
    %v5575 = vadd.f32 %v4855, %v5218
    %v5576 = vadd.f32 %v4856, %v5223
    %v5577 = vadd.f32 %v4857, %v5223
    %v5578 = vadd.f32 %v4858, %v5223
    %v5579 = vadd.f32 %v4859, %v5223
    %v5580 = vadd.f32 %v4860, %v5223
    %v5581 = vadd.f32 %v4861, %v5223
    %v5582 = vadd.f32 %v4862, %v5223
    %v5583 = vadd.f32 %v4863, %v5228
    %v5584 = vadd.f32 %v4864, %v5228
    %v5585 = vadd.f32 %v4865, %v5228
    %v5586 = vadd.f32 %v4866, %v5228
    %v5587 = vadd.f32 %v4867, %v5228
    %v5588 = vadd.f32 %v4868, %v5228
    %v5589 = vadd.f32 %v4869, %v5228
    %v5590 = vadd.f32 %v4870, %v5233
    %v5591 = vadd.f32 %v4871, %v5233
    %v5592 = vadd.f32 %v4872, %v5233
    %v5593 = vadd.f32 %v4873, %v5233
    %v5594 = vadd.f32 %v4874, %v5233
    %v5595 = vadd.f32 %v4875, %v5233
    %v5596 = vadd.f32 %v4876, %v5233
    %v5597 = vadd.f32 %v4877, %v5238
    %v5598 = vadd.f32 %v4878, %v5238
    %v5599 = vadd.f32 %v4879, %v5238
    %v5600 = vadd.f32 %v4880, %v5238
    %v5601 = vadd.f32 %v4881, %v5238
    %v5602 = vadd.f32 %v4882, %v5238
    %v5603 = vadd.f32 %v4883, %v5238
    %v5604 = vadd.f32 %v4884, %v5243
    %v5605 = vadd.f32 %v4885, %v5243
    %v5606 = vadd.f32 %v4886, %v5243
    %v5607 = vadd.f32 %v4887, %v5243
    %v5608 = vadd.f32 %v4888, %v5243
    %v5609 = vadd.f32 %v4889, %v5243
    %v5610 = vadd.f32 %v4890, %v5243
    %v5611 = vadd.f32 %v4891, %v5248
    %v5612 = vadd.f32 %v4892, %v5248
    %v5613 = vadd.f32 %v4893, %v5248
    %v5614 = vadd.f32 %v4894, %v5248
    %v5615 = vadd.f32 %v4895, %v5248
    %v5616 = vadd.f32 %v4896, %v5248
    %v5617 = vadd.f32 %v4897, %v5248
    %v5618 = vadd.f32 %v4898, %v5253
    %v5619 = vadd.f32 %v4899, %v5253
    %v5620 = vadd.f32 %v4900, %v5253
    %v5621 = vadd.f32 %v4901, %v5253
    %v5622 = vadd.f32 %v4902, %v5253
    %v5623 = vadd.f32 %v4903, %v5253
    %v5624 = vadd.f32 %v4904, %v5253
    %v5625 = vadd.f32 %v4905, %v5258
    %v5626 = vadd.f32 %v4906, %v5258
    %v5627 = vadd.f32 %v4907, %v5258
    %v5628 = vadd.f32 %v4908, %v5258
    %v5629 = vadd.f32 %v4909, %v5258
    %v5630 = vadd.f32 %v4910, %v5258
    %v5631 = vadd.f32 %v4911, %v5258
    %v5632 = vadd.f32 %v4912, %v5263
    %v5633 = vadd.f32 %v4913, %v5263
    %v5634 = vadd.f32 %v4914, %v5263
    %v5635 = vadd.f32 %v4915, %v5263
    %v5636 = vadd.f32 %v4916, %v5263
    %v5637 = vadd.f32 %v4917, %v5263
    %v5638 = vadd.f32 %v4918, %v5263
    %v5639 = vadd.f32 %v4919, %v5268
    %v5640 = vadd.f32 %v4920, %v5268
    %v5641 = vadd.f32 %v4921, %v5268
    %v5642 = vadd.f32 %v4922, %v5268
    %v5643 = vadd.f32 %v4923, %v5268
    %v5644 = vadd.f32 %v4924, %v5268
    %v5645 = vadd.f32 %v4925, %v5268
    %v5646 = vadd.f32 %v4926, %v5273
    %v5647 = vadd.f32 %v4927, %v5273
    %v5648 = vadd.f32 %v4928, %v5273
    %v5649 = vadd.f32 %v4929, %v5273
    %v5650 = vadd.f32 %v4930, %v5273
    %v5651 = vadd.f32 %v4931, %v5273
    %v5652 = vadd.f32 %v4932, %v5273
    %v5653 = vadd.f32 %v4933, %v5278
    %v5654 = vadd.f32 %v4934, %v5278
    %v5655 = vadd.f32 %v4935, %v5278
    %v5656 = vadd.f32 %v4936, %v5278
    %v5657 = vadd.f32 %v4937, %v5278
    %v5658 = vadd.f32 %v4938, %v5278
    %v5659 = vadd.f32 %v4939, %v5278
    %v5660 = vadd.f32 %v4940, %v5283
    %v5661 = vadd.f32 %v4941, %v5283
    %v5662 = vadd.f32 %v4942, %v5283
    %v5663 = vadd.f32 %v4943, %v5283
    %v5664 = vadd.f32 %v4944, %v5283
    %v5665 = vadd.f32 %v4945, %v5283
    %v5666 = vadd.f32 %v4946, %v5283
    %v5667 = vadd.f32 %v4947, %v5288
    %v5668 = vadd.f32 %v4948, %v5288
    %v5669 = vadd.f32 %v4949, %v5288
    %v5670 = vadd.f32 %v4950, %v5288
    %v5671 = vadd.f32 %v4951, %v5288
    %v5672 = vadd.f32 %v4952, %v5288
    %v5673 = vadd.f32 %v4953, %v5288
    %v5674 = vadd.f32 %v4954, %v5293
    %v5675 = vadd.f32 %v4955, %v5293
    %v5676 = vadd.f32 %v4956, %v5293
    %v5677 = vadd.f32 %v4957, %v5293
    %v5678 = vadd.f32 %v4958, %v5293
    %v5679 = vadd.f32 %v4959, %v5293
    %v5680 = vadd.f32 %v4960, %v5293
    %v5681 = vadd.f32 %v4961, %v5298
    %v5682 = vadd.f32 %v4962, %v5298
    %v5683 = vadd.f32 %v4963, %v5298
    %v5684 = vadd.f32 %v4964, %v5298
    %v5685 = vadd.f32 %v4965, %v5298
    %v5686 = vadd.f32 %v4966, %v5298
    %v5687 = vadd.f32 %v4967, %v5298
    %v5688 = vadd.f32 %v4968, %v5303
    %v5689 = vadd.f32 %v4969, %v5303
    %v5690 = vadd.f32 %v4970, %v5303
    %v5691 = vadd.f32 %v4971, %v5303
    %v5692 = vadd.f32 %v4972, %v5303
    %v5693 = vadd.f32 %v4973, %v5303
    %v5694 = vadd.f32 %v4974, %v5303
    %v5695 = vadd.f32 %v4975, %v5308
    %v5696 = vadd.f32 %v4976, %v5308
    %v5697 = vadd.f32 %v4977, %v5308
    %v5698 = vadd.f32 %v4978, %v5308
    %v5699 = vadd.f32 %v4979, %v5308
    %v5700 = vadd.f32 %v4980, %v5308
    %v5701 = vadd.f32 %v4981, %v5308
    %v5702 = vadd.f32 %v4982, %v5313
    %v5703 = vadd.f32 %v4983, %v5313
    %v5704 = vadd.f32 %v4984, %v5313
    %v5705 = vadd.f32 %v4985, %v5313
    %v5706 = vadd.f32 %v4986, %v5313
    %v5707 = vadd.f32 %v4987, %v5313
    %v5708 = vadd.f32 %v4988, %v5313
    %v5709 = vadd.f32 %v4989, %v5318
    %v5710 = vadd.f32 %v4990, %v5318
    %v5711 = vadd.f32 %v4991, %v5318
    %v5712 = vadd.f32 %v4992, %v5318
    %v5713 = vadd.f32 %v4993, %v5318
    %v5714 = vadd.f32 %v4994, %v5318
    %v5715 = vadd.f32 %v4995, %v5318
    %v5716 = vadd.f32 %v4996, %v5323
    %v5717 = vadd.f32 %v4997, %v5323
    %v5718 = vadd.f32 %v4998, %v5323
    %v5719 = vadd.f32 %v4999, %v5323
    %v5720 = vadd.f32 %v5000, %v5323
    %v5721 = vadd.f32 %v5001, %v5323
    %v5722 = vadd.f32 %v5002, %v5323
    %v5723 = vadd.f32 %v5003, %v5328
    %v5724 = vadd.f32 %v5004, %v5328
    %v5725 = vadd.f32 %v5005, %v5328
    %v5726 = vadd.f32 %v5006, %v5328
    %v5727 = vadd.f32 %v5007, %v5328
    %v5728 = vadd.f32 %v5008, %v5328
    %v5729 = vadd.f32 %v5009, %v5328
    %v5730 = vadd.f32 %v5010, %v5333
    %v5731 = vadd.f32 %v5011, %v5333
    %v5732 = vadd.f32 %v5012, %v5333
    %v5733 = vadd.f32 %v5013, %v5333
    %v5734 = vadd.f32 %v5014, %v5333
    %v5735 = vadd.f32 %v5015, %v5333
    %v5736 = vadd.f32 %v5016, %v5333
    %v5737 = vadd.f32 %v5017, %v5338
    %v5738 = vadd.f32 %v5018, %v5338
    %v5739 = vadd.f32 %v5019, %v5338
    %v5740 = vadd.f32 %v5020, %v5338
    %v5741 = vadd.f32 %v5021, %v5338
    %v5742 = vadd.f32 %v5022, %v5338
    %v5743 = vadd.f32 %v5023, %v5338
    %v5744 = vadd.f32 %v5024, %v5343
    %v5745 = vadd.f32 %v5025, %v5343
    %v5746 = vadd.f32 %v5026, %v5343
    %v5747 = vadd.f32 %v5027, %v5343
    %v5748 = vadd.f32 %v5028, %v5343
    %v5749 = vadd.f32 %v5029, %v5343
    %v5750 = vadd.f32 %v5030, %v5343
    %v5751 = vadd.f32 %v5031, %v5348
    %v5752 = vadd.f32 %v5032, %v5348
    %v5753 = vadd.f32 %v5033, %v5348
    %v5754 = vadd.f32 %v5034, %v5348
    %v5755 = vadd.f32 %v5035, %v5348
    %v5756 = vadd.f32 %v5036, %v5348
    %v5757 = vadd.f32 %v5037, %v5348
    %v5758 = vadd.f32 %v5038, %v5353
    %v5759 = vadd.f32 %v5039, %v5353
    %v5760 = vadd.f32 %v5040, %v5353
    %v5761 = vadd.f32 %v5041, %v5353
    %v5762 = vadd.f32 %v5042, %v5353
    %v5763 = vadd.f32 %v5043, %v5353
    %v5764 = vadd.f32 %v5044, %v5353
    %v5765 = vadd.f32 %v5045, %v5358
    %v5766 = vadd.f32 %v5046, %v5358
    %v5767 = vadd.f32 %v5047, %v5358
    %v5768 = vadd.f32 %v5048, %v5358
    %v5769 = vadd.f32 %v5049, %v5358
    %v5770 = vadd.f32 %v5050, %v5358
    %v5771 = vadd.f32 %v5051, %v5358
    %v5772 = vadd.f32 %v5052, %v5363
    %v5773 = vadd.f32 %v5053, %v5363
    %v5774 = vadd.f32 %v5054, %v5363
    %v5775 = vadd.f32 %v5055, %v5363
    %v5776 = vadd.f32 %v5056, %v5363
    %v5777 = vadd.f32 %v5057, %v5363
    %v5778 = vadd.f32 %v5058, %v5363
    %v5779 = vadd.f32 %v5059, %v5368
    %v5780 = vadd.f32 %v5060, %v5368
    %v5781 = vadd.f32 %v5061, %v5368
    %v5782 = vadd.f32 %v5062, %v5368
    %v5783 = vadd.f32 %v5063, %v5368
    %v5784 = vadd.f32 %v5064, %v5368
    %v5785 = vadd.f32 %v5065, %v5368
    %v5786 = vadd.f32 %v5066, %v5373
    %v5787 = vadd.f32 %v5067, %v5373
    %v5788 = vadd.f32 %v5068, %v5373
    %v5789 = vadd.f32 %v5069, %v5373
    %v5790 = vadd.f32 %v5070, %v5373
    %v5791 = vadd.f32 %v5071, %v5373
    %v5792 = vadd.f32 %v5072, %v5373
    %v5793 = vadd.f32 %v5073, %v5378
    %v5794 = vadd.f32 %v5074, %v5378
    %v5795 = vadd.f32 %v5075, %v5378
    %v5796 = vadd.f32 %v5076, %v5378
    %v5797 = vadd.f32 %v5077, %v5378
    %v5798 = vadd.f32 %v5078, %v5378
    %v5799 = vadd.f32 %v5079, %v5378
    %5800 = vst [vmem:[%s5] sm:$0xff] %v5380
    %5801 = vst [vmem:[%s5 + $0x8] sm:$0xff] %v5381
    %5802 = vst [vmem:[%s5 + $0x10] sm:$0xff] %v5382
    %5803 = vst [vmem:[%s5 + $0x18] sm:$0xff] %v5383
    %5804 = vst [vmem:[%s5 + $0x20] sm:$0xff] %v5384
    %5805 = vst [vmem:[%s5 + $0x28] sm:$0xff] %v5385
    %5806 = vst.msk [vmem:[%s5 + $0x30] sm:$0xff] %vm2144, %v5386
    %5807 = vst [vmem:[%s5 + $0x38] sm:$0xff] %v5387
    %5808 = vst [vmem:[%s5 + $0x40] sm:$0xff] %v5388
    %5809 = vst [vmem:[%s5 + $0x48] sm:$0xff] %v5389
    %5810 = vst [vmem:[%s5 + $0x50] sm:$0xff] %v5390
    %5811 = vst [vmem:[%s5 + $0x58] sm:$0xff] %v5391
    %5812 = vst [vmem:[%s5 + $0x60] sm:$0xff] %v5392
    %5813 = vst.msk [vmem:[%s5 + $0x68] sm:$0xff] %vm2144, %v5393
    %5814 = vst [vmem:[%s5 + $0x70] sm:$0xff] %v5394
    %5815 = vst [vmem:[%s5 + $0x78] sm:$0xff] %v5395
    %5816 = vst [vmem:[%s5 + $0x80] sm:$0xff] %v5396
    %5817 = vst [vmem:[%s5 + $0x88] sm:$0xff] %v5397
    %5818 = vst [vmem:[%s5 + $0x90] sm:$0xff] %v5398
    %5819 = vst [vmem:[%s5 + $0x98] sm:$0xff] %v5399
    %5820 = vst.msk [vmem:[%s5 + $0xa0] sm:$0xff] %vm2144, %v5400
    %5821 = vst [vmem:[%s5 + $0xa8] sm:$0xff] %v5401
    %5822 = vst [vmem:[%s5 + $0xb0] sm:$0xff] %v5402
    %5823 = vst [vmem:[%s5 + $0xb8] sm:$0xff] %v5403
    %5824 = vst [vmem:[%s5 + $0xc0] sm:$0xff] %v5404
    %5825 = vst [vmem:[%s5 + $0xc8] sm:$0xff] %v5405
    %5826 = vst [vmem:[%s5 + $0xd0] sm:$0xff] %v5406
    %5827 = vst.msk [vmem:[%s5 + $0xd8] sm:$0xff] %vm2144, %v5407
    %5828 = vst [vmem:[%s5 + $0xe0] sm:$0xff] %v5408
    %5829 = vst [vmem:[%s5 + $0xe8] sm:$0xff] %v5409
    %5830 = vst [vmem:[%s5 + $0xf0] sm:$0xff] %v5410
    %5831 = vst [vmem:[%s5 + $0xf8] sm:$0xff] %v5411
    %5832 = vst [vmem:[%s5 + $0x100] sm:$0xff] %v5412
    %5833 = vst [vmem:[%s5 + $0x108] sm:$0xff] %v5413
    %5834 = vst.msk [vmem:[%s5 + $0x110] sm:$0xff] %vm2144, %v5414
    %5835 = vst [vmem:[%s5 + $0x118] sm:$0xff] %v5415
    %5836 = vst [vmem:[%s5 + $0x120] sm:$0xff] %v5416
    %5837 = vst [vmem:[%s5 + $0x128] sm:$0xff] %v5417
    %5838 = vst [vmem:[%s5 + $0x130] sm:$0xff] %v5418
    %5839 = vst [vmem:[%s5 + $0x138] sm:$0xff] %v5419
    %5840 = vst [vmem:[%s5 + $0x140] sm:$0xff] %v5420
    %5841 = vst.msk [vmem:[%s5 + $0x148] sm:$0xff] %vm2144, %v5421
    %5842 = vst [vmem:[%s5 + $0x150] sm:$0xff] %v5422
    %5843 = vst [vmem:[%s5 + $0x158] sm:$0xff] %v5423
    %5844 = vst [vmem:[%s5 + $0x160] sm:$0xff] %v5424
    %5845 = vst [vmem:[%s5 + $0x168] sm:$0xff] %v5425
    %5846 = vst [vmem:[%s5 + $0x170] sm:$0xff] %v5426
    %5847 = vst [vmem:[%s5 + $0x178] sm:$0xff] %v5427
    %5848 = vst.msk [vmem:[%s5 + $0x180] sm:$0xff] %vm2144, %v5428
    %5849 = vst [vmem:[%s5 + $0x188] sm:$0xff] %v5429
    %5850 = vst [vmem:[%s5 + $0x190] sm:$0xff] %v5430
    %5851 = vst [vmem:[%s5 + $0x198] sm:$0xff] %v5431
    %5852 = vst [vmem:[%s5 + $0x1a0] sm:$0xff] %v5432
    %5853 = vst [vmem:[%s5 + $0x1a8] sm:$0xff] %v5433
    %5854 = vst [vmem:[%s5 + $0x1b0] sm:$0xff] %v5434
    %5855 = vst.msk [vmem:[%s5 + $0x1b8] sm:$0xff] %vm2144, %v5435
    %5856 = vst [vmem:[%s5 + $0x1c0] sm:$0xff] %v5436
    %5857 = vst [vmem:[%s5 + $0x1c8] sm:$0xff] %v5437
    %5858 = vst [vmem:[%s5 + $0x1d0] sm:$0xff] %v5438
    %5859 = vst [vmem:[%s5 + $0x1d8] sm:$0xff] %v5439
    %5860 = vst [vmem:[%s5 + $0x1e0] sm:$0xff] %v5440
    %5861 = vst [vmem:[%s5 + $0x1e8] sm:$0xff] %v5441
    %5862 = vst.msk [vmem:[%s5 + $0x1f0] sm:$0xff] %vm2144, %v5442
    %5863 = vst [vmem:[%s5 + $0x1f8] sm:$0xff] %v5443
    %5864 = vst [vmem:[%s5 + $0x200] sm:$0xff] %v5444
    %5865 = vst [vmem:[%s5 + $0x208] sm:$0xff] %v5445
    %5866 = vst [vmem:[%s5 + $0x210] sm:$0xff] %v5446
    %5867 = vst [vmem:[%s5 + $0x218] sm:$0xff] %v5447
    %5868 = vst [vmem:[%s5 + $0x220] sm:$0xff] %v5448
    %5869 = vst.msk [vmem:[%s5 + $0x228] sm:$0xff] %vm2144, %v5449
    %5870 = vst [vmem:[%s5 + $0x230] sm:$0xff] %v5450
    %5871 = vst [vmem:[%s5 + $0x238] sm:$0xff] %v5451
    %5872 = vst [vmem:[%s5 + $0x240] sm:$0xff] %v5452
    %5873 = vst [vmem:[%s5 + $0x248] sm:$0xff] %v5453
    %5874 = vst [vmem:[%s5 + $0x250] sm:$0xff] %v5454
    %5875 = vst [vmem:[%s5 + $0x258] sm:$0xff] %v5455
    %5876 = vst.msk [vmem:[%s5 + $0x260] sm:$0xff] %vm2144, %v5456
    %5877 = vst [vmem:[%s5 + $0x268] sm:$0xff] %v5457
    %5878 = vst [vmem:[%s5 + $0x270] sm:$0xff] %v5458
    %5879 = vst [vmem:[%s5 + $0x278] sm:$0xff] %v5459
    %5880 = vst [vmem:[%s5 + $0x280] sm:$0xff] %v5460
    %5881 = vst [vmem:[%s5 + $0x288] sm:$0xff] %v5461
    %5882 = vst [vmem:[%s5 + $0x290] sm:$0xff] %v5462
    %5883 = vst.msk [vmem:[%s5 + $0x298] sm:$0xff] %vm2144, %v5463
    %5884 = vst [vmem:[%s5 + $0x2a0] sm:$0xff] %v5464
    %5885 = vst [vmem:[%s5 + $0x2a8] sm:$0xff] %v5465
    %5886 = vst [vmem:[%s5 + $0x2b0] sm:$0xff] %v5466
    %5887 = vst [vmem:[%s5 + $0x2b8] sm:$0xff] %v5467
    %5888 = vst [vmem:[%s5 + $0x2c0] sm:$0xff] %v5468
    %5889 = vst [vmem:[%s5 + $0x2c8] sm:$0xff] %v5469
    %5890 = vst.msk [vmem:[%s5 + $0x2d0] sm:$0xff] %vm2144, %v5470
    %5891 = vst [vmem:[%s5 + $0x2d8] sm:$0xff] %v5471
    %5892 = vst [vmem:[%s5 + $0x2e0] sm:$0xff] %v5472
    %5893 = vst [vmem:[%s5 + $0x2e8] sm:$0xff] %v5473
    %5894 = vst [vmem:[%s5 + $0x2f0] sm:$0xff] %v5474
    %5895 = vst [vmem:[%s5 + $0x2f8] sm:$0xff] %v5475
    %5896 = vst [vmem:[%s5 + $0x300] sm:$0xff] %v5476
    %5897 = vst.msk [vmem:[%s5 + $0x308] sm:$0xff] %vm2144, %v5477
    %5898 = vst [vmem:[%s5 + $0x310] sm:$0xff] %v5478
    %5899 = vst [vmem:[%s5 + $0x318] sm:$0xff] %v5479
    %5900 = vst [vmem:[%s5 + $0x320] sm:$0xff] %v5480
    %5901 = vst [vmem:[%s5 + $0x328] sm:$0xff] %v5481
    %5902 = vst [vmem:[%s5 + $0x330] sm:$0xff] %v5482
    %5903 = vst [vmem:[%s5 + $0x338] sm:$0xff] %v5483
    %5904 = vst.msk [vmem:[%s5 + $0x340] sm:$0xff] %vm2144, %v5484
    %5905 = vst [vmem:[%s5 + $0x348] sm:$0xff] %v5485
    %5906 = vst [vmem:[%s5 + $0x350] sm:$0xff] %v5486
    %5907 = vst [vmem:[%s5 + $0x358] sm:$0xff] %v5487
    %5908 = vst [vmem:[%s5 + $0x360] sm:$0xff] %v5488
    %5909 = vst [vmem:[%s5 + $0x368] sm:$0xff] %v5489
    %5910 = vst [vmem:[%s5 + $0x370] sm:$0xff] %v5490
    %5911 = vst.msk [vmem:[%s5 + $0x378] sm:$0xff] %vm2144, %v5491
    %5912 = vst [vmem:[%s5 + $0x380] sm:$0xff] %v5492
    %5913 = vst [vmem:[%s5 + $0x388] sm:$0xff] %v5493
    %5914 = vst [vmem:[%s5 + $0x390] sm:$0xff] %v5494
    %5915 = vst [vmem:[%s5 + $0x398] sm:$0xff] %v5495
    %5916 = vst [vmem:[%s5 + $0x3a0] sm:$0xff] %v5496
    %5917 = vst [vmem:[%s5 + $0x3a8] sm:$0xff] %v5497
    %5918 = vst.msk [vmem:[%s5 + $0x3b0] sm:$0xff] %vm2144, %v5498
    %5919 = vst [vmem:[%s5 + $0x3b8] sm:$0xff] %v5499
    %5920 = vst [vmem:[%s5 + $0x3c0] sm:$0xff] %v5500
    %5921 = vst [vmem:[%s5 + $0x3c8] sm:$0xff] %v5501
    %5922 = vst [vmem:[%s5 + $0x3d0] sm:$0xff] %v5502
    %5923 = vst [vmem:[%s5 + $0x3d8] sm:$0xff] %v5503
    %5924 = vst [vmem:[%s5 + $0x3e0] sm:$0xff] %v5504
    %5925 = vst.msk [vmem:[%s5 + $0x3e8] sm:$0xff] %vm2144, %v5505
    %5926 = vst [vmem:[%s5 + $0x3f0] sm:$0xff] %v5506
    %5927 = vst [vmem:[%s5 + $0x3f8] sm:$0xff] %v5507
    %5928 = vst [vmem:[%s5 + $0x400] sm:$0xff] %v5508
    %5929 = vst [vmem:[%s5 + $0x408] sm:$0xff] %v5509
    %5930 = vst [vmem:[%s5 + $0x410] sm:$0xff] %v5510
    %5931 = vst [vmem:[%s5 + $0x418] sm:$0xff] %v5511
    %5932 = vst.msk [vmem:[%s5 + $0x420] sm:$0xff] %vm2144, %v5512
    %5933 = vst [vmem:[%s5 + $0x428] sm:$0xff] %v5513
    %5934 = vst [vmem:[%s5 + $0x430] sm:$0xff] %v5514
    %5935 = vst [vmem:[%s5 + $0x438] sm:$0xff] %v5515
    %5936 = vst [vmem:[%s5 + $0x440] sm:$0xff] %v5516
    %5937 = vst [vmem:[%s5 + $0x448] sm:$0xff] %v5517
    %5938 = vst [vmem:[%s5 + $0x450] sm:$0xff] %v5518
    %5939 = vst.msk [vmem:[%s5 + $0x458] sm:$0xff] %vm2144, %v5519
    %5940 = vst [vmem:[%s5 + $0x460] sm:$0xff] %v5520
    %5941 = vst [vmem:[%s5 + $0x468] sm:$0xff] %v5521
    %5942 = vst [vmem:[%s5 + $0x470] sm:$0xff] %v5522
    %5943 = vst [vmem:[%s5 + $0x478] sm:$0xff] %v5523
    %5944 = vst [vmem:[%s5 + $0x480] sm:$0xff] %v5524
    %5945 = vst [vmem:[%s5 + $0x488] sm:$0xff] %v5525
    %5946 = vst.msk [vmem:[%s5 + $0x490] sm:$0xff] %vm2144, %v5526
    %5947 = vst [vmem:[%s5 + $0x498] sm:$0xff] %v5527
    %5948 = vst [vmem:[%s5 + $0x4a0] sm:$0xff] %v5528
    %5949 = vst [vmem:[%s5 + $0x4a8] sm:$0xff] %v5529
    %5950 = vst [vmem:[%s5 + $0x4b0] sm:$0xff] %v5530
    %5951 = vst [vmem:[%s5 + $0x4b8] sm:$0xff] %v5531
    %5952 = vst [vmem:[%s5 + $0x4c0] sm:$0xff] %v5532
    %5953 = vst.msk [vmem:[%s5 + $0x4c8] sm:$0xff] %vm2144, %v5533
    %5954 = vst [vmem:[%s5 + $0x4d0] sm:$0xff] %v5534
    %5955 = vst [vmem:[%s5 + $0x4d8] sm:$0xff] %v5535
    %5956 = vst [vmem:[%s5 + $0x4e0] sm:$0xff] %v5536
    %5957 = vst [vmem:[%s5 + $0x4e8] sm:$0xff] %v5537
    %5958 = vst [vmem:[%s5 + $0x4f0] sm:$0xff] %v5538
    %5959 = vst [vmem:[%s5 + $0x4f8] sm:$0xff] %v5539
    %5960 = vst.msk [vmem:[%s5 + $0x500] sm:$0xff] %vm2144, %v5540
    %5961 = vst [vmem:[%s5 + $0x508] sm:$0xff] %v5541
    %5962 = vst [vmem:[%s5 + $0x510] sm:$0xff] %v5542
    %5963 = vst [vmem:[%s5 + $0x518] sm:$0xff] %v5543
    %5964 = vst [vmem:[%s5 + $0x520] sm:$0xff] %v5544
    %5965 = vst [vmem:[%s5 + $0x528] sm:$0xff] %v5545
    %5966 = vst [vmem:[%s5 + $0x530] sm:$0xff] %v5546
    %5967 = vst.msk [vmem:[%s5 + $0x538] sm:$0xff] %vm2144, %v5547
    %5968 = vst [vmem:[%s5 + $0x540] sm:$0xff] %v5548
    %5969 = vst [vmem:[%s5 + $0x548] sm:$0xff] %v5549
    %5970 = vst [vmem:[%s5 + $0x550] sm:$0xff] %v5550
    %5971 = vst [vmem:[%s5 + $0x558] sm:$0xff] %v5551
    %5972 = vst [vmem:[%s5 + $0x560] sm:$0xff] %v5552
    %5973 = vst [vmem:[%s5 + $0x568] sm:$0xff] %v5553
    %5974 = vst.msk [vmem:[%s5 + $0x570] sm:$0xff] %vm2144, %v5554
    %5975 = vst [vmem:[%s5 + $0x578] sm:$0xff] %v5555
    %5976 = vst [vmem:[%s5 + $0x580] sm:$0xff] %v5556
    %5977 = vst [vmem:[%s5 + $0x588] sm:$0xff] %v5557
    %5978 = vst [vmem:[%s5 + $0x590] sm:$0xff] %v5558
    %5979 = vst [vmem:[%s5 + $0x598] sm:$0xff] %v5559
    %5980 = vst [vmem:[%s5 + $0x5a0] sm:$0xff] %v5560
    %5981 = vst.msk [vmem:[%s5 + $0x5a8] sm:$0xff] %vm2144, %v5561
    %5982 = vst [vmem:[%s5 + $0x5b0] sm:$0xff] %v5562
    %5983 = vst [vmem:[%s5 + $0x5b8] sm:$0xff] %v5563
    %5984 = vst [vmem:[%s5 + $0x5c0] sm:$0xff] %v5564
    %5985 = vst [vmem:[%s5 + $0x5c8] sm:$0xff] %v5565
    %5986 = vst [vmem:[%s5 + $0x5d0] sm:$0xff] %v5566
    %5987 = vst [vmem:[%s5 + $0x5d8] sm:$0xff] %v5567
    %5988 = vst.msk [vmem:[%s5 + $0x5e0] sm:$0xff] %vm2144, %v5568
    %5989 = vst [vmem:[%s5 + $0x5e8] sm:$0xff] %v5569
    %5990 = vst [vmem:[%s5 + $0x5f0] sm:$0xff] %v5570
    %5991 = vst [vmem:[%s5 + $0x5f8] sm:$0xff] %v5571
    %5992 = vst [vmem:[%s5 + $0x600] sm:$0xff] %v5572
    %5993 = vst [vmem:[%s5 + $0x608] sm:$0xff] %v5573
    %5994 = vst [vmem:[%s5 + $0x610] sm:$0xff] %v5574
    %5995 = vst.msk [vmem:[%s5 + $0x618] sm:$0xff] %vm2144, %v5575
    %5996 = vst [vmem:[%s5 + $0x620] sm:$0xff] %v5576
    %5997 = vst [vmem:[%s5 + $0x628] sm:$0xff] %v5577
    %5998 = vst [vmem:[%s5 + $0x630] sm:$0xff] %v5578
    %5999 = vst [vmem:[%s5 + $0x638] sm:$0xff] %v5579
    %6000 = vst [vmem:[%s5 + $0x640] sm:$0xff] %v5580
    %6001 = vst [vmem:[%s5 + $0x648] sm:$0xff] %v5581
    %6002 = vst.msk [vmem:[%s5 + $0x650] sm:$0xff] %vm2144, %v5582
    %6003 = vst [vmem:[%s5 + $0x658] sm:$0xff] %v5583
    %6004 = vst [vmem:[%s5 + $0x660] sm:$0xff] %v5584
    %6005 = vst [vmem:[%s5 + $0x668] sm:$0xff] %v5585
    %6006 = vst [vmem:[%s5 + $0x670] sm:$0xff] %v5586
    %6007 = vst [vmem:[%s5 + $0x678] sm:$0xff] %v5587
    %6008 = vst [vmem:[%s5 + $0x680] sm:$0xff] %v5588
    %6009 = vst.msk [vmem:[%s5 + $0x688] sm:$0xff] %vm2144, %v5589
    %6010 = vst [vmem:[%s5 + $0x690] sm:$0xff] %v5590
    %6011 = vst [vmem:[%s5 + $0x698] sm:$0xff] %v5591
    %6012 = vst [vmem:[%s5 + $0x6a0] sm:$0xff] %v5592
    %6013 = vst [vmem:[%s5 + $0x6a8] sm:$0xff] %v5593
    %6014 = vst [vmem:[%s5 + $0x6b0] sm:$0xff] %v5594
    %6015 = vst [vmem:[%s5 + $0x6b8] sm:$0xff] %v5595
    %6016 = vst.msk [vmem:[%s5 + $0x6c0] sm:$0xff] %vm2144, %v5596
    %6017 = vst [vmem:[%s5 + $0x6c8] sm:$0xff] %v5597
    %6018 = vst [vmem:[%s5 + $0x6d0] sm:$0xff] %v5598
    %6019 = vst [vmem:[%s5 + $0x6d8] sm:$0xff] %v5599
    %6020 = vst [vmem:[%s5 + $0x6e0] sm:$0xff] %v5600
    %6021 = vst [vmem:[%s5 + $0x6e8] sm:$0xff] %v5601
    %6022 = vst [vmem:[%s5 + $0x6f0] sm:$0xff] %v5602
    %6023 = vst.msk [vmem:[%s5 + $0x6f8] sm:$0xff] %vm2144, %v5603
    %6024 = vst [vmem:[%s5 + $0x700] sm:$0xff] %v5604
    %6025 = vst [vmem:[%s5 + $0x708] sm:$0xff] %v5605
    %6026 = vst [vmem:[%s5 + $0x710] sm:$0xff] %v5606
    %6027 = vst [vmem:[%s5 + $0x718] sm:$0xff] %v5607
    %6028 = vst [vmem:[%s5 + $0x720] sm:$0xff] %v5608
    %6029 = vst [vmem:[%s5 + $0x728] sm:$0xff] %v5609
    %6030 = vst.msk [vmem:[%s5 + $0x730] sm:$0xff] %vm2144, %v5610
    %6031 = vst [vmem:[%s5 + $0x738] sm:$0xff] %v5611
    %6032 = vst [vmem:[%s5 + $0x740] sm:$0xff] %v5612
    %6033 = vst [vmem:[%s5 + $0x748] sm:$0xff] %v5613
    %6034 = vst [vmem:[%s5 + $0x750] sm:$0xff] %v5614
    %6035 = vst [vmem:[%s5 + $0x758] sm:$0xff] %v5615
    %6036 = vst [vmem:[%s5 + $0x760] sm:$0xff] %v5616
    %6037 = vst.msk [vmem:[%s5 + $0x768] sm:$0xff] %vm2144, %v5617
    %6038 = vst [vmem:[%s5 + $0x770] sm:$0xff] %v5618
    %6039 = vst [vmem:[%s5 + $0x778] sm:$0xff] %v5619
    %6040 = vst [vmem:[%s5 + $0x780] sm:$0xff] %v5620
    %6041 = vst [vmem:[%s5 + $0x788] sm:$0xff] %v5621
    %6042 = vst [vmem:[%s5 + $0x790] sm:$0xff] %v5622
    %6043 = vst [vmem:[%s5 + $0x798] sm:$0xff] %v5623
    %6044 = vst.msk [vmem:[%s5 + $0x7a0] sm:$0xff] %vm2144, %v5624
    %6045 = vst [vmem:[%s5 + $0x7a8] sm:$0xff] %v5625
    %6046 = vst [vmem:[%s5 + $0x7b0] sm:$0xff] %v5626
    %6047 = vst [vmem:[%s5 + $0x7b8] sm:$0xff] %v5627
    %6048 = vst [vmem:[%s5 + $0x7c0] sm:$0xff] %v5628
    %6049 = vst [vmem:[%s5 + $0x7c8] sm:$0xff] %v5629
    %6050 = vst [vmem:[%s5 + $0x7d0] sm:$0xff] %v5630
    %6051 = vst.msk [vmem:[%s5 + $0x7d8] sm:$0xff] %vm2144, %v5631
    %6052 = vst [vmem:[%s5 + $0x7e0] sm:$0xff] %v5632
    %6053 = vst [vmem:[%s5 + $0x7e8] sm:$0xff] %v5633
    %6054 = vst [vmem:[%s5 + $0x7f0] sm:$0xff] %v5634
    %6055 = vst [vmem:[%s5 + $0x7f8] sm:$0xff] %v5635
    %6056 = vst [vmem:[%s5 + $0x800] sm:$0xff] %v5636
    %6057 = vst [vmem:[%s5 + $0x808] sm:$0xff] %v5637
    %6058 = vst.msk [vmem:[%s5 + $0x810] sm:$0xff] %vm2144, %v5638
    %6059 = vst [vmem:[%s5 + $0x818] sm:$0xff] %v5639
    %6060 = vst [vmem:[%s5 + $0x820] sm:$0xff] %v5640
    %6061 = vst [vmem:[%s5 + $0x828] sm:$0xff] %v5641
    %6062 = vst [vmem:[%s5 + $0x830] sm:$0xff] %v5642
    %6063 = vst [vmem:[%s5 + $0x838] sm:$0xff] %v5643
    %6064 = vst [vmem:[%s5 + $0x840] sm:$0xff] %v5644
    %6065 = vst.msk [vmem:[%s5 + $0x848] sm:$0xff] %vm2144, %v5645
    %6066 = vst [vmem:[%s5 + $0x850] sm:$0xff] %v5646
    %6067 = vst [vmem:[%s5 + $0x858] sm:$0xff] %v5647
    %6068 = vst [vmem:[%s5 + $0x860] sm:$0xff] %v5648
    %6069 = vst [vmem:[%s5 + $0x868] sm:$0xff] %v5649
    %6070 = vst [vmem:[%s5 + $0x870] sm:$0xff] %v5650
    %6071 = vst [vmem:[%s5 + $0x878] sm:$0xff] %v5651
    %6072 = vst.msk [vmem:[%s5 + $0x880] sm:$0xff] %vm2144, %v5652
    %6073 = vst [vmem:[%s5 + $0x888] sm:$0xff] %v5653
    %6074 = vst [vmem:[%s5 + $0x890] sm:$0xff] %v5654
    %6075 = vst [vmem:[%s5 + $0x898] sm:$0xff] %v5655
    %6076 = vst [vmem:[%s5 + $0x8a0] sm:$0xff] %v5656
    %6077 = vst [vmem:[%s5 + $0x8a8] sm:$0xff] %v5657
    %6078 = vst [vmem:[%s5 + $0x8b0] sm:$0xff] %v5658
    %6079 = vst.msk [vmem:[%s5 + $0x8b8] sm:$0xff] %vm2144, %v5659
    %6080 = vst [vmem:[%s5 + $0x8c0] sm:$0xff] %v5660
    %6081 = vst [vmem:[%s5 + $0x8c8] sm:$0xff] %v5661
    %6082 = vst [vmem:[%s5 + $0x8d0] sm:$0xff] %v5662
    %6083 = vst [vmem:[%s5 + $0x8d8] sm:$0xff] %v5663
    %6084 = vst [vmem:[%s5 + $0x8e0] sm:$0xff] %v5664
    %6085 = vst [vmem:[%s5 + $0x8e8] sm:$0xff] %v5665
    %6086 = vst.msk [vmem:[%s5 + $0x8f0] sm:$0xff] %vm2144, %v5666
    %6087 = vst [vmem:[%s5 + $0x8f8] sm:$0xff] %v5667
    %6088 = vst [vmem:[%s5 + $0x900] sm:$0xff] %v5668
    %6089 = vst [vmem:[%s5 + $0x908] sm:$0xff] %v5669
    %6090 = vst [vmem:[%s5 + $0x910] sm:$0xff] %v5670
    %6091 = vst [vmem:[%s5 + $0x918] sm:$0xff] %v5671
    %6092 = vst [vmem:[%s5 + $0x920] sm:$0xff] %v5672
    %6093 = vst.msk [vmem:[%s5 + $0x928] sm:$0xff] %vm2144, %v5673
    %6094 = vst [vmem:[%s5 + $0x930] sm:$0xff] %v5674
    %6095 = vst [vmem:[%s5 + $0x938] sm:$0xff] %v5675
    %6096 = vst [vmem:[%s5 + $0x940] sm:$0xff] %v5676
    %6097 = vst [vmem:[%s5 + $0x948] sm:$0xff] %v5677
    %6098 = vst [vmem:[%s5 + $0x950] sm:$0xff] %v5678
    %6099 = vst [vmem:[%s5 + $0x958] sm:$0xff] %v5679
    %6100 = vst.msk [vmem:[%s5 + $0x960] sm:$0xff] %vm2144, %v5680
    %6101 = vst [vmem:[%s5 + $0x968] sm:$0xff] %v5681
    %6102 = vst [vmem:[%s5 + $0x970] sm:$0xff] %v5682
    %6103 = vst [vmem:[%s5 + $0x978] sm:$0xff] %v5683
    %6104 = vst [vmem:[%s5 + $0x980] sm:$0xff] %v5684
    %6105 = vst [vmem:[%s5 + $0x988] sm:$0xff] %v5685
    %6106 = vst [vmem:[%s5 + $0x990] sm:$0xff] %v5686
    %6107 = vst.msk [vmem:[%s5 + $0x998] sm:$0xff] %vm2144, %v5687
    %6108 = vst [vmem:[%s5 + $0x9a0] sm:$0xff] %v5688
    %6109 = vst [vmem:[%s5 + $0x9a8] sm:$0xff] %v5689
    %6110 = vst [vmem:[%s5 + $0x9b0] sm:$0xff] %v5690
    %6111 = vst [vmem:[%s5 + $0x9b8] sm:$0xff] %v5691
    %6112 = vst [vmem:[%s5 + $0x9c0] sm:$0xff] %v5692
    %6113 = vst [vmem:[%s5 + $0x9c8] sm:$0xff] %v5693
    %6114 = vst.msk [vmem:[%s5 + $0x9d0] sm:$0xff] %vm2144, %v5694
    %6115 = vst [vmem:[%s5 + $0x9d8] sm:$0xff] %v5695
    %6116 = vst [vmem:[%s5 + $0x9e0] sm:$0xff] %v5696
    %6117 = vst [vmem:[%s5 + $0x9e8] sm:$0xff] %v5697
    %6118 = vst [vmem:[%s5 + $0x9f0] sm:$0xff] %v5698
    %6119 = vst [vmem:[%s5 + $0x9f8] sm:$0xff] %v5699
    %6120 = vst [vmem:[%s5 + $0xa00] sm:$0xff] %v5700
    %6121 = vst.msk [vmem:[%s5 + $0xa08] sm:$0xff] %vm2144, %v5701
    %6122 = vst [vmem:[%s5 + $0xa10] sm:$0xff] %v5702
    %6123 = vst [vmem:[%s5 + $0xa18] sm:$0xff] %v5703
    %6124 = vst [vmem:[%s5 + $0xa20] sm:$0xff] %v5704
    %6125 = vst [vmem:[%s5 + $0xa28] sm:$0xff] %v5705
    %6126 = vst [vmem:[%s5 + $0xa30] sm:$0xff] %v5706
    %6127 = vst [vmem:[%s5 + $0xa38] sm:$0xff] %v5707
    %6128 = vst.msk [vmem:[%s5 + $0xa40] sm:$0xff] %vm2144, %v5708
    %6129 = vst [vmem:[%s5 + $0xa48] sm:$0xff] %v5709
    %6130 = vst [vmem:[%s5 + $0xa50] sm:$0xff] %v5710
    %6131 = vst [vmem:[%s5 + $0xa58] sm:$0xff] %v5711
    %6132 = vst [vmem:[%s5 + $0xa60] sm:$0xff] %v5712
    %6133 = vst [vmem:[%s5 + $0xa68] sm:$0xff] %v5713
    %6134 = vst [vmem:[%s5 + $0xa70] sm:$0xff] %v5714
    %6135 = vst.msk [vmem:[%s5 + $0xa78] sm:$0xff] %vm2144, %v5715
    %6136 = vst [vmem:[%s5 + $0xa80] sm:$0xff] %v5716
    %6137 = vst [vmem:[%s5 + $0xa88] sm:$0xff] %v5717
    %6138 = vst [vmem:[%s5 + $0xa90] sm:$0xff] %v5718
    %6139 = vst [vmem:[%s5 + $0xa98] sm:$0xff] %v5719
    %6140 = vst [vmem:[%s5 + $0xaa0] sm:$0xff] %v5720
    %6141 = vst [vmem:[%s5 + $0xaa8] sm:$0xff] %v5721
    %6142 = vst.msk [vmem:[%s5 + $0xab0] sm:$0xff] %vm2144, %v5722
    %6143 = vst [vmem:[%s5 + $0xab8] sm:$0xff] %v5723
    %6144 = vst [vmem:[%s5 + $0xac0] sm:$0xff] %v5724
    %6145 = vst [vmem:[%s5 + $0xac8] sm:$0xff] %v5725
    %6146 = vst [vmem:[%s5 + $0xad0] sm:$0xff] %v5726
    %6147 = vst [vmem:[%s5 + $0xad8] sm:$0xff] %v5727
    %6148 = vst [vmem:[%s5 + $0xae0] sm:$0xff] %v5728
    %6149 = vst.msk [vmem:[%s5 + $0xae8] sm:$0xff] %vm2144, %v5729
    %6150 = vst [vmem:[%s5 + $0xaf0] sm:$0xff] %v5730
    %6151 = vst [vmem:[%s5 + $0xaf8] sm:$0xff] %v5731
    %6152 = vst [vmem:[%s5 + $0xb00] sm:$0xff] %v5732
    %6153 = vst [vmem:[%s5 + $0xb08] sm:$0xff] %v5733
    %6154 = vst [vmem:[%s5 + $0xb10] sm:$0xff] %v5734
    %6155 = vst [vmem:[%s5 + $0xb18] sm:$0xff] %v5735
    %6156 = vst.msk [vmem:[%s5 + $0xb20] sm:$0xff] %vm2144, %v5736
    %6157 = vst [vmem:[%s5 + $0xb28] sm:$0xff] %v5737
    %6158 = vst [vmem:[%s5 + $0xb30] sm:$0xff] %v5738
    %6159 = vst [vmem:[%s5 + $0xb38] sm:$0xff] %v5739
    %6160 = vst [vmem:[%s5 + $0xb40] sm:$0xff] %v5740
    %6161 = vst [vmem:[%s5 + $0xb48] sm:$0xff] %v5741
    %6162 = vst [vmem:[%s5 + $0xb50] sm:$0xff] %v5742
    %6163 = vst.msk [vmem:[%s5 + $0xb58] sm:$0xff] %vm2144, %v5743
    %6164 = vst [vmem:[%s5 + $0xb60] sm:$0xff] %v5744
    %6165 = vst [vmem:[%s5 + $0xb68] sm:$0xff] %v5745
    %6166 = vst [vmem:[%s5 + $0xb70] sm:$0xff] %v5746
    %6167 = vst [vmem:[%s5 + $0xb78] sm:$0xff] %v5747
    %6168 = vst [vmem:[%s5 + $0xb80] sm:$0xff] %v5748
    %6169 = vst [vmem:[%s5 + $0xb88] sm:$0xff] %v5749
    %6170 = vst.msk [vmem:[%s5 + $0xb90] sm:$0xff] %vm2144, %v5750
    %6171 = vst [vmem:[%s5 + $0xb98] sm:$0xff] %v5751
    %6172 = vst [vmem:[%s5 + $0xba0] sm:$0xff] %v5752
    %6173 = vst [vmem:[%s5 + $0xba8] sm:$0xff] %v5753
    %6174 = vst [vmem:[%s5 + $0xbb0] sm:$0xff] %v5754
    %6175 = vst [vmem:[%s5 + $0xbb8] sm:$0xff] %v5755
    %6176 = vst [vmem:[%s5 + $0xbc0] sm:$0xff] %v5756
    %6177 = vst.msk [vmem:[%s5 + $0xbc8] sm:$0xff] %vm2144, %v5757
    %6178 = vst [vmem:[%s5 + $0xbd0] sm:$0xff] %v5758
    %6179 = vst [vmem:[%s5 + $0xbd8] sm:$0xff] %v5759
    %6180 = vst [vmem:[%s5 + $0xbe0] sm:$0xff] %v5760
    %6181 = vst [vmem:[%s5 + $0xbe8] sm:$0xff] %v5761
    %6182 = vst [vmem:[%s5 + $0xbf0] sm:$0xff] %v5762
    %6183 = vst [vmem:[%s5 + $0xbf8] sm:$0xff] %v5763
    %6184 = vst.msk [vmem:[%s5 + $0xc00] sm:$0xff] %vm2144, %v5764
    %6185 = vst [vmem:[%s5 + $0xc08] sm:$0xff] %v5765
    %6186 = vst [vmem:[%s5 + $0xc10] sm:$0xff] %v5766
    %6187 = vst [vmem:[%s5 + $0xc18] sm:$0xff] %v5767
    %6188 = vst [vmem:[%s5 + $0xc20] sm:$0xff] %v5768
    %6189 = vst [vmem:[%s5 + $0xc28] sm:$0xff] %v5769
    %6190 = vst [vmem:[%s5 + $0xc30] sm:$0xff] %v5770
    %6191 = vst.msk [vmem:[%s5 + $0xc38] sm:$0xff] %vm2144, %v5771
    %6192 = vst [vmem:[%s5 + $0xc40] sm:$0xff] %v5772
    %6193 = vst [vmem:[%s5 + $0xc48] sm:$0xff] %v5773
    %6194 = vst [vmem:[%s5 + $0xc50] sm:$0xff] %v5774
    %6195 = vst [vmem:[%s5 + $0xc58] sm:$0xff] %v5775
    %6196 = vst [vmem:[%s5 + $0xc60] sm:$0xff] %v5776
    %6197 = vst [vmem:[%s5 + $0xc68] sm:$0xff] %v5777
    %6198 = vst.msk [vmem:[%s5 + $0xc70] sm:$0xff] %vm2144, %v5778
    %6199 = vst [vmem:[%s5 + $0xc78] sm:$0xff] %v5779
    %6200 = vst [vmem:[%s5 + $0xc80] sm:$0xff] %v5780
    %6201 = vst [vmem:[%s5 + $0xc88] sm:$0xff] %v5781
    %6202 = vst [vmem:[%s5 + $0xc90] sm:$0xff] %v5782
    %6203 = vst [vmem:[%s5 + $0xc98] sm:$0xff] %v5783
    %6204 = vst [vmem:[%s5 + $0xca0] sm:$0xff] %v5784
    %6205 = vst.msk [vmem:[%s5 + $0xca8] sm:$0xff] %vm2144, %v5785
    %6206 = vst [vmem:[%s5 + $0xcb0] sm:$0xff] %v5786
    %6207 = vst [vmem:[%s5 + $0xcb8] sm:$0xff] %v5787
    %6208 = vst [vmem:[%s5 + $0xcc0] sm:$0xff] %v5788
    %6209 = vst [vmem:[%s5 + $0xcc8] sm:$0xff] %v5789
    %6210 = vst [vmem:[%s5 + $0xcd0] sm:$0xff] %v5790
    %6211 = vst [vmem:[%s5 + $0xcd8] sm:$0xff] %v5791
    %6212 = vst.msk [vmem:[%s5 + $0xce0] sm:$0xff] %vm2144, %v5792
    %6213 = vst [vmem:[%s5 + $0xce8] sm:$0xff] %v5793
    %6214 = vst [vmem:[%s5 + $0xcf0] sm:$0xff] %v5794
    %6215 = vst [vmem:[%s5 + $0xcf8] sm:$0xff] %v5795
    %6216 = vst [vmem:[%s5 + $0xd00] sm:$0xff] %v5796
    %6217 = vst [vmem:[%s5 + $0xd08] sm:$0xff] %v5797
    %6218 = vst [vmem:[%s5 + $0xd10] sm:$0xff] %v5798
    %6219 = vst.msk [vmem:[%s5 + $0xd18] sm:$0xff] %vm2144, %v5799
    // Predicated region
    $region30: #{tpu_custom_call.1} parent=1 // pred_check
      _
    $region31: #{tpu_custom_call.1} parent=1 // pred_check_branch
      %6221 = sbr.rel (0) target = $region33
    $region32: #{tpu_custom_call.1} parent=1 // pred_region
      _
    $region33: #{tpu_custom_call.1} parent=1 // pred_fallthru
      _
    // Predicated region
    $region34: #{tpu_custom_call.1} parent=1 // pred_check
      _
    $region35: #{tpu_custom_call.1} parent=1 // pred_check_branch
      %6223 = sbr.rel (0) target = $region37
    $region36: #{tpu_custom_call.1} parent=1 // pred_region
      _
    $region37: #{tpu_custom_call.1} parent=1 // pred_fallthru
      _
    %6224 = vsyncpa [#allocation3], 1
    %6225 = vsyncpa [#allocation5], 1

</llo_original>
